<compile_context>
chip_gen: v7x
topology: tpu7x:2x2x1
jax: 0.10.0
libtpu: 0.0.40
codegen_flags: <defaults>
</compile_context>

<pallas_src>
import functools

import numpy as np

import jax
import jax.numpy as jnp
from jax.experimental import pallas as pl
from jax.experimental.pallas import tpu as pltpu  # noqa: F401  (TPU backend assumed)


# --------------------------------------------------------------------------
# Fused Pallas kernel: whole B_basic forward on VMEM-resident data
# --------------------------------------------------------------------------
def _b_basic_kernel(p1_ref, w1_ref, g2_ref, w2_ref, wf_ref, w5_ref, b_ref, o_ref):
    dot = functools.partial(jnp.dot, preferred_element_type=jnp.float32)

    # conv1 + folded BN1 + maxpool1 + ReLU.
    # p1_ref[e] holds the conv1 im2col patches of the outputs landing in pool
    # slot e, so the 2x2/2 max-pool is a 4-way elementwise max of matmuls.
    w1 = w1_ref[...]
    z = dot(p1_ref[0], w1)
    for e in range(1, p1_ref.shape[0]):
        z = jnp.maximum(z, dot(p1_ref[e], w1))
    x2 = jnp.maximum(z + b_ref[0:1, 0:32], 0.0)            # (25N, 32), rows (n,py,px)

    # conv2 + folded BN2 + maxpool2 + ReLU.
    # One big one-hot row-gather matmul builds all 16 per-kernel-offset input
    # slabs (stacked on rows, conv2 zero padding baked in), then 16 independent
    # (16N,32)@(32,64) matmuls are tree-summed.  Pool2 = max over the 4
    # tile-aligned pool-offset row blocks (rows ordered (e, q, n)).
    stacked = dot(g2_ref[...], x2)                          # (16*16N, 32)
    rows = stacked.shape[0] // 16                           # 16N
    terms = [dot(stacked[t * rows:(t + 1) * rows], w2_ref[t]) for t in range(16)]
    while len(terms) > 1:                                   # balanced add tree
        terms = [terms[i] + terms[i + 1] for i in range(0, len(terms), 2)]
    h2 = terms[0]                                           # (16N, 64)
    blk = rows // 4                                          # 4N rows per pool slot
    hm = jnp.maximum(jnp.maximum(h2[0:blk], h2[blk:2 * blk]),
                     jnp.maximum(h2[2 * blk:3 * blk], h2[3 * blk:4 * blk]))
    x3 = jnp.maximum(hm + b_ref[1:2, 0:64], 0.0)            # (4N, 64), rows (q, n)

    # conv3 + BN3 + FC1 folded into one affine map (4 per-position blocks), ReLU.
    nb = x3.shape[0] // 4
    head = [dot(x3[q * nb:(q + 1) * nb], wf_ref[q]) for q in range(4)]
    h4 = jnp.maximum((head[0] + head[1]) + (head[2] + head[3])
                     + b_ref[2:3, 0:10], 0.0)               # (N, 10)

    # FC2, lane-padded to 128 output columns for a lane-dense store.
    o_ref[...] = (dot(h4, w5_ref[...]) + b_ref[3:4, :]).astype(o_ref.dtype)


# --------------------------------------------------------------------------
# Parameter / constant preparation (runs once, outside the hot path)
# --------------------------------------------------------------------------
def _fold_bn(conv_bias, gamma, beta, mean, var, eps=1e-5):
    inv_std = 1.0 / jnp.sqrt(var + eps)
    scale = gamma * inv_std
    shift = beta - mean * scale + conv_bias * scale
    return scale, shift


def _conv2_pool_gather(n):
    """One-hot row gather: pooled conv1 activations (rows (n,py,px), 5x5 grid)
    -> the 16 per-kernel-offset conv2 input slabs, stacked on rows, with conv2's
    zero padding and the pool2 row ordering (e, q, n) baked in.  bf16 (exact)."""
    g = np.zeros((16, 16 * n, 25 * n), np.float32)
    for i in range(4):
        for j in range(4):
            t = i * 4 + j
            for ey in range(2):
                for ex in range(2):
                    e = ey * 2 + ex
                    for qy in range(2):
                        for qx in range(2):
                            q = qy * 2 + qx
                            sy = 2 * qy + ey + i - 1        # conv2 padding = 1
                            sx = 2 * qx + ex + j - 1
                            if 0 <= sy < 5 and 0 <= sx < 5:
                                for nn in range(n):
                                    row = e * 4 * n + q * n + nn
                                    g[t, row, nn * 25 + sy * 5 + sx] = 1.0
    return jnp.asarray(g.reshape(16 * 16 * n, 25 * n), jnp.bfloat16)


def prepare_b_basic(p, batch):
    n = batch
    s1, t1 = _fold_bn(p["c1_b"], p["bn1_gamma"], p["bn1_beta"],
                      p["bn1_mean"], p["bn1_var"])
    s2, t2 = _fold_bn(p["c2_b"], p["bn2_gamma"], p["bn2_beta"],
                      p["bn2_mean"], p["bn2_var"])
    s3, t3 = _fold_bn(p["c3_b"], p["bn3_gamma"], p["bn3_beta"],
                      p["bn3_mean"], p["bn3_var"])

    # conv1 im2col weight (K = 2*5*5 = 50), BN scale folded into columns.
    w1 = p["c1_w"].reshape(32, 50).T * s1[None, :]                      # (50, 32)
    # conv2: one (Cin, Cout) weight slab per kernel offset, BN scale folded.
    w2 = (jnp.transpose(p["c2_w"], (2, 3, 1, 0)).reshape(16, 32, 64)
          * s2[None, None, :])                                          # (16, 32, 64)
    # conv3 + BN3 + FC1 folded: 4 per-pooled-position (64, 10) blocks.
    w3 = (jnp.transpose(p["c3_w"], (2, 3, 1, 0)).reshape(4, 64, 128)
          * s3[None, None, :])                                          # (4, 64, 128)
    wf = jnp.einsum("qck,mk->qcm", w3, p["l0_w"])                       # (4, 64, 10)
    bf = p["l0_b"] + p["l0_w"] @ t3                                     # (10,)
    # FC2, lane-padded to 128 output columns.
    w5 = jnp.pad(p["l1_w"].T, ((0, 0), (0, 126)))                       # (10, 128)

    # All biases / folded BN shifts packed into one (4, 128) slab.
    bias = jnp.zeros((4, 128), jnp.float32)
    bias = bias.at[0, :32].set(t1).at[1, :64].set(t2)
    bias = bias.at[2, :10].set(bf).at[3, :2].set(p["l1_b"])

    return dict(w1=w1, g2=_conv2_pool_gather(n), w2=w2, wf=wf, w5=w5, bias=bias)


# --------------------------------------------------------------------------
# Forward pass: light wrapper im2col + one pallas_call (no grid, no specs)
# --------------------------------------------------------------------------
def _pooled_conv1_patches(x):
    """(N,2,14,14) NCHW -> (4, N*25, 50) conv1 im2col patches, one slab per
    2x2 max-pool window slot (dy,dx); rows ordered (n, py, px)."""
    n = x.shape[0]
    xh = jnp.transpose(x, (0, 2, 3, 1))                                 # NHWC (tiny)
    slabs = []
    for dy in range(2):
        for dx in range(2):
            cols = []
            for i in range(5):
                for j in range(5):
                    cols.append(xh[:, dy + i:dy + i + 9:2,
                                   dx + j:dx + j + 9:2, :])             # (N,5,5,2)
            patch = jnp.stack(cols, axis=-1)                            # (N,5,5,2,25)
            slabs.append(patch.reshape(n * 25, 50))
    return jnp.stack(slabs, axis=0)                                     # (4, N*25, 50)


def b_basic_forward(prep, x):
    n = x.shape[0]
    assert 256 * n == prep["g2"].shape[0], (
        "prepare_b_basic was called with a different batch size than x")
    patches1 = _pooled_conv1_patches(x)
    out = pl.pallas_call(
        _b_basic_kernel,
        out_shape=jax.ShapeDtypeStruct((n, 128), jnp.float32),
        cost_estimate=pl.CostEstimate(flops=4_600_000, transcendentals=0,
                                      bytes_accessed=270_000),
    )(patches1, prep["w1"], prep["g2"], prep["w2"], prep["wf"],
      prep["w5"], prep["bias"])
    return out[:, :2]


# --------------------------------------------------------------------------
# Plain-JAX reference (for correctness check only)
# --------------------------------------------------------------------------
def reference_forward(p, x):
    def conv(x, w, b, pad):
        y = jax.lax.conv_general_dilated(
            x, w, window_strides=(1, 1), padding=[(pad, pad), (pad, pad)],
            dimension_numbers=("NCHW", "OIHW", "NCHW"))
        return y + b[None, :, None, None]

    def bn(x, g, bt, m, v, eps=1e-5):
        inv = 1.0 / jnp.sqrt(v + eps)
        return (x - m[None, :, None, None]) * (g * inv)[None, :, None, None] \
            + bt[None, :, None, None]

    def pool(x):
        n, c, h, w = x.shape
        return x.reshape(n, c, h // 2, 2, w // 2, 2).max(axis=(3, 5))

    x = pool(jax.nn.relu(bn(conv(x, p["c1_w"], p["c1_b"], 0), p["bn1_gamma"],
                            p["bn1_beta"], p["bn1_mean"], p["bn1_var"])))
    x = pool(jax.nn.relu(bn(conv(x, p["c2_w"], p["c2_b"], 1), p["bn2_gamma"],
                            p["bn2_beta"], p["bn2_mean"], p["bn2_var"])))
    x = bn(conv(x, p["c3_w"], p["c3_b"], 0), p["bn3_gamma"],
           p["bn3_beta"], p["bn3_mean"], p["bn3_var"])
    flat = x.reshape(x.shape[0], -1)
    h = jax.nn.relu(flat @ p["l0_w"].T + p["l0_b"])
    return h @ p["l1_w"].T + p["l1_b"]


# --------------------------------------------------------------------------
# Deterministic parameter construction (synthetic; matches __init__ shapes)
# --------------------------------------------------------------------------
def make_params(key):
    ks = jax.random.split(key, 16)
    p = {}

    def unif(k, shape, fan_in):
        bound = 1.0 / jnp.sqrt(float(fan_in))
        return jax.random.uniform(k, shape, jnp.float32, -bound, bound)

    p["c1_w"] = unif(ks[0], (32, 2, 5, 5), 2 * 5 * 5)
    p["c1_b"] = unif(ks[1], (32,), 2 * 5 * 5)
    p["c2_w"] = unif(ks[2], (64, 32, 4, 4), 32 * 4 * 4)
    p["c2_b"] = unif(ks[3], (64,), 32 * 4 * 4)
    p["c3_w"] = unif(ks[4], (128, 64, 2, 2), 64 * 2 * 2)
    p["c3_b"] = unif(ks[5], (128,), 64 * 2 * 2)
    for name, c, k in (("bn1", 32, ks[6]), ("bn2", 64, ks[7]), ("bn3", 128, ks[8])):
        k1, k2, k3 = jax.random.split(k, 3)
        p[name + "_gamma"] = 1.0 + 0.1 * jax.random.normal(k1, (c,), jnp.float32)
        p[name + "_beta"] = 0.1 * jax.random.normal(k2, (c,), jnp.float32)
        p[name + "_mean"] = 0.05 * jax.random.normal(k3, (c,), jnp.float32)
        p[name + "_var"] = jnp.ones((c,), jnp.float32)
    p["l0_w"] = unif(ks[9], (10, 128), 128)
    p["l0_b"] = unif(ks[10], (10,), 128)
    p["l1_w"] = unif(ks[11], (2, 10), 10)
    p["l1_b"] = unif(ks[12], (2,), 10)
    return p


if __name__ == "__main__":
    key = jax.random.PRNGKey(0)
    k_param, k_input = jax.random.split(key)
    params = make_params(k_param)
    # Input implied by the module: 14x14 spatial so the conv stack yields
    # (N, 128, 1, 1) before the flatten.
    x = jax.random.normal(k_input, (2, 2, 14, 14), jnp.float32)

    prep = prepare_b_basic(params, x.shape[0])   # one-time prep (folding, constants)
    fwd = jax.jit(b_basic_forward)
    out = jax.block_until_ready(fwd(prep, x))
    assert out.shape == (2, 2), out.shape

    # Numerical sanity check vs plain-JAX (eval-mode BN) reference.
    ref = jax.block_until_ready(jax.jit(reference_forward)(params, x))
    err = float(jnp.max(jnp.abs(out - ref)))
    assert err < 5e-4, f"Pallas output mismatch vs JAX reference: max abs err = {err}"

    print("KERNEL_OK")
</pallas_src>

<mosaic_0001>
module attributes {stable_mosaic.version = 11 : i64} {
  func.func @_b_basic_kernel(%arg0: memref<4x50x50xf32, #tpu.memory_space<vmem>>, %arg1: memref<50x32xf32, #tpu.memory_space<vmem>>, %arg2: memref<512x50xbf16, #tpu.memory_space<vmem>>, %arg3: memref<16x32x64xf32, #tpu.memory_space<vmem>>, %arg4: memref<4x64x10xf32, #tpu.memory_space<vmem>>, %arg5: memref<10x128xf32, #tpu.memory_space<vmem>>, %arg6: memref<4x128xf32, #tpu.memory_space<vmem>>, %arg7: memref<2x128xf32, #tpu.memory_space<vmem>>) attributes {dimension_semantics = [], scalar_prefetch = 0 : i64, scratch_operands = 0 : i64, tpu.core_type = #tpu.core_type<tc>} {
    %c0 = arith.constant 0 : index
    %c0_0 = arith.constant 0 : index
    %0 = vector.load %arg1[%c0, %c0_0] : memref<50x32xf32, #tpu.memory_space<vmem>>, vector<50x32xf32>
    %c0_1 = arith.constant 0 : index
    %c0_2 = arith.constant 0 : index
    %c0_3 = arith.constant 0 : index
    %1 = vector.load %arg0[%c0_1, %c0_2, %c0_3] : memref<4x50x50xf32, #tpu.memory_space<vmem>>, vector<1x50x50xf32>
    %2 = vector.shape_cast %1 : vector<1x50x50xf32> to vector<50x50xf32>
    %cst = arith.constant dense<0.000000e+00> : vector<50x32xf32>
    %3 = tpu.matmul %2, %0, %cst {dimension_numbers = #tpu.dot_dimension_numbers<[1], [0], [0], [1], [0, 0, 1, 1], [], []>} : vector<50x50xf32>, vector<50x32xf32>, vector<50x32xf32> -> vector<50x32xf32>
    %c1 = arith.constant 1 : index
    %c0_4 = arith.constant 0 : index
    %c0_5 = arith.constant 0 : index
    %4 = vector.load %arg0[%c1, %c0_4, %c0_5] : memref<4x50x50xf32, #tpu.memory_space<vmem>>, vector<1x50x50xf32>
    %5 = vector.shape_cast %4 : vector<1x50x50xf32> to vector<50x50xf32>
    %cst_6 = arith.constant dense<0.000000e+00> : vector<50x32xf32>
    %6 = tpu.matmul %5, %0, %cst_6 {dimension_numbers = #tpu.dot_dimension_numbers<[1], [0], [0], [1], [0, 0, 1, 1], [], []>} : vector<50x50xf32>, vector<50x32xf32>, vector<50x32xf32> -> vector<50x32xf32>
    %7 = arith.maximumf %3, %6 : vector<50x32xf32>
    %c2 = arith.constant 2 : index
    %c0_7 = arith.constant 0 : index
    %c0_8 = arith.constant 0 : index
    %8 = vector.load %arg0[%c2, %c0_7, %c0_8] : memref<4x50x50xf32, #tpu.memory_space<vmem>>, vector<1x50x50xf32>
    %9 = vector.shape_cast %8 : vector<1x50x50xf32> to vector<50x50xf32>
    %cst_9 = arith.constant dense<0.000000e+00> : vector<50x32xf32>
    %10 = tpu.matmul %9, %0, %cst_9 {dimension_numbers = #tpu.dot_dimension_numbers<[1], [0], [0], [1], [0, 0, 1, 1], [], []>} : vector<50x50xf32>, vector<50x32xf32>, vector<50x32xf32> -> vector<50x32xf32>
    %11 = arith.maximumf %7, %10 : vector<50x32xf32>
    %c3 = arith.constant 3 : index
    %c0_10 = arith.constant 0 : index
    %c0_11 = arith.constant 0 : index
    %12 = vector.load %arg0[%c3, %c0_10, %c0_11] : memref<4x50x50xf32, #tpu.memory_space<vmem>>, vector<1x50x50xf32>
    %13 = vector.shape_cast %12 : vector<1x50x50xf32> to vector<50x50xf32>
    %cst_12 = arith.constant dense<0.000000e+00> : vector<50x32xf32>
    %14 = tpu.matmul %13, %0, %cst_12 {dimension_numbers = #tpu.dot_dimension_numbers<[1], [0], [0], [1], [0, 0, 1, 1], [], []>} : vector<50x50xf32>, vector<50x32xf32>, vector<50x32xf32> -> vector<50x32xf32>
    %15 = arith.maximumf %11, %14 : vector<50x32xf32>
    %c0_13 = arith.constant 0 : index
    %c0_14 = arith.constant 0 : index
    %16 = vector.load %arg6[%c0_13, %c0_14] : memref<4x128xf32, #tpu.memory_space<vmem>>, vector<1x32xf32>
    %17 = vector.broadcast %16 : vector<1x32xf32> to vector<50x32xf32>
    %18 = arith.addf %15, %17 : vector<50x32xf32>
    %cst_15 = arith.constant 0.000000e+00 : f32
    %19 = vector.broadcast %cst_15 : f32 to vector<50x32xf32>
    %20 = arith.maximumf %18, %19 : vector<50x32xf32>
    %c0_16 = arith.constant 0 : index
    %c0_17 = arith.constant 0 : index
    %21 = vector.load %arg2[%c0_16, %c0_17] : memref<512x50xbf16, #tpu.memory_space<vmem>>, vector<512x50xbf16>
    %cst_18 = arith.constant dense<0.000000e+00> : vector<512x32xf32>
    %22 = tpu.matmul %21, %20, %cst_18 {dimension_numbers = #tpu.dot_dimension_numbers<[1], [0], [0], [1], [0, 0, 1, 1], [], []>} : vector<512x50xbf16>, vector<50x32xf32>, vector<512x32xf32> -> vector<512x32xf32>
    %23 = vector.extract_strided_slice %22 {offsets = [0, 0], sizes = [32, 32], strides = [1, 1]} : vector<512x32xf32> to vector<32x32xf32>
    %c0_19 = arith.constant 0 : index
    %c0_20 = arith.constant 0 : index
    %c0_21 = arith.constant 0 : index
    %24 = vector.load %arg3[%c0_19, %c0_20, %c0_21] : memref<16x32x64xf32, #tpu.memory_space<vmem>>, vector<1x32x64xf32>
    %25 = vector.shape_cast %24 : vector<1x32x64xf32> to vector<32x64xf32>
    %cst_22 = arith.constant dense<0.000000e+00> : vector<32x64xf32>
    %26 = tpu.matmul %23, %25, %cst_22 {dimension_numbers = #tpu.dot_dimension_numbers<[1], [0], [0], [1], [0, 0, 1, 1], [], []>} : vector<32x32xf32>, vector<32x64xf32>, vector<32x64xf32> -> vector<32x64xf32>
    %27 = vector.extract_strided_slice %22 {offsets = [32, 0], sizes = [32, 32], strides = [1, 1]} : vector<512x32xf32> to vector<32x32xf32>
    %c1_23 = arith.constant 1 : index
    %c0_24 = arith.constant 0 : index
    %c0_25 = arith.constant 0 : index
    %28 = vector.load %arg3[%c1_23, %c0_24, %c0_25] : memref<16x32x64xf32, #tpu.memory_space<vmem>>, vector<1x32x64xf32>
    %29 = vector.shape_cast %28 : vector<1x32x64xf32> to vector<32x64xf32>
    %cst_26 = arith.constant dense<0.000000e+00> : vector<32x64xf32>
    %30 = tpu.matmul %27, %29, %cst_26 {dimension_numbers = #tpu.dot_dimension_numbers<[1], [0], [0], [1], [0, 0, 1, 1], [], []>} : vector<32x32xf32>, vector<32x64xf32>, vector<32x64xf32> -> vector<32x64xf32>
    %31 = vector.extract_strided_slice %22 {offsets = [64, 0], sizes = [32, 32], strides = [1, 1]} : vector<512x32xf32> to vector<32x32xf32>
    %c2_27 = arith.constant 2 : index
    %c0_28 = arith.constant 0 : index
    %c0_29 = arith.constant 0 : index
    %32 = vector.load %arg3[%c2_27, %c0_28, %c0_29] : memref<16x32x64xf32, #tpu.memory_space<vmem>>, vector<1x32x64xf32>
    %33 = vector.shape_cast %32 : vector<1x32x64xf32> to vector<32x64xf32>
    %cst_30 = arith.constant dense<0.000000e+00> : vector<32x64xf32>
    %34 = tpu.matmul %31, %33, %cst_30 {dimension_numbers = #tpu.dot_dimension_numbers<[1], [0], [0], [1], [0, 0, 1, 1], [], []>} : vector<32x32xf32>, vector<32x64xf32>, vector<32x64xf32> -> vector<32x64xf32>
    %35 = vector.extract_strided_slice %22 {offsets = [96, 0], sizes = [32, 32], strides = [1, 1]} : vector<512x32xf32> to vector<32x32xf32>
    %c3_31 = arith.constant 3 : index
    %c0_32 = arith.constant 0 : index
    %c0_33 = arith.constant 0 : index
    %36 = vector.load %arg3[%c3_31, %c0_32, %c0_33] : memref<16x32x64xf32, #tpu.memory_space<vmem>>, vector<1x32x64xf32>
    %37 = vector.shape_cast %36 : vector<1x32x64xf32> to vector<32x64xf32>
    %cst_34 = arith.constant dense<0.000000e+00> : vector<32x64xf32>
    %38 = tpu.matmul %35, %37, %cst_34 {dimension_numbers = #tpu.dot_dimension_numbers<[1], [0], [0], [1], [0, 0, 1, 1], [], []>} : vector<32x32xf32>, vector<32x64xf32>, vector<32x64xf32> -> vector<32x64xf32>
    %39 = vector.extract_strided_slice %22 {offsets = [128, 0], sizes = [32, 32], strides = [1, 1]} : vector<512x32xf32> to vector<32x32xf32>
    %c4 = arith.constant 4 : index
    %c0_35 = arith.constant 0 : index
    %c0_36 = arith.constant 0 : index
    %40 = vector.load %arg3[%c4, %c0_35, %c0_36] : memref<16x32x64xf32, #tpu.memory_space<vmem>>, vector<1x32x64xf32>
    %41 = vector.shape_cast %40 : vector<1x32x64xf32> to vector<32x64xf32>
    %cst_37 = arith.constant dense<0.000000e+00> : vector<32x64xf32>
    %42 = tpu.matmul %39, %41, %cst_37 {dimension_numbers = #tpu.dot_dimension_numbers<[1], [0], [0], [1], [0, 0, 1, 1], [], []>} : vector<32x32xf32>, vector<32x64xf32>, vector<32x64xf32> -> vector<32x64xf32>
    %43 = vector.extract_strided_slice %22 {offsets = [160, 0], sizes = [32, 32], strides = [1, 1]} : vector<512x32xf32> to vector<32x32xf32>
    %c5 = arith.constant 5 : index
    %c0_38 = arith.constant 0 : index
    %c0_39 = arith.constant 0 : index
    %44 = vector.load %arg3[%c5, %c0_38, %c0_39] : memref<16x32x64xf32, #tpu.memory_space<vmem>>, vector<1x32x64xf32>
    %45 = vector.shape_cast %44 : vector<1x32x64xf32> to vector<32x64xf32>
    %cst_40 = arith.constant dense<0.000000e+00> : vector<32x64xf32>
    %46 = tpu.matmul %43, %45, %cst_40 {dimension_numbers = #tpu.dot_dimension_numbers<[1], [0], [0], [1], [0, 0, 1, 1], [], []>} : vector<32x32xf32>, vector<32x64xf32>, vector<32x64xf32> -> vector<32x64xf32>
    %47 = vector.extract_strided_slice %22 {offsets = [192, 0], sizes = [32, 32], strides = [1, 1]} : vector<512x32xf32> to vector<32x32xf32>
    %c6 = arith.constant 6 : index
    %c0_41 = arith.constant 0 : index
    %c0_42 = arith.constant 0 : index
    %48 = vector.load %arg3[%c6, %c0_41, %c0_42] : memref<16x32x64xf32, #tpu.memory_space<vmem>>, vector<1x32x64xf32>
    %49 = vector.shape_cast %48 : vector<1x32x64xf32> to vector<32x64xf32>
    %cst_43 = arith.constant dense<0.000000e+00> : vector<32x64xf32>
    %50 = tpu.matmul %47, %49, %cst_43 {dimension_numbers = #tpu.dot_dimension_numbers<[1], [0], [0], [1], [0, 0, 1, 1], [], []>} : vector<32x32xf32>, vector<32x64xf32>, vector<32x64xf32> -> vector<32x64xf32>
    %51 = vector.extract_strided_slice %22 {offsets = [224, 0], sizes = [32, 32], strides = [1, 1]} : vector<512x32xf32> to vector<32x32xf32>
    %c7 = arith.constant 7 : index
    %c0_44 = arith.constant 0 : index
    %c0_45 = arith.constant 0 : index
    %52 = vector.load %arg3[%c7, %c0_44, %c0_45] : memref<16x32x64xf32, #tpu.memory_space<vmem>>, vector<1x32x64xf32>
    %53 = vector.shape_cast %52 : vector<1x32x64xf32> to vector<32x64xf32>
    %cst_46 = arith.constant dense<0.000000e+00> : vector<32x64xf32>
    %54 = tpu.matmul %51, %53, %cst_46 {dimension_numbers = #tpu.dot_dimension_numbers<[1], [0], [0], [1], [0, 0, 1, 1], [], []>} : vector<32x32xf32>, vector<32x64xf32>, vector<32x64xf32> -> vector<32x64xf32>
    %55 = vector.extract_strided_slice %22 {offsets = [256, 0], sizes = [32, 32], strides = [1, 1]} : vector<512x32xf32> to vector<32x32xf32>
    %c8 = arith.constant 8 : index
    %c0_47 = arith.constant 0 : index
    %c0_48 = arith.constant 0 : index
    %56 = vector.load %arg3[%c8, %c0_47, %c0_48] : memref<16x32x64xf32, #tpu.memory_space<vmem>>, vector<1x32x64xf32>
    %57 = vector.shape_cast %56 : vector<1x32x64xf32> to vector<32x64xf32>
    %cst_49 = arith.constant dense<0.000000e+00> : vector<32x64xf32>
    %58 = tpu.matmul %55, %57, %cst_49 {dimension_numbers = #tpu.dot_dimension_numbers<[1], [0], [0], [1], [0, 0, 1, 1], [], []>} : vector<32x32xf32>, vector<32x64xf32>, vector<32x64xf32> -> vector<32x64xf32>
    %59 = vector.extract_strided_slice %22 {offsets = [288, 0], sizes = [32, 32], strides = [1, 1]} : vector<512x32xf32> to vector<32x32xf32>
    %c9 = arith.constant 9 : index
    %c0_50 = arith.constant 0 : index
    %c0_51 = arith.constant 0 : index
    %60 = vector.load %arg3[%c9, %c0_50, %c0_51] : memref<16x32x64xf32, #tpu.memory_space<vmem>>, vector<1x32x64xf32>
    %61 = vector.shape_cast %60 : vector<1x32x64xf32> to vector<32x64xf32>
    %cst_52 = arith.constant dense<0.000000e+00> : vector<32x64xf32>
    %62 = tpu.matmul %59, %61, %cst_52 {dimension_numbers = #tpu.dot_dimension_numbers<[1], [0], [0], [1], [0, 0, 1, 1], [], []>} : vector<32x32xf32>, vector<32x64xf32>, vector<32x64xf32> -> vector<32x64xf32>
    %63 = vector.extract_strided_slice %22 {offsets = [320, 0], sizes = [32, 32], strides = [1, 1]} : vector<512x32xf32> to vector<32x32xf32>
    %c10 = arith.constant 10 : index
    %c0_53 = arith.constant 0 : index
    %c0_54 = arith.constant 0 : index
    %64 = vector.load %arg3[%c10, %c0_53, %c0_54] : memref<16x32x64xf32, #tpu.memory_space<vmem>>, vector<1x32x64xf32>
    %65 = vector.shape_cast %64 : vector<1x32x64xf32> to vector<32x64xf32>
    %cst_55 = arith.constant dense<0.000000e+00> : vector<32x64xf32>
    %66 = tpu.matmul %63, %65, %cst_55 {dimension_numbers = #tpu.dot_dimension_numbers<[1], [0], [0], [1], [0, 0, 1, 1], [], []>} : vector<32x32xf32>, vector<32x64xf32>, vector<32x64xf32> -> vector<32x64xf32>
    %67 = vector.extract_strided_slice %22 {offsets = [352, 0], sizes = [32, 32], strides = [1, 1]} : vector<512x32xf32> to vector<32x32xf32>
    %c11 = arith.constant 11 : index
    %c0_56 = arith.constant 0 : index
    %c0_57 = arith.constant 0 : index
    %68 = vector.load %arg3[%c11, %c0_56, %c0_57] : memref<16x32x64xf32, #tpu.memory_space<vmem>>, vector<1x32x64xf32>
    %69 = vector.shape_cast %68 : vector<1x32x64xf32> to vector<32x64xf32>
    %cst_58 = arith.constant dense<0.000000e+00> : vector<32x64xf32>
    %70 = tpu.matmul %67, %69, %cst_58 {dimension_numbers = #tpu.dot_dimension_numbers<[1], [0], [0], [1], [0, 0, 1, 1], [], []>} : vector<32x32xf32>, vector<32x64xf32>, vector<32x64xf32> -> vector<32x64xf32>
    %71 = vector.extract_strided_slice %22 {offsets = [384, 0], sizes = [32, 32], strides = [1, 1]} : vector<512x32xf32> to vector<32x32xf32>
    %c12 = arith.constant 12 : index
    %c0_59 = arith.constant 0 : index
    %c0_60 = arith.constant 0 : index
    %72 = vector.load %arg3[%c12, %c0_59, %c0_60] : memref<16x32x64xf32, #tpu.memory_space<vmem>>, vector<1x32x64xf32>
    %73 = vector.shape_cast %72 : vector<1x32x64xf32> to vector<32x64xf32>
    %cst_61 = arith.constant dense<0.000000e+00> : vector<32x64xf32>
    %74 = tpu.matmul %71, %73, %cst_61 {dimension_numbers = #tpu.dot_dimension_numbers<[1], [0], [0], [1], [0, 0, 1, 1], [], []>} : vector<32x32xf32>, vector<32x64xf32>, vector<32x64xf32> -> vector<32x64xf32>
    %75 = vector.extract_strided_slice %22 {offsets = [416, 0], sizes = [32, 32], strides = [1, 1]} : vector<512x32xf32> to vector<32x32xf32>
    %c13 = arith.constant 13 : index
    %c0_62 = arith.constant 0 : index
    %c0_63 = arith.constant 0 : index
    %76 = vector.load %arg3[%c13, %c0_62, %c0_63] : memref<16x32x64xf32, #tpu.memory_space<vmem>>, vector<1x32x64xf32>
    %77 = vector.shape_cast %76 : vector<1x32x64xf32> to vector<32x64xf32>
    %cst_64 = arith.constant dense<0.000000e+00> : vector<32x64xf32>
    %78 = tpu.matmul %75, %77, %cst_64 {dimension_numbers = #tpu.dot_dimension_numbers<[1], [0], [0], [1], [0, 0, 1, 1], [], []>} : vector<32x32xf32>, vector<32x64xf32>, vector<32x64xf32> -> vector<32x64xf32>
    %79 = vector.extract_strided_slice %22 {offsets = [448, 0], sizes = [32, 32], strides = [1, 1]} : vector<512x32xf32> to vector<32x32xf32>
    %c14 = arith.constant 14 : index
    %c0_65 = arith.constant 0 : index
    %c0_66 = arith.constant 0 : index
    %80 = vector.load %arg3[%c14, %c0_65, %c0_66] : memref<16x32x64xf32, #tpu.memory_space<vmem>>, vector<1x32x64xf32>
    %81 = vector.shape_cast %80 : vector<1x32x64xf32> to vector<32x64xf32>
    %cst_67 = arith.constant dense<0.000000e+00> : vector<32x64xf32>
    %82 = tpu.matmul %79, %81, %cst_67 {dimension_numbers = #tpu.dot_dimension_numbers<[1], [0], [0], [1], [0, 0, 1, 1], [], []>} : vector<32x32xf32>, vector<32x64xf32>, vector<32x64xf32> -> vector<32x64xf32>
    %83 = vector.extract_strided_slice %22 {offsets = [480, 0], sizes = [32, 32], strides = [1, 1]} : vector<512x32xf32> to vector<32x32xf32>
    %c15 = arith.constant 15 : index
    %c0_68 = arith.constant 0 : index
    %c0_69 = arith.constant 0 : index
    %84 = vector.load %arg3[%c15, %c0_68, %c0_69] : memref<16x32x64xf32, #tpu.memory_space<vmem>>, vector<1x32x64xf32>
    %85 = vector.shape_cast %84 : vector<1x32x64xf32> to vector<32x64xf32>
    %cst_70 = arith.constant dense<0.000000e+00> : vector<32x64xf32>
    %86 = tpu.matmul %83, %85, %cst_70 {dimension_numbers = #tpu.dot_dimension_numbers<[1], [0], [0], [1], [0, 0, 1, 1], [], []>} : vector<32x32xf32>, vector<32x64xf32>, vector<32x64xf32> -> vector<32x64xf32>
    %87 = arith.addf %26, %30 : vector<32x64xf32>
    %88 = arith.addf %34, %38 : vector<32x64xf32>
    %89 = arith.addf %42, %46 : vector<32x64xf32>
    %90 = arith.addf %50, %54 : vector<32x64xf32>
    %91 = arith.addf %58, %62 : vector<32x64xf32>
    %92 = arith.addf %66, %70 : vector<32x64xf32>
    %93 = arith.addf %74, %78 : vector<32x64xf32>
    %94 = arith.addf %82, %86 : vector<32x64xf32>
    %95 = arith.addf %87, %88 : vector<32x64xf32>
    %96 = arith.addf %89, %90 : vector<32x64xf32>
    %97 = arith.addf %91, %92 : vector<32x64xf32>
    %98 = arith.addf %93, %94 : vector<32x64xf32>
    %99 = arith.addf %95, %96 : vector<32x64xf32>
    %100 = arith.addf %97, %98 : vector<32x64xf32>
    %101 = arith.addf %99, %100 : vector<32x64xf32>
    %102 = vector.extract_strided_slice %101 {offsets = [0, 0], sizes = [8, 64], strides = [1, 1]} : vector<32x64xf32> to vector<8x64xf32>
    %103 = vector.extract_strided_slice %101 {offsets = [8, 0], sizes = [8, 64], strides = [1, 1]} : vector<32x64xf32> to vector<8x64xf32>
    %104 = arith.maximumf %102, %103 : vector<8x64xf32>
    %105 = vector.extract_strided_slice %101 {offsets = [16, 0], sizes = [8, 64], strides = [1, 1]} : vector<32x64xf32> to vector<8x64xf32>
    %106 = vector.extract_strided_slice %101 {offsets = [24, 0], sizes = [8, 64], strides = [1, 1]} : vector<32x64xf32> to vector<8x64xf32>
    %107 = arith.maximumf %105, %106 : vector<8x64xf32>
    %108 = arith.maximumf %104, %107 : vector<8x64xf32>
    %c1_71 = arith.constant 1 : index
    %c0_72 = arith.constant 0 : index
    %109 = vector.load %arg6[%c1_71, %c0_72] : memref<4x128xf32, #tpu.memory_space<vmem>>, vector<1x64xf32>
    %110 = vector.broadcast %109 : vector<1x64xf32> to vector<8x64xf32>
    %111 = arith.addf %108, %110 : vector<8x64xf32>
    %cst_73 = arith.constant 0.000000e+00 : f32
    %112 = vector.broadcast %cst_73 : f32 to vector<8x64xf32>
    %113 = arith.maximumf %111, %112 : vector<8x64xf32>
    %114 = vector.extract_strided_slice %113 {offsets = [0, 0], sizes = [2, 64], strides = [1, 1]} : vector<8x64xf32> to vector<2x64xf32>
    %c0_74 = arith.constant 0 : index
    %c0_75 = arith.constant 0 : index
    %c0_76 = arith.constant 0 : index
    %115 = vector.load %arg4[%c0_74, %c0_75, %c0_76] : memref<4x64x10xf32, #tpu.memory_space<vmem>>, vector<1x64x10xf32>
    %116 = vector.shape_cast %115 : vector<1x64x10xf32> to vector<64x10xf32>
    %cst_77 = arith.constant dense<0.000000e+00> : vector<2x10xf32>
    %117 = tpu.matmul %114, %116, %cst_77 {dimension_numbers = #tpu.dot_dimension_numbers<[1], [0], [0], [1], [0, 0, 1, 1], [], []>} : vector<2x64xf32>, vector<64x10xf32>, vector<2x10xf32> -> vector<2x10xf32>
    %118 = vector.extract_strided_slice %113 {offsets = [2, 0], sizes = [2, 64], strides = [1, 1]} : vector<8x64xf32> to vector<2x64xf32>
    %c1_78 = arith.constant 1 : index
    %c0_79 = arith.constant 0 : index
    %c0_80 = arith.constant 0 : index
    %119 = vector.load %arg4[%c1_78, %c0_79, %c0_80] : memref<4x64x10xf32, #tpu.memory_space<vmem>>, vector<1x64x10xf32>
    %120 = vector.shape_cast %119 : vector<1x64x10xf32> to vector<64x10xf32>
    %cst_81 = arith.constant dense<0.000000e+00> : vector<2x10xf32>
    %121 = tpu.matmul %118, %120, %cst_81 {dimension_numbers = #tpu.dot_dimension_numbers<[1], [0], [0], [1], [0, 0, 1, 1], [], []>} : vector<2x64xf32>, vector<64x10xf32>, vector<2x10xf32> -> vector<2x10xf32>
    %122 = vector.extract_strided_slice %113 {offsets = [4, 0], sizes = [2, 64], strides = [1, 1]} : vector<8x64xf32> to vector<2x64xf32>
    %c2_82 = arith.constant 2 : index
    %c0_83 = arith.constant 0 : index
    %c0_84 = arith.constant 0 : index
    %123 = vector.load %arg4[%c2_82, %c0_83, %c0_84] : memref<4x64x10xf32, #tpu.memory_space<vmem>>, vector<1x64x10xf32>
    %124 = vector.shape_cast %123 : vector<1x64x10xf32> to vector<64x10xf32>
    %cst_85 = arith.constant dense<0.000000e+00> : vector<2x10xf32>
    %125 = tpu.matmul %122, %124, %cst_85 {dimension_numbers = #tpu.dot_dimension_numbers<[1], [0], [0], [1], [0, 0, 1, 1], [], []>} : vector<2x64xf32>, vector<64x10xf32>, vector<2x10xf32> -> vector<2x10xf32>
    %126 = vector.extract_strided_slice %113 {offsets = [6, 0], sizes = [2, 64], strides = [1, 1]} : vector<8x64xf32> to vector<2x64xf32>
    %c3_86 = arith.constant 3 : index
    %c0_87 = arith.constant 0 : index
    %c0_88 = arith.constant 0 : index
    %127 = vector.load %arg4[%c3_86, %c0_87, %c0_88] : memref<4x64x10xf32, #tpu.memory_space<vmem>>, vector<1x64x10xf32>
    %128 = vector.shape_cast %127 : vector<1x64x10xf32> to vector<64x10xf32>
    %cst_89 = arith.constant dense<0.000000e+00> : vector<2x10xf32>
    %129 = tpu.matmul %126, %128, %cst_89 {dimension_numbers = #tpu.dot_dimension_numbers<[1], [0], [0], [1], [0, 0, 1, 1], [], []>} : vector<2x64xf32>, vector<64x10xf32>, vector<2x10xf32> -> vector<2x10xf32>
    %130 = arith.addf %117, %121 : vector<2x10xf32>
    %131 = arith.addf %125, %129 : vector<2x10xf32>
    %132 = arith.addf %130, %131 : vector<2x10xf32>
    %c2_90 = arith.constant 2 : index
    %c0_91 = arith.constant 0 : index
    %133 = vector.load %arg6[%c2_90, %c0_91] : memref<4x128xf32, #tpu.memory_space<vmem>>, vector<1x10xf32>
    %134 = vector.broadcast %133 : vector<1x10xf32> to vector<2x10xf32>
    %135 = arith.addf %132, %134 : vector<2x10xf32>
    %cst_92 = arith.constant 0.000000e+00 : f32
    %136 = vector.broadcast %cst_92 : f32 to vector<2x10xf32>
    %137 = arith.maximumf %135, %136 : vector<2x10xf32>
    %c0_93 = arith.constant 0 : index
    %c0_94 = arith.constant 0 : index
    %138 = vector.load %arg5[%c0_93, %c0_94] : memref<10x128xf32, #tpu.memory_space<vmem>>, vector<10x128xf32>
    %cst_95 = arith.constant dense<0.000000e+00> : vector<2x128xf32>
    %139 = tpu.matmul %137, %138, %cst_95 {dimension_numbers = #tpu.dot_dimension_numbers<[1], [0], [0], [1], [0, 0, 1, 1], [], []>} : vector<2x10xf32>, vector<10x128xf32>, vector<2x128xf32> -> vector<2x128xf32>
    %c3_96 = arith.constant 3 : index
    %c0_97 = arith.constant 0 : index
    %140 = vector.load %arg6[%c3_96, %c0_97] : memref<4x128xf32, #tpu.memory_space<vmem>>, vector<1x128xf32>
    %141 = vector.broadcast %140 : vector<1x128xf32> to vector<2x128xf32>
    %142 = arith.addf %139, %141 : vector<2x128xf32>
    %c0_98 = arith.constant 0 : index
    %c0_99 = arith.constant 0 : index
    %143 = vector.load %arg7[%c0_98, %c0_99] : memref<2x128xf32, #tpu.memory_space<vmem>>, vector<2x128xf32>
    tpu.vector_store %arg7[%c0_98, %c0_99], %142 {strides = array<i32>} : memref<2x128xf32, #tpu.memory_space<vmem>>, vector<2x128xf32>,
    return
  }
}

</mosaic_0001>

<llo_original>
// kernel: b_basic_forward.1
$region0: #{b_basic_forward.1}
  #allocation0 [shape = 'u32[]', space=smem, size = 0x4, offset = 0x4, fixed_abs, tag = 'smem constant byte address 0x4 - core index']
  #allocation1 [shape = 'u32[144,128]{1,0:T(1,128)}', space=vmem, size = 0x12000, scoped, tag = 'internal scratch']
  %s0 = inlined_call_operand.vmem [shape: f32[4,50,50], index: 0, kind: input, shape index: {}]
  %s1 = inlined_call_operand.vmem [shape: f32[50,32], index: 1, kind: input, shape index: {}]
  %s2 = inlined_call_operand.vmem [shape: bf16[512,50], index: 2, kind: input, shape index: {}]
  %s3 = inlined_call_operand.vmem [shape: f32[16,32,64], index: 3, kind: input, shape index: {}]
  %s4 = inlined_call_operand.vmem [shape: f32[4,64,10], index: 4, kind: input, shape index: {}]
  %s5 = inlined_call_operand.vmem [shape: f32[10,128], index: 5, kind: input, shape index: {}]
  %s6 = inlined_call_operand.vmem [shape: f32[4,128], index: 6, kind: input, shape index: {}]
  %s7 = inlined_call_operand.hbm [shape: f32[2,128], index: 7, kind: output, shape index: {}]
  %s8 = sld [smem:[#allocation0]]
  $region38: #{b_basic_forward.1} parent=0
    _
  %s10 = ssub.s32 1, %s8
  %s11 = scalar_select 0, %s10, %s8
  $region1: #{b_basic_forward.1} parent=0
    #allocation2 [shape = 'u8[1024]{0}', space=vmem, size = 0x400, scoped, tag = 'output window, operand 0, single buffered']
    #allocation3 [shape = 's32[1]{0}', space=sflag, size = 0x4, scoped, tag = 'scoped memory for b_basic_forward.1']
    %12 = vsyncpa [#allocation3], 0
    // Predicated region
    $region2: #{b_basic_forward.1} parent=1 // pred_check
      _
    $region3: #{b_basic_forward.1} parent=1 // pred_check_branch
      %14 = sbr.rel (0) target = $region5
    $region4: #{b_basic_forward.1} parent=1 // pred_region
      _
    $region5: #{b_basic_forward.1} parent=1 // pred_fallthru
      _
    // Predicated region
    $region6: #{b_basic_forward.1} parent=1 // pred_check
      _
    $region7: #{b_basic_forward.1} parent=1 // pred_check_branch
      %16 = sbr.rel (0) target = $region9
    $region8: #{b_basic_forward.1} parent=1 // pred_region
      _
    $region9: #{b_basic_forward.1} parent=1 // pred_fallthru
      _
    // Predicated region
    $region10: #{b_basic_forward.1} parent=1 // pred_check
      _
    $region11: #{b_basic_forward.1} parent=1 // pred_check_branch
      %18 = sbr.rel (0) target = $region13
    $region12: #{b_basic_forward.1} parent=1 // pred_region
      _
    $region13: #{b_basic_forward.1} parent=1 // pred_fallthru
      _
    // Predicated region
    $region14: #{b_basic_forward.1} parent=1 // pred_check
      _
    $region15: #{b_basic_forward.1} parent=1 // pred_check_branch
      %20 = sbr.rel (0) target = $region17
    $region16: #{b_basic_forward.1} parent=1 // pred_region
      _
    $region17: #{b_basic_forward.1} parent=1 // pred_fallthru
      _
    // Predicated region
    $region18: #{b_basic_forward.1} parent=1 // pred_check
      _
    $region19: #{b_basic_forward.1} parent=1 // pred_check_branch
      %22 = sbr.rel (0) target = $region21
    $region20: #{b_basic_forward.1} parent=1 // pred_region
      _
    $region21: #{b_basic_forward.1} parent=1 // pred_fallthru
      _
    // Predicated region
    $region22: #{b_basic_forward.1} parent=1 // pred_check
      _
    $region23: #{b_basic_forward.1} parent=1 // pred_check_branch
      %24 = sbr.rel (0) target = $region25
    $region24: #{b_basic_forward.1} parent=1 // pred_region
      _
    $region25: #{b_basic_forward.1} parent=1 // pred_fallthru
      _
    // Predicated region
    $region26: #{b_basic_forward.1} parent=1 // pred_check
      _
    $region27: #{b_basic_forward.1} parent=1 // pred_check_branch
      %26 = sbr.rel (0) target = $region29
    $region28: #{b_basic_forward.1} parent=1 // pred_region
      _
    $region29: #{b_basic_forward.1} parent=1 // pred_fallthru
      _
    %v28 = vld [vmem:[%s1] sm:$0xff]
    %v29 = vld [vmem:[%s1 + $0x8] sm:$0xff]
    %v30 = vld [vmem:[%s1 + $0x10] sm:$0xff]
    %v31 = vld [vmem:[%s1 + $0x18] sm:$0xff]
    %v32 = vld [vmem:[%s1 + $0x20] sm:$0xff]
    %v33 = vld [vmem:[%s1 + $0x28] sm:$0xff]
    %v34 = vld [vmem:[%s1 + $0x30] sm:$0x3]
    %v35 = vld [vmem:[%s0] sm:$0xff]
    %v36 = vld [vmem:[%s0 + $0x8] sm:$0xff]
    %v37 = vld [vmem:[%s0 + $0x10] sm:$0xff]
    %v38 = vld [vmem:[%s0 + $0x18] sm:$0xff]
    %v39 = vld [vmem:[%s0 + $0x20] sm:$0xff]
    %v40 = vld [vmem:[%s0 + $0x28] sm:$0xff]
    %v41 = vld [vmem:[%s0 + $0x30] sm:$0x3]
    %vm42 = vcmask 408576
    %v44 = vsel %vm42, %v35, 0
    %v47 = vsel %vm42, %v36, 0
    %v50 = vsel %vm42, %v37, 0
    %v53 = vsel %vm42, %v38, 0
    %v56 = vsel %vm42, %v39, 0
    %v59 = vsel %vm42, %v40, 0
    %v62 = vsel %vm42, %v41, 0
    %vm64 = vcmask 1041408
    %v66 = vsel %vm64, %v34, 0
    %68 = vmatprep.subr.mxu0 0.0
    %69 = vmatpush1.msra.mxu0 %v28
    %70 = vmatprep.subr.mxu0 0.0
    %71 = vmatpush1.msra.mxu0 %v29
    %72 = vmatprep.subr.mxu0 0.0
    %73 = vmatpush1.msra.mxu0 %v30
    %74 = vmatprep.subr.mxu0 0.0
    %75 = vmatpush1.msra.mxu0 %v31
    %76 = vmatprep.subr.mxu0 0.0
    %77 = vmatpush1.msra.mxu0 %v32
    %78 = vmatprep.subr.mxu0 0.0
    %79 = vmatpush1.msra.mxu0 %v33
    %80 = vmatprep.subr.mxu0 0.0
    %81 = vmatpush1.msra.mxu0 %v66
    %82 = vmatprep.subr.mxu0 0.0
    %83 = vmatpush1.msra.mxu0 0.0
    %84 = vmatprep.subr.mxu0 0.0
    %85 = vmatpush1.msra.mxu0 0.0
    %86 = vmatprep.subr.mxu0 0.0
    %87 = vmatpush1.msra.mxu0 0.0
    %88 = vmatprep.subr.mxu0 0.0
    %89 = vmatpush1.msra.mxu0 0.0
    %90 = vmatprep.subr.mxu0 0.0
    %91 = vmatpush1.msra.mxu0 0.0
    %92 = vmatprep.subr.mxu0 0.0
    %93 = vmatpush1.msra.mxu0 0.0
    %94 = vmatprep.subr.mxu0 0.0
    %95 = vmatpush1.msra.mxu0 0.0
    %96 = vmatprep.subr.mxu0 0.0
    %97 = vmatpush1.msra.mxu0 0.0
    %98 = vmatprep.subr.mxu0 0.0
    %99 = vmatpush1.msra.mxu0 0.0
    %100 = vmatprep.subr.mxu0 0.0
    %101 = vmatpush1.msra.mxu0 0.0
    %102 = vmatprep.subr.mxu0 0.0
    %103 = vmatpush1.msra.mxu0 0.0
    %104 = vmatprep.subr.mxu0 0.0
    %105 = vmatpush1.msra.mxu0 0.0
    %106 = vmatprep.subr.mxu0 0.0
    %107 = vmatpush1.msra.mxu0 0.0
    %108 = vmatprep.subr.mxu0 0.0
    %109 = vmatpush1.msra.mxu0 0.0
    %110 = vmatprep.subr.mxu0 0.0
    %111 = vmatpush1.msra.mxu0 0.0
    %112 = vmatprep.subr.mxu0 0.0
    %113 = vmatpush1.msra.mxu0 0.0
    %114 = vmatprep.subr.mxu0 0.0
    %115 = vmatpush1.msra.mxu0 0.0
    %116 = vmatprep.subr.mxu0 0.0
    %117 = vmatpush1.msra.mxu0 0.0
    %118 = vmatprep.subr.mxu0 0.0
    %119 = vmatpush1.msra.mxu0 0.0
    %120 = vmatprep.subr.mxu0 0.0
    %121 = vmatpush1.msra.mxu0 0.0
    %122 = vmatprep.subr.mxu0 0.0
    %123 = vmatpush1.msra.mxu0 0.0
    %124 = vmatprep.subr.mxu0 0.0
    %125 = vmatpush1.msra.mxu0 0.0
    %126 = vmatprep.subr.mxu0 0.0
    %127 = vmatpush1.msra.mxu0 0.0
    %128 = vmatprep.subr.mxu0 0.0
    %129 = vmatpush1.msra.mxu0 0.0
    %130 = vmatprep.subr.mxu0 0.0
    %131 = vmatpush1.msra.mxu0 0.0
    %132 = vmatprep.mubr.f32.mxu0 0.0
    %133 = vmatmul.mubr.f32.gmra.mrb[0].mxu0 %v44
    %v134 = vpop.f32.mrb[0].mxu0
    %v135 = vadd.f32 0.0, %v134
    %v136 = vpop.f32.mrb[0].mxu0
    %137 = vmatprep.mubr.f32.mxu0 0.0
    %138 = vmatmul.mubr.f32.gmra.mrb[0].mxu0 %v47
    %v139 = vpop.f32.mrb[0].mxu0
    %v140 = vadd.f32 0.0, %v139
    %v141 = vpop.f32.mrb[0].mxu0
    %142 = vmatprep.mubr.f32.mxu0 0.0
    %143 = vmatmul.mubr.f32.gmra.mrb[0].mxu0 %v50
    %v144 = vpop.f32.mrb[0].mxu0
    %v145 = vadd.f32 0.0, %v144
    %v146 = vpop.f32.mrb[0].mxu0
    %147 = vmatprep.mubr.f32.mxu0 0.0
    %148 = vmatmul.mubr.f32.gmra.mrb[0].mxu0 %v53
    %v149 = vpop.f32.mrb[0].mxu0
    %v150 = vadd.f32 0.0, %v149
    %v151 = vpop.f32.mrb[0].mxu0
    %152 = vmatprep.mubr.f32.mxu0 0.0
    %153 = vmatmul.mubr.f32.gmra.mrb[0].mxu0 %v56
    %v154 = vpop.f32.mrb[0].mxu0
    %v155 = vadd.f32 0.0, %v154
    %v156 = vpop.f32.mrb[0].mxu0
    %157 = vmatprep.mubr.f32.mxu0 0.0
    %158 = vmatmul.mubr.f32.gmra.mrb[0].mxu0 %v59
    %v159 = vpop.f32.mrb[0].mxu0
    %v160 = vadd.f32 0.0, %v159
    %v161 = vpop.f32.mrb[0].mxu0
    %162 = vmatprep.mubr.f32.mxu0 0.0
    %163 = vmatmul.mubr.f32.gmra.mrb[0].mxu0 %v62
    %v164 = vpop.f32.mrb[0].mxu0
    %v165 = vadd.f32 0.0, %v164
    %v166 = vpop.f32.mrb[0].mxu0
    %167 = vdwg.mxu0
    %s168 = scalar_lea.vmem %s0, 56
    %v169 = vld [vmem:[%s168] sm:$0xff]
    %v170 = vld [vmem:[%s168 + $0x8] sm:$0xff]
    %v171 = vld [vmem:[%s168 + $0x10] sm:$0xff]
    %v172 = vld [vmem:[%s168 + $0x18] sm:$0xff]
    %v173 = vld [vmem:[%s168 + $0x20] sm:$0xff]
    %v174 = vld [vmem:[%s168 + $0x28] sm:$0xff]
    %v175 = vld [vmem:[%s168 + $0x30] sm:$0x3]
    %v177 = vsel %vm42, %v169, 0
    %v180 = vsel %vm42, %v170, 0
    %v183 = vsel %vm42, %v171, 0
    %v186 = vsel %vm42, %v172, 0
    %v189 = vsel %vm42, %v173, 0
    %v192 = vsel %vm42, %v174, 0
    %v195 = vsel %vm42, %v175, 0
    %197 = vmatprep.subr.mxu0 0.0
    %198 = vmatpush1.msra.mxu0 %v28
    %199 = vmatprep.subr.mxu0 0.0
    %200 = vmatpush1.msra.mxu0 %v29
    %201 = vmatprep.subr.mxu0 0.0
    %202 = vmatpush1.msra.mxu0 %v30
    %203 = vmatprep.subr.mxu0 0.0
    %204 = vmatpush1.msra.mxu0 %v31
    %205 = vmatprep.subr.mxu0 0.0
    %206 = vmatpush1.msra.mxu0 %v32
    %207 = vmatprep.subr.mxu0 0.0
    %208 = vmatpush1.msra.mxu0 %v33
    %209 = vmatprep.subr.mxu0 0.0
    %210 = vmatpush1.msra.mxu0 %v66
    %211 = vmatprep.subr.mxu0 0.0
    %212 = vmatpush1.msra.mxu0 0.0
    %213 = vmatprep.subr.mxu0 0.0
    %214 = vmatpush1.msra.mxu0 0.0
    %215 = vmatprep.subr.mxu0 0.0
    %216 = vmatpush1.msra.mxu0 0.0
    %217 = vmatprep.subr.mxu0 0.0
    %218 = vmatpush1.msra.mxu0 0.0
    %219 = vmatprep.subr.mxu0 0.0
    %220 = vmatpush1.msra.mxu0 0.0
    %221 = vmatprep.subr.mxu0 0.0
    %222 = vmatpush1.msra.mxu0 0.0
    %223 = vmatprep.subr.mxu0 0.0
    %224 = vmatpush1.msra.mxu0 0.0
    %225 = vmatprep.subr.mxu0 0.0
    %226 = vmatpush1.msra.mxu0 0.0
    %227 = vmatprep.subr.mxu0 0.0
    %228 = vmatpush1.msra.mxu0 0.0
    %229 = vmatprep.subr.mxu0 0.0
    %230 = vmatpush1.msra.mxu0 0.0
    %231 = vmatprep.subr.mxu0 0.0
    %232 = vmatpush1.msra.mxu0 0.0
    %233 = vmatprep.subr.mxu0 0.0
    %234 = vmatpush1.msra.mxu0 0.0
    %235 = vmatprep.subr.mxu0 0.0
    %236 = vmatpush1.msra.mxu0 0.0
    %237 = vmatprep.subr.mxu0 0.0
    %238 = vmatpush1.msra.mxu0 0.0
    %239 = vmatprep.subr.mxu0 0.0
    %240 = vmatpush1.msra.mxu0 0.0
    %241 = vmatprep.subr.mxu0 0.0
    %242 = vmatpush1.msra.mxu0 0.0
    %243 = vmatprep.subr.mxu0 0.0
    %244 = vmatpush1.msra.mxu0 0.0
    %245 = vmatprep.subr.mxu0 0.0
    %246 = vmatpush1.msra.mxu0 0.0
    %247 = vmatprep.subr.mxu0 0.0
    %248 = vmatpush1.msra.mxu0 0.0
    %249 = vmatprep.subr.mxu0 0.0
    %250 = vmatpush1.msra.mxu0 0.0
    %251 = vmatprep.subr.mxu0 0.0
    %252 = vmatpush1.msra.mxu0 0.0
    %253 = vmatprep.subr.mxu0 0.0
    %254 = vmatpush1.msra.mxu0 0.0
    %255 = vmatprep.subr.mxu0 0.0
    %256 = vmatpush1.msra.mxu0 0.0
    %257 = vmatprep.subr.mxu0 0.0
    %258 = vmatpush1.msra.mxu0 0.0
    %259 = vmatprep.subr.mxu0 0.0
    %260 = vmatpush1.msra.mxu0 0.0
    %261 = vmatprep.mubr.f32.mxu0 0.0
    %262 = vmatmul.mubr.f32.gmra.mrb[0].mxu0 %v177
    %v263 = vpop.f32.mrb[0].mxu0
    %v264 = vadd.f32 0.0, %v263
    %v265 = vpop.f32.mrb[0].mxu0
    %266 = vmatprep.mubr.f32.mxu0 0.0
    %267 = vmatmul.mubr.f32.gmra.mrb[0].mxu0 %v180
    %v268 = vpop.f32.mrb[0].mxu0
    %v269 = vadd.f32 0.0, %v268
    %v270 = vpop.f32.mrb[0].mxu0
    %271 = vmatprep.mubr.f32.mxu0 0.0
    %272 = vmatmul.mubr.f32.gmra.mrb[0].mxu0 %v183
    %v273 = vpop.f32.mrb[0].mxu0
    %v274 = vadd.f32 0.0, %v273
    %v275 = vpop.f32.mrb[0].mxu0
    %276 = vmatprep.mubr.f32.mxu0 0.0
    %277 = vmatmul.mubr.f32.gmra.mrb[0].mxu0 %v186
    %v278 = vpop.f32.mrb[0].mxu0
    %v279 = vadd.f32 0.0, %v278
    %v280 = vpop.f32.mrb[0].mxu0
    %281 = vmatprep.mubr.f32.mxu0 0.0
    %282 = vmatmul.mubr.f32.gmra.mrb[0].mxu0 %v189
    %v283 = vpop.f32.mrb[0].mxu0
    %v284 = vadd.f32 0.0, %v283
    %v285 = vpop.f32.mrb[0].mxu0
    %286 = vmatprep.mubr.f32.mxu0 0.0
    %287 = vmatmul.mubr.f32.gmra.mrb[0].mxu0 %v192
    %v288 = vpop.f32.mrb[0].mxu0
    %v289 = vadd.f32 0.0, %v288
    %v290 = vpop.f32.mrb[0].mxu0
    %291 = vmatprep.mubr.f32.mxu0 0.0
    %292 = vmatmul.mubr.f32.gmra.mrb[0].mxu0 %v195
    %v293 = vpop.f32.mrb[0].mxu0
    %v294 = vadd.f32 0.0, %v293
    %v295 = vpop.f32.mrb[0].mxu0
    %296 = vdwg.mxu0
    %v297 = vmax.f32 %v135, %v264
    %v298 = vmax.f32 %v140, %v269
    %v299 = vmax.f32 %v145, %v274
    %v300 = vmax.f32 %v150, %v279
    %v301 = vmax.f32 %v155, %v284
    %v302 = vmax.f32 %v160, %v289
    %v303 = vmax.f32 %v165, %v294
    %s304 = scalar_lea.vmem %s0, 112
    %v305 = vld [vmem:[%s304] sm:$0xff]
    %v306 = vld [vmem:[%s304 + $0x8] sm:$0xff]
    %v307 = vld [vmem:[%s304 + $0x10] sm:$0xff]
    %v308 = vld [vmem:[%s304 + $0x18] sm:$0xff]
    %v309 = vld [vmem:[%s304 + $0x20] sm:$0xff]
    %v310 = vld [vmem:[%s304 + $0x28] sm:$0xff]
    %v311 = vld [vmem:[%s304 + $0x30] sm:$0x3]
    %v313 = vsel %vm42, %v305, 0
    %v316 = vsel %vm42, %v306, 0
    %v319 = vsel %vm42, %v307, 0
    %v322 = vsel %vm42, %v308, 0
    %v325 = vsel %vm42, %v309, 0
    %v328 = vsel %vm42, %v310, 0
    %v331 = vsel %vm42, %v311, 0
    %333 = vmatprep.subr.mxu0 0.0
    %334 = vmatpush1.msra.mxu0 %v28
    %335 = vmatprep.subr.mxu0 0.0
    %336 = vmatpush1.msra.mxu0 %v29
    %337 = vmatprep.subr.mxu0 0.0
    %338 = vmatpush1.msra.mxu0 %v30
    %339 = vmatprep.subr.mxu0 0.0
    %340 = vmatpush1.msra.mxu0 %v31
    %341 = vmatprep.subr.mxu0 0.0
    %342 = vmatpush1.msra.mxu0 %v32
    %343 = vmatprep.subr.mxu0 0.0
    %344 = vmatpush1.msra.mxu0 %v33
    %345 = vmatprep.subr.mxu0 0.0
    %346 = vmatpush1.msra.mxu0 %v66
    %347 = vmatprep.subr.mxu0 0.0
    %348 = vmatpush1.msra.mxu0 0.0
    %349 = vmatprep.subr.mxu0 0.0
    %350 = vmatpush1.msra.mxu0 0.0
    %351 = vmatprep.subr.mxu0 0.0
    %352 = vmatpush1.msra.mxu0 0.0
    %353 = vmatprep.subr.mxu0 0.0
    %354 = vmatpush1.msra.mxu0 0.0
    %355 = vmatprep.subr.mxu0 0.0
    %356 = vmatpush1.msra.mxu0 0.0
    %357 = vmatprep.subr.mxu0 0.0
    %358 = vmatpush1.msra.mxu0 0.0
    %359 = vmatprep.subr.mxu0 0.0
    %360 = vmatpush1.msra.mxu0 0.0
    %361 = vmatprep.subr.mxu0 0.0
    %362 = vmatpush1.msra.mxu0 0.0
    %363 = vmatprep.subr.mxu0 0.0
    %364 = vmatpush1.msra.mxu0 0.0
    %365 = vmatprep.subr.mxu0 0.0
    %366 = vmatpush1.msra.mxu0 0.0
    %367 = vmatprep.subr.mxu0 0.0
    %368 = vmatpush1.msra.mxu0 0.0
    %369 = vmatprep.subr.mxu0 0.0
    %370 = vmatpush1.msra.mxu0 0.0
    %371 = vmatprep.subr.mxu0 0.0
    %372 = vmatpush1.msra.mxu0 0.0
    %373 = vmatprep.subr.mxu0 0.0
    %374 = vmatpush1.msra.mxu0 0.0
    %375 = vmatprep.subr.mxu0 0.0
    %376 = vmatpush1.msra.mxu0 0.0
    %377 = vmatprep.subr.mxu0 0.0
    %378 = vmatpush1.msra.mxu0 0.0
    %379 = vmatprep.subr.mxu0 0.0
    %380 = vmatpush1.msra.mxu0 0.0
    %381 = vmatprep.subr.mxu0 0.0
    %382 = vmatpush1.msra.mxu0 0.0
    %383 = vmatprep.subr.mxu0 0.0
    %384 = vmatpush1.msra.mxu0 0.0
    %385 = vmatprep.subr.mxu0 0.0
    %386 = vmatpush1.msra.mxu0 0.0
    %387 = vmatprep.subr.mxu0 0.0
    %388 = vmatpush1.msra.mxu0 0.0
    %389 = vmatprep.subr.mxu0 0.0
    %390 = vmatpush1.msra.mxu0 0.0
    %391 = vmatprep.subr.mxu0 0.0
    %392 = vmatpush1.msra.mxu0 0.0
    %393 = vmatprep.subr.mxu0 0.0
    %394 = vmatpush1.msra.mxu0 0.0
    %395 = vmatprep.subr.mxu0 0.0
    %396 = vmatpush1.msra.mxu0 0.0
    %397 = vmatprep.mubr.f32.mxu0 0.0
    %398 = vmatmul.mubr.f32.gmra.mrb[0].mxu0 %v313
    %v399 = vpop.f32.mrb[0].mxu0
    %v400 = vadd.f32 0.0, %v399
    %v401 = vpop.f32.mrb[0].mxu0
    %402 = vmatprep.mubr.f32.mxu0 0.0
    %403 = vmatmul.mubr.f32.gmra.mrb[0].mxu0 %v316
    %v404 = vpop.f32.mrb[0].mxu0
    %v405 = vadd.f32 0.0, %v404
    %v406 = vpop.f32.mrb[0].mxu0
    %407 = vmatprep.mubr.f32.mxu0 0.0
    %408 = vmatmul.mubr.f32.gmra.mrb[0].mxu0 %v319
    %v409 = vpop.f32.mrb[0].mxu0
    %v410 = vadd.f32 0.0, %v409
    %v411 = vpop.f32.mrb[0].mxu0
    %412 = vmatprep.mubr.f32.mxu0 0.0
    %413 = vmatmul.mubr.f32.gmra.mrb[0].mxu0 %v322
    %v414 = vpop.f32.mrb[0].mxu0
    %v415 = vadd.f32 0.0, %v414
    %v416 = vpop.f32.mrb[0].mxu0
    %417 = vmatprep.mubr.f32.mxu0 0.0
    %418 = vmatmul.mubr.f32.gmra.mrb[0].mxu0 %v325
    %v419 = vpop.f32.mrb[0].mxu0
    %v420 = vadd.f32 0.0, %v419
    %v421 = vpop.f32.mrb[0].mxu0
    %422 = vmatprep.mubr.f32.mxu0 0.0
    %423 = vmatmul.mubr.f32.gmra.mrb[0].mxu0 %v328
    %v424 = vpop.f32.mrb[0].mxu0
    %v425 = vadd.f32 0.0, %v424
    %v426 = vpop.f32.mrb[0].mxu0
    %427 = vmatprep.mubr.f32.mxu0 0.0
    %428 = vmatmul.mubr.f32.gmra.mrb[0].mxu0 %v331
    %v429 = vpop.f32.mrb[0].mxu0
    %v430 = vadd.f32 0.0, %v429
    %v431 = vpop.f32.mrb[0].mxu0
    %432 = vdwg.mxu0
    %v433 = vmax.f32 %v297, %v400
    %v434 = vmax.f32 %v298, %v405
    %v435 = vmax.f32 %v299, %v410
    %v436 = vmax.f32 %v300, %v415
    %v437 = vmax.f32 %v301, %v420
    %v438 = vmax.f32 %v302, %v425
    %v439 = vmax.f32 %v303, %v430
    %s440 = scalar_lea.vmem %s0, 168
    %v441 = vld [vmem:[%s440] sm:$0xff]
    %v442 = vld [vmem:[%s440 + $0x8] sm:$0xff]
    %v443 = vld [vmem:[%s440 + $0x10] sm:$0xff]
    %v444 = vld [vmem:[%s440 + $0x18] sm:$0xff]
    %v445 = vld [vmem:[%s440 + $0x20] sm:$0xff]
    %v446 = vld [vmem:[%s440 + $0x28] sm:$0xff]
    %v447 = vld [vmem:[%s440 + $0x30] sm:$0x3]
    %v449 = vsel %vm42, %v441, 0
    %v452 = vsel %vm42, %v442, 0
    %v455 = vsel %vm42, %v443, 0
    %v458 = vsel %vm42, %v444, 0
    %v461 = vsel %vm42, %v445, 0
    %v464 = vsel %vm42, %v446, 0
    %v467 = vsel %vm42, %v447, 0
    %469 = vmatprep.subr.mxu0 0.0
    %470 = vmatpush1.msra.mxu0 %v28
    %471 = vmatprep.subr.mxu0 0.0
    %472 = vmatpush1.msra.mxu0 %v29
    %473 = vmatprep.subr.mxu0 0.0
    %474 = vmatpush1.msra.mxu0 %v30
    %475 = vmatprep.subr.mxu0 0.0
    %476 = vmatpush1.msra.mxu0 %v31
    %477 = vmatprep.subr.mxu0 0.0
    %478 = vmatpush1.msra.mxu0 %v32
    %479 = vmatprep.subr.mxu0 0.0
    %480 = vmatpush1.msra.mxu0 %v33
    %481 = vmatprep.subr.mxu0 0.0
    %482 = vmatpush1.msra.mxu0 %v66
    %483 = vmatprep.subr.mxu0 0.0
    %484 = vmatpush1.msra.mxu0 0.0
    %485 = vmatprep.subr.mxu0 0.0
    %486 = vmatpush1.msra.mxu0 0.0
    %487 = vmatprep.subr.mxu0 0.0
    %488 = vmatpush1.msra.mxu0 0.0
    %489 = vmatprep.subr.mxu0 0.0
    %490 = vmatpush1.msra.mxu0 0.0
    %491 = vmatprep.subr.mxu0 0.0
    %492 = vmatpush1.msra.mxu0 0.0
    %493 = vmatprep.subr.mxu0 0.0
    %494 = vmatpush1.msra.mxu0 0.0
    %495 = vmatprep.subr.mxu0 0.0
    %496 = vmatpush1.msra.mxu0 0.0
    %497 = vmatprep.subr.mxu0 0.0
    %498 = vmatpush1.msra.mxu0 0.0
    %499 = vmatprep.subr.mxu0 0.0
    %500 = vmatpush1.msra.mxu0 0.0
    %501 = vmatprep.subr.mxu0 0.0
    %502 = vmatpush1.msra.mxu0 0.0
    %503 = vmatprep.subr.mxu0 0.0
    %504 = vmatpush1.msra.mxu0 0.0
    %505 = vmatprep.subr.mxu0 0.0
    %506 = vmatpush1.msra.mxu0 0.0
    %507 = vmatprep.subr.mxu0 0.0
    %508 = vmatpush1.msra.mxu0 0.0
    %509 = vmatprep.subr.mxu0 0.0
    %510 = vmatpush1.msra.mxu0 0.0
    %511 = vmatprep.subr.mxu0 0.0
    %512 = vmatpush1.msra.mxu0 0.0
    %513 = vmatprep.subr.mxu0 0.0
    %514 = vmatpush1.msra.mxu0 0.0
    %515 = vmatprep.subr.mxu0 0.0
    %516 = vmatpush1.msra.mxu0 0.0
    %517 = vmatprep.subr.mxu0 0.0
    %518 = vmatpush1.msra.mxu0 0.0
    %519 = vmatprep.subr.mxu0 0.0
    %520 = vmatpush1.msra.mxu0 0.0
    %521 = vmatprep.subr.mxu0 0.0
    %522 = vmatpush1.msra.mxu0 0.0
    %523 = vmatprep.subr.mxu0 0.0
    %524 = vmatpush1.msra.mxu0 0.0
    %525 = vmatprep.subr.mxu0 0.0
    %526 = vmatpush1.msra.mxu0 0.0
    %527 = vmatprep.subr.mxu0 0.0
    %528 = vmatpush1.msra.mxu0 0.0
    %529 = vmatprep.subr.mxu0 0.0
    %530 = vmatpush1.msra.mxu0 0.0
    %531 = vmatprep.subr.mxu0 0.0
    %532 = vmatpush1.msra.mxu0 0.0
    %533 = vmatprep.mubr.f32.mxu0 0.0
    %534 = vmatmul.mubr.f32.gmra.mrb[0].mxu0 %v449
    %v535 = vpop.f32.mrb[0].mxu0
    %v536 = vadd.f32 0.0, %v535
    %v537 = vpop.f32.mrb[0].mxu0
    %538 = vmatprep.mubr.f32.mxu0 0.0
    %539 = vmatmul.mubr.f32.gmra.mrb[0].mxu0 %v452
    %v540 = vpop.f32.mrb[0].mxu0
    %v541 = vadd.f32 0.0, %v540
    %v542 = vpop.f32.mrb[0].mxu0
    %543 = vmatprep.mubr.f32.mxu0 0.0
    %544 = vmatmul.mubr.f32.gmra.mrb[0].mxu0 %v455
    %v545 = vpop.f32.mrb[0].mxu0
    %v546 = vadd.f32 0.0, %v545
    %v547 = vpop.f32.mrb[0].mxu0
    %548 = vmatprep.mubr.f32.mxu0 0.0
    %549 = vmatmul.mubr.f32.gmra.mrb[0].mxu0 %v458
    %v550 = vpop.f32.mrb[0].mxu0
    %v551 = vadd.f32 0.0, %v550
    %v552 = vpop.f32.mrb[0].mxu0
    %553 = vmatprep.mubr.f32.mxu0 0.0
    %554 = vmatmul.mubr.f32.gmra.mrb[0].mxu0 %v461
    %v555 = vpop.f32.mrb[0].mxu0
    %v556 = vadd.f32 0.0, %v555
    %v557 = vpop.f32.mrb[0].mxu0
    %558 = vmatprep.mubr.f32.mxu0 0.0
    %559 = vmatmul.mubr.f32.gmra.mrb[0].mxu0 %v464
    %v560 = vpop.f32.mrb[0].mxu0
    %v561 = vadd.f32 0.0, %v560
    %v562 = vpop.f32.mrb[0].mxu0
    %563 = vmatprep.mubr.f32.mxu0 0.0
    %564 = vmatmul.mubr.f32.gmra.mrb[0].mxu0 %v467
    %v565 = vpop.f32.mrb[0].mxu0
    %v566 = vadd.f32 0.0, %v565
    %v567 = vpop.f32.mrb[0].mxu0
    %568 = vdwg.mxu0
    %v569 = vmax.f32 %v433, %v536
    %v570 = vmax.f32 %v434, %v541
    %v571 = vmax.f32 %v435, %v546
    %v572 = vmax.f32 %v436, %v551
    %v573 = vmax.f32 %v437, %v556
    %v574 = vmax.f32 %v438, %v561
    %v575 = vmax.f32 %v439, %v566
    %v576 = vld [vmem:[%s6] sm:$0x1]
    %v577 = vlaneseq
    %v578 = vshrl.u32 %v577, 7
    %v579 = vsub.s32 0, %v578
    %v580 = vrot.slane %v576, %v579
    %v581 = vadd.f32 %v569, %v580
    %v582 = vadd.f32 %v570, %v580
    %v583 = vadd.f32 %v571, %v580
    %v584 = vadd.f32 %v572, %v580
    %v585 = vadd.f32 %v573, %v580
    %v586 = vadd.f32 %v574, %v580
    %v587 = vadd.f32 %v575, %v580
    %v588 = vmax.f32 %v581, 0.0
    %v589 = vmax.f32 %v582, 0.0
    %v590 = vmax.f32 %v583, 0.0
    %v591 = vmax.f32 %v584, 0.0
    %v592 = vmax.f32 %v585, 0.0
    %v593 = vmax.f32 %v586, 0.0
    %v594 = vmax.f32 %v587, 0.0
    %v595 = vld [vmem:[%s2] sm:$0xf]
    %v596 = vld [vmem:[%s2 + $0x4] sm:$0xf]
    %v597 = vld [vmem:[%s2 + $0x8] sm:$0xf]
    %v598 = vld [vmem:[%s2 + $0xc] sm:$0xf]
    %v599 = vld [vmem:[%s2 + $0x10] sm:$0xf]
    %v600 = vld [vmem:[%s2 + $0x14] sm:$0xf]
    %v601 = vld [vmem:[%s2 + $0x18] sm:$0xf]
    %v602 = vld [vmem:[%s2 + $0x1c] sm:$0xf]
    %v603 = vld [vmem:[%s2 + $0x20] sm:$0xf]
    %v604 = vld [vmem:[%s2 + $0x24] sm:$0xf]
    %v605 = vld [vmem:[%s2 + $0x28] sm:$0xf]
    %v606 = vld [vmem:[%s2 + $0x2c] sm:$0xf]
    %v607 = vld [vmem:[%s2 + $0x30] sm:$0xf]
    %v608 = vld [vmem:[%s2 + $0x34] sm:$0xf]
    %v609 = vld [vmem:[%s2 + $0x38] sm:$0xf]
    %v610 = vld [vmem:[%s2 + $0x3c] sm:$0xf]
    %v611 = vld [vmem:[%s2 + $0x40] sm:$0xf]
    %v612 = vld [vmem:[%s2 + $0x44] sm:$0xf]
    %v613 = vld [vmem:[%s2 + $0x48] sm:$0xf]
    %v614 = vld [vmem:[%s2 + $0x4c] sm:$0xf]
    %v615 = vld [vmem:[%s2 + $0x50] sm:$0xf]
    %v616 = vld [vmem:[%s2 + $0x54] sm:$0xf]
    %v617 = vld [vmem:[%s2 + $0x58] sm:$0xf]
    %v618 = vld [vmem:[%s2 + $0x5c] sm:$0xf]
    %v619 = vld [vmem:[%s2 + $0x60] sm:$0xf]
    %v620 = vld [vmem:[%s2 + $0x64] sm:$0xf]
    %v621 = vld [vmem:[%s2 + $0x68] sm:$0xf]
    %v622 = vld [vmem:[%s2 + $0x6c] sm:$0xf]
    %v623 = vld [vmem:[%s2 + $0x70] sm:$0xf]
    %v624 = vld [vmem:[%s2 + $0x74] sm:$0xf]
    %v625 = vld [vmem:[%s2 + $0x78] sm:$0xf]
    %v626 = vld [vmem:[%s2 + $0x7c] sm:$0xf]
    %v627 = vld [vmem:[%s2 + $0x80] sm:$0xf]
    %v628 = vld [vmem:[%s2 + $0x84] sm:$0xf]
    %v629 = vld [vmem:[%s2 + $0x88] sm:$0xf]
    %v630 = vld [vmem:[%s2 + $0x8c] sm:$0xf]
    %v631 = vld [vmem:[%s2 + $0x90] sm:$0xf]
    %v632 = vld [vmem:[%s2 + $0x94] sm:$0xf]
    %v633 = vld [vmem:[%s2 + $0x98] sm:$0xf]
    %v634 = vld [vmem:[%s2 + $0x9c] sm:$0xf]
    %v635 = vld [vmem:[%s2 + $0xa0] sm:$0xf]
    %v636 = vld [vmem:[%s2 + $0xa4] sm:$0xf]
    %v637 = vld [vmem:[%s2 + $0xa8] sm:$0xf]
    %v638 = vld [vmem:[%s2 + $0xac] sm:$0xf]
    %v639 = vld [vmem:[%s2 + $0xb0] sm:$0xf]
    %v640 = vld [vmem:[%s2 + $0xb4] sm:$0xf]
    %v641 = vld [vmem:[%s2 + $0xb8] sm:$0xf]
    %v642 = vld [vmem:[%s2 + $0xbc] sm:$0xf]
    %v643 = vld [vmem:[%s2 + $0xc0] sm:$0xf]
    %v644 = vld [vmem:[%s2 + $0xc4] sm:$0xf]
    %v645 = vld [vmem:[%s2 + $0xc8] sm:$0xf]
    %v646 = vld [vmem:[%s2 + $0xcc] sm:$0xf]
    %v647 = vld [vmem:[%s2 + $0xd0] sm:$0xf]
    %v648 = vld [vmem:[%s2 + $0xd4] sm:$0xf]
    %v649 = vld [vmem:[%s2 + $0xd8] sm:$0xf]
    %v650 = vld [vmem:[%s2 + $0xdc] sm:$0xf]
    %v651 = vld [vmem:[%s2 + $0xe0] sm:$0xf]
    %v652 = vld [vmem:[%s2 + $0xe4] sm:$0xf]
    %v653 = vld [vmem:[%s2 + $0xe8] sm:$0xf]
    %v654 = vld [vmem:[%s2 + $0xec] sm:$0xf]
    %v655 = vld [vmem:[%s2 + $0xf0] sm:$0xf]
    %v656 = vld [vmem:[%s2 + $0xf4] sm:$0xf]
    %v657 = vld [vmem:[%s2 + $0xf8] sm:$0xf]
    %v658 = vld [vmem:[%s2 + $0xfc] sm:$0xf]
    %v723 = vunpack.c.l.b16 %v595
    %v724 = vunpack.c.l.b16 %v596
    %v725 = vunpack.c.l.b16 %v597
    %v726 = vunpack.c.l.b16 %v598
    %v727 = vunpack.c.l.b16 %v599
    %v728 = vunpack.c.l.b16 %v600
    %v729 = vunpack.c.l.b16 %v601
    %v730 = vunpack.c.l.b16 %v602
    %v731 = vunpack.c.l.b16 %v603
    %v732 = vunpack.c.l.b16 %v604
    %v733 = vunpack.c.l.b16 %v605
    %v734 = vunpack.c.l.b16 %v606
    %v735 = vunpack.c.l.b16 %v607
    %v736 = vunpack.c.l.b16 %v608
    %v737 = vunpack.c.l.b16 %v609
    %v738 = vunpack.c.l.b16 %v610
    %v739 = vunpack.c.l.b16 %v611
    %v740 = vunpack.c.l.b16 %v612
    %v741 = vunpack.c.l.b16 %v613
    %v742 = vunpack.c.l.b16 %v614
    %v743 = vunpack.c.l.b16 %v615
    %v744 = vunpack.c.l.b16 %v616
    %v745 = vunpack.c.l.b16 %v617
    %v746 = vunpack.c.l.b16 %v618
    %v747 = vunpack.c.l.b16 %v619
    %v748 = vunpack.c.l.b16 %v620
    %v749 = vunpack.c.l.b16 %v621
    %v750 = vunpack.c.l.b16 %v622
    %v751 = vunpack.c.l.b16 %v623
    %v752 = vunpack.c.l.b16 %v624
    %v753 = vunpack.c.l.b16 %v625
    %v754 = vunpack.c.l.b16 %v626
    %v755 = vunpack.c.l.b16 %v627
    %v756 = vunpack.c.l.b16 %v628
    %v757 = vunpack.c.l.b16 %v629
    %v758 = vunpack.c.l.b16 %v630
    %v759 = vunpack.c.l.b16 %v631
    %v760 = vunpack.c.l.b16 %v632
    %v761 = vunpack.c.l.b16 %v633
    %v762 = vunpack.c.l.b16 %v634
    %v763 = vunpack.c.l.b16 %v635
    %v764 = vunpack.c.l.b16 %v636
    %v765 = vunpack.c.l.b16 %v637
    %v766 = vunpack.c.l.b16 %v638
    %v767 = vunpack.c.l.b16 %v639
    %v768 = vunpack.c.l.b16 %v640
    %v769 = vunpack.c.l.b16 %v641
    %v770 = vunpack.c.l.b16 %v642
    %v771 = vunpack.c.l.b16 %v643
    %v772 = vunpack.c.l.b16 %v644
    %v773 = vunpack.c.l.b16 %v645
    %v774 = vunpack.c.l.b16 %v646
    %v775 = vunpack.c.l.b16 %v647
    %v776 = vunpack.c.l.b16 %v648
    %v777 = vunpack.c.l.b16 %v649
    %v778 = vunpack.c.l.b16 %v650
    %v779 = vunpack.c.l.b16 %v651
    %v780 = vunpack.c.l.b16 %v652
    %v781 = vunpack.c.l.b16 %v653
    %v782 = vunpack.c.l.b16 %v654
    %v783 = vunpack.c.l.b16 %v655
    %v784 = vunpack.c.l.b16 %v656
    %v785 = vunpack.c.l.b16 %v657
    %v786 = vunpack.c.l.b16 %v658
    %v787 = vpack.c.b16 %v724, %v723
    %v788 = vpack.c.b16 %v726, %v725
    %v789 = vpack.c.b16 %v728, %v727
    %v790 = vpack.c.b16 %v730, %v729
    %v791 = vpack.c.b16 %v732, %v731
    %v792 = vpack.c.b16 %v734, %v733
    %v793 = vpack.c.b16 %v736, %v735
    %v794 = vpack.c.b16 %v738, %v737
    %v795 = vpack.c.b16 %v740, %v739
    %v796 = vpack.c.b16 %v742, %v741
    %v797 = vpack.c.b16 %v744, %v743
    %v798 = vpack.c.b16 %v746, %v745
    %v799 = vpack.c.b16 %v748, %v747
    %v800 = vpack.c.b16 %v750, %v749
    %v801 = vpack.c.b16 %v752, %v751
    %v802 = vpack.c.b16 %v754, %v753
    %v803 = vpack.c.b16 %v756, %v755
    %v804 = vpack.c.b16 %v758, %v757
    %v805 = vpack.c.b16 %v760, %v759
    %v806 = vpack.c.b16 %v762, %v761
    %v807 = vpack.c.b16 %v764, %v763
    %v808 = vpack.c.b16 %v766, %v765
    %v809 = vpack.c.b16 %v768, %v767
    %v810 = vpack.c.b16 %v770, %v769
    %v811 = vpack.c.b16 %v772, %v771
    %v812 = vpack.c.b16 %v774, %v773
    %v813 = vpack.c.b16 %v776, %v775
    %v814 = vpack.c.b16 %v778, %v777
    %v815 = vpack.c.b16 %v780, %v779
    %v816 = vpack.c.b16 %v782, %v781
    %v817 = vpack.c.b16 %v784, %v783
    %v818 = vpack.c.b16 %v786, %v785
    %v820 = vsel %vm42, %v787, 0
    %v823 = vsel %vm42, %v788, 0
    %v826 = vsel %vm42, %v789, 0
    %v829 = vsel %vm42, %v790, 0
    %v832 = vsel %vm42, %v791, 0
    %v835 = vsel %vm42, %v792, 0
    %v838 = vsel %vm42, %v793, 0
    %v841 = vsel %vm42, %v794, 0
    %v844 = vsel %vm42, %v795, 0
    %v847 = vsel %vm42, %v796, 0
    %v850 = vsel %vm42, %v797, 0
    %v853 = vsel %vm42, %v798, 0
    %v856 = vsel %vm42, %v799, 0
    %v859 = vsel %vm42, %v800, 0
    %v862 = vsel %vm42, %v801, 0
    %v865 = vsel %vm42, %v802, 0
    %v868 = vsel %vm42, %v803, 0
    %v871 = vsel %vm42, %v804, 0
    %v874 = vsel %vm42, %v805, 0
    %v877 = vsel %vm42, %v806, 0
    %v880 = vsel %vm42, %v807, 0
    %v883 = vsel %vm42, %v808, 0
    %v886 = vsel %vm42, %v809, 0
    %v889 = vsel %vm42, %v810, 0
    %v892 = vsel %vm42, %v811, 0
    %v895 = vsel %vm42, %v812, 0
    %v898 = vsel %vm42, %v813, 0
    %v901 = vsel %vm42, %v814, 0
    %v904 = vsel %vm42, %v815, 0
    %v907 = vsel %vm42, %v816, 0
    %v910 = vsel %vm42, %v817, 0
    %v913 = vsel %vm42, %v818, 0
    %v916 = vsel %vm64, %v594, 0
    %918 = vmatprep.subr.mxu0 0.0
    %919 = vmatpush1.msra.mxu0 %v588
    %920 = vmatprep.subr.mxu0 0.0
    %921 = vmatpush1.msra.mxu0 %v589
    %922 = vmatprep.subr.mxu0 0.0
    %923 = vmatpush1.msra.mxu0 %v590
    %924 = vmatprep.subr.mxu0 0.0
    %925 = vmatpush1.msra.mxu0 %v591
    %926 = vmatprep.subr.mxu0 0.0
    %927 = vmatpush1.msra.mxu0 %v592
    %928 = vmatprep.subr.mxu0 0.0
    %929 = vmatpush1.msra.mxu0 %v593
    %930 = vmatprep.subr.mxu0 0.0
    %931 = vmatpush1.msra.mxu0 %v916
    %932 = vmatprep.subr.mxu0 0.0
    %933 = vmatpush1.msra.mxu0 0.0
    %934 = vmatprep.subr.mxu0 0.0
    %935 = vmatpush1.msra.mxu0 0.0
    %936 = vmatprep.subr.mxu0 0.0
    %937 = vmatpush1.msra.mxu0 0.0
    %938 = vmatprep.subr.mxu0 0.0
    %939 = vmatpush1.msra.mxu0 0.0
    %940 = vmatprep.subr.mxu0 0.0
    %941 = vmatpush1.msra.mxu0 0.0
    %942 = vmatprep.subr.mxu0 0.0
    %943 = vmatpush1.msra.mxu0 0.0
    %944 = vmatprep.subr.mxu0 0.0
    %945 = vmatpush1.msra.mxu0 0.0
    %946 = vmatprep.subr.mxu0 0.0
    %947 = vmatpush1.msra.mxu0 0.0
    %948 = vmatprep.subr.mxu0 0.0
    %949 = vmatpush1.msra.mxu0 0.0
    %950 = vmatprep.subr.mxu0 0.0
    %951 = vmatpush1.msra.mxu0 0.0
    %952 = vmatprep.subr.mxu0 0.0
    %953 = vmatpush1.msra.mxu0 0.0
    %954 = vmatprep.subr.mxu0 0.0
    %955 = vmatpush1.msra.mxu0 0.0
    %956 = vmatprep.subr.mxu0 0.0
    %957 = vmatpush1.msra.mxu0 0.0
    %958 = vmatprep.subr.mxu0 0.0
    %959 = vmatpush1.msra.mxu0 0.0
    %960 = vmatprep.subr.mxu0 0.0
    %961 = vmatpush1.msra.mxu0 0.0
    %962 = vmatprep.subr.mxu0 0.0
    %963 = vmatpush1.msra.mxu0 0.0
    %964 = vmatprep.subr.mxu0 0.0
    %965 = vmatpush1.msra.mxu0 0.0
    %966 = vmatprep.subr.mxu0 0.0
    %967 = vmatpush1.msra.mxu0 0.0
    %968 = vmatprep.subr.mxu0 0.0
    %969 = vmatpush1.msra.mxu0 0.0
    %970 = vmatprep.subr.mxu0 0.0
    %971 = vmatpush1.msra.mxu0 0.0
    %972 = vmatprep.subr.mxu0 0.0
    %973 = vmatpush1.msra.mxu0 0.0
    %974 = vmatprep.subr.mxu0 0.0
    %975 = vmatpush1.msra.mxu0 0.0
    %976 = vmatprep.subr.mxu0 0.0
    %977 = vmatpush1.msra.mxu0 0.0
    %978 = vmatprep.subr.mxu0 0.0
    %979 = vmatpush1.msra.mxu0 0.0
    %980 = vmatprep.subr.mxu0 0.0
    %981 = vmatpush1.msra.mxu0 0.0
    %982 = vmatprep.mubr.bf16.mxu0 0
    %983 = vmatmul.mubr.bf16.gmra.mrb[0].mxu0 %v820
    %v984 = vpop.f32.mrb[0].mxu0
    %v985 = vadd.f32 0.0, %v984
    %v986 = vpop.f32.mrb[0].mxu0
    %v987 = vpop.f32.mrb[0].mxu0
    %v988 = vadd.f32 0.0, %v987
    %v989 = vpop.f32.mrb[0].mxu0
    %990 = vmatprep.mubr.bf16.mxu0 0
    %991 = vmatmul.mubr.bf16.gmra.mrb[0].mxu0 %v823
    %v992 = vpop.f32.mrb[0].mxu0
    %v993 = vadd.f32 0.0, %v992
    %v994 = vpop.f32.mrb[0].mxu0
    %v995 = vpop.f32.mrb[0].mxu0
    %v996 = vadd.f32 0.0, %v995
    %v997 = vpop.f32.mrb[0].mxu0
    %998 = vmatprep.mubr.bf16.mxu0 0
    %999 = vmatmul.mubr.bf16.gmra.mrb[0].mxu0 %v826
    %v1000 = vpop.f32.mrb[0].mxu0
    %v1001 = vadd.f32 0.0, %v1000
    %v1002 = vpop.f32.mrb[0].mxu0
    %v1003 = vpop.f32.mrb[0].mxu0
    %v1004 = vadd.f32 0.0, %v1003
    %v1005 = vpop.f32.mrb[0].mxu0
    %1006 = vmatprep.mubr.bf16.mxu0 0
    %1007 = vmatmul.mubr.bf16.gmra.mrb[0].mxu0 %v829
    %v1008 = vpop.f32.mrb[0].mxu0
    %v1009 = vadd.f32 0.0, %v1008
    %v1010 = vpop.f32.mrb[0].mxu0
    %v1011 = vpop.f32.mrb[0].mxu0
    %v1012 = vadd.f32 0.0, %v1011
    %v1013 = vpop.f32.mrb[0].mxu0
    %1014 = vmatprep.mubr.bf16.mxu0 0
    %1015 = vmatmul.mubr.bf16.gmra.mrb[0].mxu0 %v832
    %v1016 = vpop.f32.mrb[0].mxu0
    %v1017 = vadd.f32 0.0, %v1016
    %v1018 = vpop.f32.mrb[0].mxu0
    %v1019 = vpop.f32.mrb[0].mxu0
    %v1020 = vadd.f32 0.0, %v1019
    %v1021 = vpop.f32.mrb[0].mxu0
    %1022 = vmatprep.mubr.bf16.mxu0 0
    %1023 = vmatmul.mubr.bf16.gmra.mrb[0].mxu0 %v835
    %v1024 = vpop.f32.mrb[0].mxu0
    %v1025 = vadd.f32 0.0, %v1024
    %v1026 = vpop.f32.mrb[0].mxu0
    %v1027 = vpop.f32.mrb[0].mxu0
    %v1028 = vadd.f32 0.0, %v1027
    %v1029 = vpop.f32.mrb[0].mxu0
    %1030 = vmatprep.mubr.bf16.mxu0 0
    %1031 = vmatmul.mubr.bf16.gmra.mrb[0].mxu0 %v838
    %v1032 = vpop.f32.mrb[0].mxu0
    %v1033 = vadd.f32 0.0, %v1032
    %v1034 = vpop.f32.mrb[0].mxu0
    %v1035 = vpop.f32.mrb[0].mxu0
    %v1036 = vadd.f32 0.0, %v1035
    %v1037 = vpop.f32.mrb[0].mxu0
    %1038 = vmatprep.mubr.bf16.mxu0 0
    %1039 = vmatmul.mubr.bf16.gmra.mrb[0].mxu0 %v841
    %v1040 = vpop.f32.mrb[0].mxu0
    %v1041 = vadd.f32 0.0, %v1040
    %v1042 = vpop.f32.mrb[0].mxu0
    %v1043 = vpop.f32.mrb[0].mxu0
    %v1044 = vadd.f32 0.0, %v1043
    %v1045 = vpop.f32.mrb[0].mxu0
    %1046 = vmatprep.mubr.bf16.mxu0 0
    %1047 = vmatmul.mubr.bf16.gmra.mrb[0].mxu0 %v844
    %v1048 = vpop.f32.mrb[0].mxu0
    %v1049 = vadd.f32 0.0, %v1048
    %v1050 = vpop.f32.mrb[0].mxu0
    %v1051 = vpop.f32.mrb[0].mxu0
    %v1052 = vadd.f32 0.0, %v1051
    %v1053 = vpop.f32.mrb[0].mxu0
    %1054 = vmatprep.mubr.bf16.mxu0 0
    %1055 = vmatmul.mubr.bf16.gmra.mrb[0].mxu0 %v847
    %v1056 = vpop.f32.mrb[0].mxu0
    %v1057 = vadd.f32 0.0, %v1056
    %v1058 = vpop.f32.mrb[0].mxu0
    %v1059 = vpop.f32.mrb[0].mxu0
    %v1060 = vadd.f32 0.0, %v1059
    %v1061 = vpop.f32.mrb[0].mxu0
    %1062 = vmatprep.mubr.bf16.mxu0 0
    %1063 = vmatmul.mubr.bf16.gmra.mrb[0].mxu0 %v850
    %v1064 = vpop.f32.mrb[0].mxu0
    %v1065 = vadd.f32 0.0, %v1064
    %v1066 = vpop.f32.mrb[0].mxu0
    %v1067 = vpop.f32.mrb[0].mxu0
    %v1068 = vadd.f32 0.0, %v1067
    %v1069 = vpop.f32.mrb[0].mxu0
    %1070 = vmatprep.mubr.bf16.mxu0 0
    %1071 = vmatmul.mubr.bf16.gmra.mrb[0].mxu0 %v853
    %v1072 = vpop.f32.mrb[0].mxu0
    %v1073 = vadd.f32 0.0, %v1072
    %v1074 = vpop.f32.mrb[0].mxu0
    %v1075 = vpop.f32.mrb[0].mxu0
    %v1076 = vadd.f32 0.0, %v1075
    %v1077 = vpop.f32.mrb[0].mxu0
    %1078 = vmatprep.mubr.bf16.mxu0 0
    %1079 = vmatmul.mubr.bf16.gmra.mrb[0].mxu0 %v856
    %v1080 = vpop.f32.mrb[0].mxu0
    %v1081 = vadd.f32 0.0, %v1080
    %v1082 = vpop.f32.mrb[0].mxu0
    %v1083 = vpop.f32.mrb[0].mxu0
    %v1084 = vadd.f32 0.0, %v1083
    %v1085 = vpop.f32.mrb[0].mxu0
    %1086 = vmatprep.mubr.bf16.mxu0 0
    %1087 = vmatmul.mubr.bf16.gmra.mrb[0].mxu0 %v859
    %v1088 = vpop.f32.mrb[0].mxu0
    %v1089 = vadd.f32 0.0, %v1088
    %v1090 = vpop.f32.mrb[0].mxu0
    %v1091 = vpop.f32.mrb[0].mxu0
    %v1092 = vadd.f32 0.0, %v1091
    %v1093 = vpop.f32.mrb[0].mxu0
    %1094 = vmatprep.mubr.bf16.mxu0 0
    %1095 = vmatmul.mubr.bf16.gmra.mrb[0].mxu0 %v862
    %v1096 = vpop.f32.mrb[0].mxu0
    %v1097 = vadd.f32 0.0, %v1096
    %v1098 = vpop.f32.mrb[0].mxu0
    %v1099 = vpop.f32.mrb[0].mxu0
    %v1100 = vadd.f32 0.0, %v1099
    %v1101 = vpop.f32.mrb[0].mxu0
    %1102 = vmatprep.mubr.bf16.mxu0 0
    %1103 = vmatmul.mubr.bf16.gmra.mrb[0].mxu0 %v865
    %v1104 = vpop.f32.mrb[0].mxu0
    %v1105 = vadd.f32 0.0, %v1104
    %v1106 = vpop.f32.mrb[0].mxu0
    %v1107 = vpop.f32.mrb[0].mxu0
    %v1108 = vadd.f32 0.0, %v1107
    %v1109 = vpop.f32.mrb[0].mxu0
    %1110 = vmatprep.mubr.bf16.mxu0 0
    %1111 = vmatmul.mubr.bf16.gmra.mrb[0].mxu0 %v868
    %v1112 = vpop.f32.mrb[0].mxu0
    %v1113 = vadd.f32 0.0, %v1112
    %v1114 = vpop.f32.mrb[0].mxu0
    %v1115 = vpop.f32.mrb[0].mxu0
    %v1116 = vadd.f32 0.0, %v1115
    %v1117 = vpop.f32.mrb[0].mxu0
    %1118 = vmatprep.mubr.bf16.mxu0 0
    %1119 = vmatmul.mubr.bf16.gmra.mrb[0].mxu0 %v871
    %v1120 = vpop.f32.mrb[0].mxu0
    %v1121 = vadd.f32 0.0, %v1120
    %v1122 = vpop.f32.mrb[0].mxu0
    %v1123 = vpop.f32.mrb[0].mxu0
    %v1124 = vadd.f32 0.0, %v1123
    %v1125 = vpop.f32.mrb[0].mxu0
    %1126 = vmatprep.mubr.bf16.mxu0 0
    %1127 = vmatmul.mubr.bf16.gmra.mrb[0].mxu0 %v874
    %v1128 = vpop.f32.mrb[0].mxu0
    %v1129 = vadd.f32 0.0, %v1128
    %v1130 = vpop.f32.mrb[0].mxu0
    %v1131 = vpop.f32.mrb[0].mxu0
    %v1132 = vadd.f32 0.0, %v1131
    %v1133 = vpop.f32.mrb[0].mxu0
    %1134 = vmatprep.mubr.bf16.mxu0 0
    %1135 = vmatmul.mubr.bf16.gmra.mrb[0].mxu0 %v877
    %v1136 = vpop.f32.mrb[0].mxu0
    %v1137 = vadd.f32 0.0, %v1136
    %v1138 = vpop.f32.mrb[0].mxu0
    %v1139 = vpop.f32.mrb[0].mxu0
    %v1140 = vadd.f32 0.0, %v1139
    %v1141 = vpop.f32.mrb[0].mxu0
    %1142 = vmatprep.mubr.bf16.mxu0 0
    %1143 = vmatmul.mubr.bf16.gmra.mrb[0].mxu0 %v880
    %v1144 = vpop.f32.mrb[0].mxu0
    %v1145 = vadd.f32 0.0, %v1144
    %v1146 = vpop.f32.mrb[0].mxu0
    %v1147 = vpop.f32.mrb[0].mxu0
    %v1148 = vadd.f32 0.0, %v1147
    %v1149 = vpop.f32.mrb[0].mxu0
    %1150 = vmatprep.mubr.bf16.mxu0 0
    %1151 = vmatmul.mubr.bf16.gmra.mrb[0].mxu0 %v883
    %v1152 = vpop.f32.mrb[0].mxu0
    %v1153 = vadd.f32 0.0, %v1152
    %v1154 = vpop.f32.mrb[0].mxu0
    %v1155 = vpop.f32.mrb[0].mxu0
    %v1156 = vadd.f32 0.0, %v1155
    %v1157 = vpop.f32.mrb[0].mxu0
    %1158 = vmatprep.mubr.bf16.mxu0 0
    %1159 = vmatmul.mubr.bf16.gmra.mrb[0].mxu0 %v886
    %v1160 = vpop.f32.mrb[0].mxu0
    %v1161 = vadd.f32 0.0, %v1160
    %v1162 = vpop.f32.mrb[0].mxu0
    %v1163 = vpop.f32.mrb[0].mxu0
    %v1164 = vadd.f32 0.0, %v1163
    %v1165 = vpop.f32.mrb[0].mxu0
    %1166 = vmatprep.mubr.bf16.mxu0 0
    %1167 = vmatmul.mubr.bf16.gmra.mrb[0].mxu0 %v889
    %v1168 = vpop.f32.mrb[0].mxu0
    %v1169 = vadd.f32 0.0, %v1168
    %v1170 = vpop.f32.mrb[0].mxu0
    %v1171 = vpop.f32.mrb[0].mxu0
    %v1172 = vadd.f32 0.0, %v1171
    %v1173 = vpop.f32.mrb[0].mxu0
    %1174 = vmatprep.mubr.bf16.mxu0 0
    %1175 = vmatmul.mubr.bf16.gmra.mrb[0].mxu0 %v892
    %v1176 = vpop.f32.mrb[0].mxu0
    %v1177 = vadd.f32 0.0, %v1176
    %v1178 = vpop.f32.mrb[0].mxu0
    %v1179 = vpop.f32.mrb[0].mxu0
    %v1180 = vadd.f32 0.0, %v1179
    %v1181 = vpop.f32.mrb[0].mxu0
    %1182 = vmatprep.mubr.bf16.mxu0 0
    %1183 = vmatmul.mubr.bf16.gmra.mrb[0].mxu0 %v895
    %v1184 = vpop.f32.mrb[0].mxu0
    %v1185 = vadd.f32 0.0, %v1184
    %v1186 = vpop.f32.mrb[0].mxu0
    %v1187 = vpop.f32.mrb[0].mxu0
    %v1188 = vadd.f32 0.0, %v1187
    %v1189 = vpop.f32.mrb[0].mxu0
    %1190 = vmatprep.mubr.bf16.mxu0 0
    %1191 = vmatmul.mubr.bf16.gmra.mrb[0].mxu0 %v898
    %v1192 = vpop.f32.mrb[0].mxu0
    %v1193 = vadd.f32 0.0, %v1192
    %v1194 = vpop.f32.mrb[0].mxu0
    %v1195 = vpop.f32.mrb[0].mxu0
    %v1196 = vadd.f32 0.0, %v1195
    %v1197 = vpop.f32.mrb[0].mxu0
    %1198 = vmatprep.mubr.bf16.mxu0 0
    %1199 = vmatmul.mubr.bf16.gmra.mrb[0].mxu0 %v901
    %v1200 = vpop.f32.mrb[0].mxu0
    %v1201 = vadd.f32 0.0, %v1200
    %v1202 = vpop.f32.mrb[0].mxu0
    %v1203 = vpop.f32.mrb[0].mxu0
    %v1204 = vadd.f32 0.0, %v1203
    %v1205 = vpop.f32.mrb[0].mxu0
    %1206 = vmatprep.mubr.bf16.mxu0 0
    %1207 = vmatmul.mubr.bf16.gmra.mrb[0].mxu0 %v904
    %v1208 = vpop.f32.mrb[0].mxu0
    %v1209 = vadd.f32 0.0, %v1208
    %v1210 = vpop.f32.mrb[0].mxu0
    %v1211 = vpop.f32.mrb[0].mxu0
    %v1212 = vadd.f32 0.0, %v1211
    %v1213 = vpop.f32.mrb[0].mxu0
    %1214 = vmatprep.mubr.bf16.mxu0 0
    %1215 = vmatmul.mubr.bf16.gmra.mrb[0].mxu0 %v907
    %v1216 = vpop.f32.mrb[0].mxu0
    %v1217 = vadd.f32 0.0, %v1216
    %v1218 = vpop.f32.mrb[0].mxu0
    %v1219 = vpop.f32.mrb[0].mxu0
    %v1220 = vadd.f32 0.0, %v1219
    %v1221 = vpop.f32.mrb[0].mxu0
    %1222 = vmatprep.mubr.bf16.mxu0 0
    %1223 = vmatmul.mubr.bf16.gmra.mrb[0].mxu0 %v910
    %v1224 = vpop.f32.mrb[0].mxu0
    %v1225 = vadd.f32 0.0, %v1224
    %v1226 = vpop.f32.mrb[0].mxu0
    %v1227 = vpop.f32.mrb[0].mxu0
    %v1228 = vadd.f32 0.0, %v1227
    %v1229 = vpop.f32.mrb[0].mxu0
    %1230 = vmatprep.mubr.bf16.mxu0 0
    %1231 = vmatmul.mubr.bf16.gmra.mrb[0].mxu0 %v913
    %v1232 = vpop.f32.mrb[0].mxu0
    %v1233 = vadd.f32 0.0, %v1232
    %v1234 = vpop.f32.mrb[0].mxu0
    %v1235 = vpop.f32.mrb[0].mxu0
    %v1236 = vadd.f32 0.0, %v1235
    %v1237 = vpop.f32.mrb[0].mxu0
    %1238 = vdwg.mxu0
    %v1239 = vld [vmem:[%s3] sm:$0xff]
    %v1240 = vld [vmem:[%s3 + $0x8] sm:$0xff]
    %v1241 = vld [vmem:[%s3 + $0x10] sm:$0xff]
    %v1242 = vld [vmem:[%s3 + $0x18] sm:$0xff]
    %s1243 = scalar_lea.vmem %s3, 32
    %v1244 = vld [vmem:[%s1243] sm:$0xff]
    %v1245 = vld [vmem:[%s1243 + $0x8] sm:$0xff]
    %v1246 = vld [vmem:[%s1243 + $0x10] sm:$0xff]
    %v1247 = vld [vmem:[%s1243 + $0x18] sm:$0xff]
    %vm1248 = vcmask 261120
    %v1250 = vsel %vm1248, %v1001, 0
    %v1253 = vsel %vm1248, %v1004, 0
    %v1256 = vsel %vm1248, %v1009, 0
    %v1259 = vsel %vm1248, %v1012, 0
    %1261 = vmatprep.subr.mxu0 0.0
    %1262 = vmatpush1.msra.mxu0 %v1244
    %1263 = vmatprep.subr.mxu0 0.0
    %1264 = vmatpush1.msra.mxu0 %v1245
    %1265 = vmatprep.subr.mxu0 0.0
    %1266 = vmatpush1.msra.mxu0 %v1246
    %1267 = vmatprep.subr.mxu0 0.0
    %1268 = vmatpush1.msra.mxu0 %v1247
    %1269 = vmatprep.subr.mxu0 0.0
    %1270 = vmatpush1.msra.mxu0 0.0
    %1271 = vmatprep.subr.mxu0 0.0
    %1272 = vmatpush1.msra.mxu0 0.0
    %1273 = vmatprep.subr.mxu0 0.0
    %1274 = vmatpush1.msra.mxu0 0.0
    %1275 = vmatprep.subr.mxu0 0.0
    %1276 = vmatpush1.msra.mxu0 0.0
    %1277 = vmatprep.subr.mxu0 0.0
    %1278 = vmatpush1.msra.mxu0 0.0
    %1279 = vmatprep.subr.mxu0 0.0
    %1280 = vmatpush1.msra.mxu0 0.0
    %1281 = vmatprep.subr.mxu0 0.0
    %1282 = vmatpush1.msra.mxu0 0.0
    %1283 = vmatprep.subr.mxu0 0.0
    %1284 = vmatpush1.msra.mxu0 0.0
    %1285 = vmatprep.subr.mxu0 0.0
    %1286 = vmatpush1.msra.mxu0 0.0
    %1287 = vmatprep.subr.mxu0 0.0
    %1288 = vmatpush1.msra.mxu0 0.0
    %1289 = vmatprep.subr.mxu0 0.0
    %1290 = vmatpush1.msra.mxu0 0.0
    %1291 = vmatprep.subr.mxu0 0.0
    %1292 = vmatpush1.msra.mxu0 0.0
    %1293 = vmatprep.subr.mxu0 0.0
    %1294 = vmatpush1.msra.mxu0 0.0
    %1295 = vmatprep.subr.mxu0 0.0
    %1296 = vmatpush1.msra.mxu0 0.0
    %1297 = vmatprep.subr.mxu0 0.0
    %1298 = vmatpush1.msra.mxu0 0.0
    %1299 = vmatprep.subr.mxu0 0.0
    %1300 = vmatpush1.msra.mxu0 0.0
    %1301 = vmatprep.subr.mxu0 0.0
    %1302 = vmatpush1.msra.mxu0 0.0
    %1303 = vmatprep.subr.mxu0 0.0
    %1304 = vmatpush1.msra.mxu0 0.0
    %1305 = vmatprep.subr.mxu0 0.0
    %1306 = vmatpush1.msra.mxu0 0.0
    %1307 = vmatprep.subr.mxu0 0.0
    %1308 = vmatpush1.msra.mxu0 0.0
    %1309 = vmatprep.subr.mxu0 0.0
    %1310 = vmatpush1.msra.mxu0 0.0
    %1311 = vmatprep.subr.mxu0 0.0
    %1312 = vmatpush1.msra.mxu0 0.0
    %1313 = vmatprep.subr.mxu0 0.0
    %1314 = vmatpush1.msra.mxu0 0.0
    %1315 = vmatprep.subr.mxu0 0.0
    %1316 = vmatpush1.msra.mxu0 0.0
    %1317 = vmatprep.subr.mxu0 0.0
    %1318 = vmatpush1.msra.mxu0 0.0
    %1319 = vmatprep.subr.mxu0 0.0
    %1320 = vmatpush1.msra.mxu0 0.0
    %1321 = vmatprep.subr.mxu0 0.0
    %1322 = vmatpush1.msra.mxu0 0.0
    %1323 = vmatprep.subr.mxu0 0.0
    %1324 = vmatpush1.msra.mxu0 0.0
    %1325 = vmatprep.mubr.f32.mxu0 0.0
    %1326 = vmatmul.mubr.f32.gmra.mrb[0].mxu0 %v1250
    %v1327 = vpop.f32.mrb[0].mxu0
    %v1328 = vadd.f32 0.0, %v1327
    %v1329 = vpop.f32.mrb[0].mxu0
    %1330 = vmatprep.mubr.f32.mxu0 0.0
    %1331 = vmatmul.mubr.f32.gmra.mrb[0].mxu0 %v1253
    %v1332 = vpop.f32.mrb[0].mxu0
    %v1333 = vadd.f32 0.0, %v1332
    %v1334 = vpop.f32.mrb[0].mxu0
    %1335 = vmatprep.mubr.f32.mxu0 0.0
    %1336 = vmatmul.mubr.f32.gmra.mrb[0].mxu0 %v1256
    %v1337 = vpop.f32.mrb[0].mxu0
    %v1338 = vadd.f32 0.0, %v1337
    %v1339 = vpop.f32.mrb[0].mxu0
    %1340 = vmatprep.mubr.f32.mxu0 0.0
    %1341 = vmatmul.mubr.f32.gmra.mrb[0].mxu0 %v1259
    %v1342 = vpop.f32.mrb[0].mxu0
    %v1343 = vadd.f32 0.0, %v1342
    %v1344 = vpop.f32.mrb[0].mxu0
    %1345 = vdwg.mxu0
    %s1346 = scalar_lea.vmem %s3, 64
    %v1347 = vld [vmem:[%s1346] sm:$0xff]
    %v1348 = vld [vmem:[%s1346 + $0x8] sm:$0xff]
    %v1349 = vld [vmem:[%s1346 + $0x10] sm:$0xff]
    %v1350 = vld [vmem:[%s1346 + $0x18] sm:$0xff]
    %s1351 = scalar_lea.vmem %s3, 96
    %v1352 = vld [vmem:[%s1351] sm:$0xff]
    %v1353 = vld [vmem:[%s1351 + $0x8] sm:$0xff]
    %v1354 = vld [vmem:[%s1351 + $0x10] sm:$0xff]
    %v1355 = vld [vmem:[%s1351 + $0x18] sm:$0xff]
    %v1357 = vsel %vm1248, %v1033, 0
    %v1360 = vsel %vm1248, %v1036, 0
    %v1363 = vsel %vm1248, %v1041, 0
    %v1366 = vsel %vm1248, %v1044, 0
    %1368 = vmatprep.subr.mxu0 0.0
    %1369 = vmatpush1.msra.mxu0 %v1352
    %1370 = vmatprep.subr.mxu0 0.0
    %1371 = vmatpush1.msra.mxu0 %v1353
    %1372 = vmatprep.subr.mxu0 0.0
    %1373 = vmatpush1.msra.mxu0 %v1354
    %1374 = vmatprep.subr.mxu0 0.0
    %1375 = vmatpush1.msra.mxu0 %v1355
    %1376 = vmatprep.subr.mxu0 0.0
    %1377 = vmatpush1.msra.mxu0 0.0
    %1378 = vmatprep.subr.mxu0 0.0
    %1379 = vmatpush1.msra.mxu0 0.0
    %1380 = vmatprep.subr.mxu0 0.0
    %1381 = vmatpush1.msra.mxu0 0.0
    %1382 = vmatprep.subr.mxu0 0.0
    %1383 = vmatpush1.msra.mxu0 0.0
    %1384 = vmatprep.subr.mxu0 0.0
    %1385 = vmatpush1.msra.mxu0 0.0
    %1386 = vmatprep.subr.mxu0 0.0
    %1387 = vmatpush1.msra.mxu0 0.0
    %1388 = vmatprep.subr.mxu0 0.0
    %1389 = vmatpush1.msra.mxu0 0.0
    %1390 = vmatprep.subr.mxu0 0.0
    %1391 = vmatpush1.msra.mxu0 0.0
    %1392 = vmatprep.subr.mxu0 0.0
    %1393 = vmatpush1.msra.mxu0 0.0
    %1394 = vmatprep.subr.mxu0 0.0
    %1395 = vmatpush1.msra.mxu0 0.0
    %1396 = vmatprep.subr.mxu0 0.0
    %1397 = vmatpush1.msra.mxu0 0.0
    %1398 = vmatprep.subr.mxu0 0.0
    %1399 = vmatpush1.msra.mxu0 0.0
    %1400 = vmatprep.subr.mxu0 0.0
    %1401 = vmatpush1.msra.mxu0 0.0
    %1402 = vmatprep.subr.mxu0 0.0
    %1403 = vmatpush1.msra.mxu0 0.0
    %1404 = vmatprep.subr.mxu0 0.0
    %1405 = vmatpush1.msra.mxu0 0.0
    %1406 = vmatprep.subr.mxu0 0.0
    %1407 = vmatpush1.msra.mxu0 0.0
    %1408 = vmatprep.subr.mxu0 0.0
    %1409 = vmatpush1.msra.mxu0 0.0
    %1410 = vmatprep.subr.mxu0 0.0
    %1411 = vmatpush1.msra.mxu0 0.0
    %1412 = vmatprep.subr.mxu0 0.0
    %1413 = vmatpush1.msra.mxu0 0.0
    %1414 = vmatprep.subr.mxu0 0.0
    %1415 = vmatpush1.msra.mxu0 0.0
    %1416 = vmatprep.subr.mxu0 0.0
    %1417 = vmatpush1.msra.mxu0 0.0
    %1418 = vmatprep.subr.mxu0 0.0
    %1419 = vmatpush1.msra.mxu0 0.0
    %1420 = vmatprep.subr.mxu0 0.0
    %1421 = vmatpush1.msra.mxu0 0.0
    %1422 = vmatprep.subr.mxu0 0.0
    %1423 = vmatpush1.msra.mxu0 0.0
    %1424 = vmatprep.subr.mxu0 0.0
    %1425 = vmatpush1.msra.mxu0 0.0
    %1426 = vmatprep.subr.mxu0 0.0
    %1427 = vmatpush1.msra.mxu0 0.0
    %1428 = vmatprep.subr.mxu0 0.0
    %1429 = vmatpush1.msra.mxu0 0.0
    %1430 = vmatprep.subr.mxu0 0.0
    %1431 = vmatpush1.msra.mxu0 0.0
    %1432 = vmatprep.mubr.f32.mxu0 0.0
    %1433 = vmatmul.mubr.f32.gmra.mrb[0].mxu0 %v1357
    %v1434 = vpop.f32.mrb[0].mxu0
    %v1435 = vadd.f32 0.0, %v1434
    %v1436 = vpop.f32.mrb[0].mxu0
    %1437 = vmatprep.mubr.f32.mxu0 0.0
    %1438 = vmatmul.mubr.f32.gmra.mrb[0].mxu0 %v1360
    %v1439 = vpop.f32.mrb[0].mxu0
    %v1440 = vadd.f32 0.0, %v1439
    %v1441 = vpop.f32.mrb[0].mxu0
    %1442 = vmatprep.mubr.f32.mxu0 0.0
    %1443 = vmatmul.mubr.f32.gmra.mrb[0].mxu0 %v1363
    %v1444 = vpop.f32.mrb[0].mxu0
    %v1445 = vadd.f32 0.0, %v1444
    %v1446 = vpop.f32.mrb[0].mxu0
    %1447 = vmatprep.mubr.f32.mxu0 0.0
    %1448 = vmatmul.mubr.f32.gmra.mrb[0].mxu0 %v1366
    %v1449 = vpop.f32.mrb[0].mxu0
    %v1450 = vadd.f32 0.0, %v1449
    %v1451 = vpop.f32.mrb[0].mxu0
    %1452 = vdwg.mxu0
    %s1453 = scalar_lea.vmem %s3, 128
    %v1454 = vld [vmem:[%s1453] sm:$0xff]
    %v1455 = vld [vmem:[%s1453 + $0x8] sm:$0xff]
    %v1456 = vld [vmem:[%s1453 + $0x10] sm:$0xff]
    %v1457 = vld [vmem:[%s1453 + $0x18] sm:$0xff]
    %s1458 = scalar_lea.vmem %s3, 160
    %v1459 = vld [vmem:[%s1458] sm:$0xff]
    %v1460 = vld [vmem:[%s1458 + $0x8] sm:$0xff]
    %v1461 = vld [vmem:[%s1458 + $0x10] sm:$0xff]
    %v1462 = vld [vmem:[%s1458 + $0x18] sm:$0xff]
    %v1464 = vsel %vm1248, %v1065, 0
    %v1467 = vsel %vm1248, %v1068, 0
    %v1470 = vsel %vm1248, %v1073, 0
    %v1473 = vsel %vm1248, %v1076, 0
    %1475 = vmatprep.subr.mxu0 0.0
    %1476 = vmatpush1.msra.mxu0 %v1459
    %1477 = vmatprep.subr.mxu0 0.0
    %1478 = vmatpush1.msra.mxu0 %v1460
    %1479 = vmatprep.subr.mxu0 0.0
    %1480 = vmatpush1.msra.mxu0 %v1461
    %1481 = vmatprep.subr.mxu0 0.0
    %1482 = vmatpush1.msra.mxu0 %v1462
    %1483 = vmatprep.subr.mxu0 0.0
    %1484 = vmatpush1.msra.mxu0 0.0
    %1485 = vmatprep.subr.mxu0 0.0
    %1486 = vmatpush1.msra.mxu0 0.0
    %1487 = vmatprep.subr.mxu0 0.0
    %1488 = vmatpush1.msra.mxu0 0.0
    %1489 = vmatprep.subr.mxu0 0.0
    %1490 = vmatpush1.msra.mxu0 0.0
    %1491 = vmatprep.subr.mxu0 0.0
    %1492 = vmatpush1.msra.mxu0 0.0
    %1493 = vmatprep.subr.mxu0 0.0
    %1494 = vmatpush1.msra.mxu0 0.0
    %1495 = vmatprep.subr.mxu0 0.0
    %1496 = vmatpush1.msra.mxu0 0.0
    %1497 = vmatprep.subr.mxu0 0.0
    %1498 = vmatpush1.msra.mxu0 0.0
    %1499 = vmatprep.subr.mxu0 0.0
    %1500 = vmatpush1.msra.mxu0 0.0
    %1501 = vmatprep.subr.mxu0 0.0
    %1502 = vmatpush1.msra.mxu0 0.0
    %1503 = vmatprep.subr.mxu0 0.0
    %1504 = vmatpush1.msra.mxu0 0.0
    %1505 = vmatprep.subr.mxu0 0.0
    %1506 = vmatpush1.msra.mxu0 0.0
    %1507 = vmatprep.subr.mxu0 0.0
    %1508 = vmatpush1.msra.mxu0 0.0
    %1509 = vmatprep.subr.mxu0 0.0
    %1510 = vmatpush1.msra.mxu0 0.0
    %1511 = vmatprep.subr.mxu0 0.0
    %1512 = vmatpush1.msra.mxu0 0.0
    %1513 = vmatprep.subr.mxu0 0.0
    %1514 = vmatpush1.msra.mxu0 0.0
    %1515 = vmatprep.subr.mxu0 0.0
    %1516 = vmatpush1.msra.mxu0 0.0
    %1517 = vmatprep.subr.mxu0 0.0
    %1518 = vmatpush1.msra.mxu0 0.0
    %1519 = vmatprep.subr.mxu0 0.0
    %1520 = vmatpush1.msra.mxu0 0.0
    %1521 = vmatprep.subr.mxu0 0.0
    %1522 = vmatpush1.msra.mxu0 0.0
    %1523 = vmatprep.subr.mxu0 0.0
    %1524 = vmatpush1.msra.mxu0 0.0
    %1525 = vmatprep.subr.mxu0 0.0
    %1526 = vmatpush1.msra.mxu0 0.0
    %1527 = vmatprep.subr.mxu0 0.0
    %1528 = vmatpush1.msra.mxu0 0.0
    %1529 = vmatprep.subr.mxu0 0.0
    %1530 = vmatpush1.msra.mxu0 0.0
    %1531 = vmatprep.subr.mxu0 0.0
    %1532 = vmatpush1.msra.mxu0 0.0
    %1533 = vmatprep.subr.mxu0 0.0
    %1534 = vmatpush1.msra.mxu0 0.0
    %1535 = vmatprep.subr.mxu0 0.0
    %1536 = vmatpush1.msra.mxu0 0.0
    %1537 = vmatprep.subr.mxu0 0.0
    %1538 = vmatpush1.msra.mxu0 0.0
    %1539 = vmatprep.mubr.f32.mxu0 0.0
    %1540 = vmatmul.mubr.f32.gmra.mrb[0].mxu0 %v1464
    %v1541 = vpop.f32.mrb[0].mxu0
    %v1542 = vadd.f32 0.0, %v1541
    %v1543 = vpop.f32.mrb[0].mxu0
    %1544 = vmatprep.mubr.f32.mxu0 0.0
    %1545 = vmatmul.mubr.f32.gmra.mrb[0].mxu0 %v1467
    %v1546 = vpop.f32.mrb[0].mxu0
    %v1547 = vadd.f32 0.0, %v1546
    %v1548 = vpop.f32.mrb[0].mxu0
    %1549 = vmatprep.mubr.f32.mxu0 0.0
    %1550 = vmatmul.mubr.f32.gmra.mrb[0].mxu0 %v1470
    %v1551 = vpop.f32.mrb[0].mxu0
    %v1552 = vadd.f32 0.0, %v1551
    %v1553 = vpop.f32.mrb[0].mxu0
    %1554 = vmatprep.mubr.f32.mxu0 0.0
    %1555 = vmatmul.mubr.f32.gmra.mrb[0].mxu0 %v1473
    %v1556 = vpop.f32.mrb[0].mxu0
    %v1557 = vadd.f32 0.0, %v1556
    %v1558 = vpop.f32.mrb[0].mxu0
    %1559 = vdwg.mxu0
    %s1560 = scalar_lea.vmem %s3, 192
    %v1561 = vld [vmem:[%s1560] sm:$0xff]
    %v1562 = vld [vmem:[%s1560 + $0x8] sm:$0xff]
    %v1563 = vld [vmem:[%s1560 + $0x10] sm:$0xff]
    %v1564 = vld [vmem:[%s1560 + $0x18] sm:$0xff]
    %s1565 = scalar_lea.vmem %s3, 224
    %v1566 = vld [vmem:[%s1565] sm:$0xff]
    %v1567 = vld [vmem:[%s1565 + $0x8] sm:$0xff]
    %v1568 = vld [vmem:[%s1565 + $0x10] sm:$0xff]
    %v1569 = vld [vmem:[%s1565 + $0x18] sm:$0xff]
    %v1571 = vsel %vm1248, %v1097, 0
    %v1574 = vsel %vm1248, %v1100, 0
    %v1577 = vsel %vm1248, %v1105, 0
    %v1580 = vsel %vm1248, %v1108, 0
    %1582 = vmatprep.subr.mxu0 0.0
    %1583 = vmatpush1.msra.mxu0 %v1566
    %1584 = vmatprep.subr.mxu0 0.0
    %1585 = vmatpush1.msra.mxu0 %v1567
    %1586 = vmatprep.subr.mxu0 0.0
    %1587 = vmatpush1.msra.mxu0 %v1568
    %1588 = vmatprep.subr.mxu0 0.0
    %1589 = vmatpush1.msra.mxu0 %v1569
    %1590 = vmatprep.subr.mxu0 0.0
    %1591 = vmatpush1.msra.mxu0 0.0
    %1592 = vmatprep.subr.mxu0 0.0
    %1593 = vmatpush1.msra.mxu0 0.0
    %1594 = vmatprep.subr.mxu0 0.0
    %1595 = vmatpush1.msra.mxu0 0.0
    %1596 = vmatprep.subr.mxu0 0.0
    %1597 = vmatpush1.msra.mxu0 0.0
    %1598 = vmatprep.subr.mxu0 0.0
    %1599 = vmatpush1.msra.mxu0 0.0
    %1600 = vmatprep.subr.mxu0 0.0
    %1601 = vmatpush1.msra.mxu0 0.0
    %1602 = vmatprep.subr.mxu0 0.0
    %1603 = vmatpush1.msra.mxu0 0.0
    %1604 = vmatprep.subr.mxu0 0.0
    %1605 = vmatpush1.msra.mxu0 0.0
    %1606 = vmatprep.subr.mxu0 0.0
    %1607 = vmatpush1.msra.mxu0 0.0
    %1608 = vmatprep.subr.mxu0 0.0
    %1609 = vmatpush1.msra.mxu0 0.0
    %1610 = vmatprep.subr.mxu0 0.0
    %1611 = vmatpush1.msra.mxu0 0.0
    %1612 = vmatprep.subr.mxu0 0.0
    %1613 = vmatpush1.msra.mxu0 0.0
    %1614 = vmatprep.subr.mxu0 0.0
    %1615 = vmatpush1.msra.mxu0 0.0
    %1616 = vmatprep.subr.mxu0 0.0
    %1617 = vmatpush1.msra.mxu0 0.0
    %1618 = vmatprep.subr.mxu0 0.0
    %1619 = vmatpush1.msra.mxu0 0.0
    %1620 = vmatprep.subr.mxu0 0.0
    %1621 = vmatpush1.msra.mxu0 0.0
    %1622 = vmatprep.subr.mxu0 0.0
    %1623 = vmatpush1.msra.mxu0 0.0
    %1624 = vmatprep.subr.mxu0 0.0
    %1625 = vmatpush1.msra.mxu0 0.0
    %1626 = vmatprep.subr.mxu0 0.0
    %1627 = vmatpush1.msra.mxu0 0.0
    %1628 = vmatprep.subr.mxu0 0.0
    %1629 = vmatpush1.msra.mxu0 0.0
    %1630 = vmatprep.subr.mxu0 0.0
    %1631 = vmatpush1.msra.mxu0 0.0
    %1632 = vmatprep.subr.mxu0 0.0
    %1633 = vmatpush1.msra.mxu0 0.0
    %1634 = vmatprep.subr.mxu0 0.0
    %1635 = vmatpush1.msra.mxu0 0.0
    %1636 = vmatprep.subr.mxu0 0.0
    %1637 = vmatpush1.msra.mxu0 0.0
    %1638 = vmatprep.subr.mxu0 0.0
    %1639 = vmatpush1.msra.mxu0 0.0
    %1640 = vmatprep.subr.mxu0 0.0
    %1641 = vmatpush1.msra.mxu0 0.0
    %1642 = vmatprep.subr.mxu0 0.0
    %1643 = vmatpush1.msra.mxu0 0.0
    %1644 = vmatprep.subr.mxu0 0.0
    %1645 = vmatpush1.msra.mxu0 0.0
    %1646 = vmatprep.mubr.f32.mxu0 0.0
    %1647 = vmatmul.mubr.f32.gmra.mrb[0].mxu0 %v1571
    %v1648 = vpop.f32.mrb[0].mxu0
    %v1649 = vadd.f32 0.0, %v1648
    %v1650 = vpop.f32.mrb[0].mxu0
    %1651 = vmatprep.mubr.f32.mxu0 0.0
    %1652 = vmatmul.mubr.f32.gmra.mrb[0].mxu0 %v1574
    %v1653 = vpop.f32.mrb[0].mxu0
    %v1654 = vadd.f32 0.0, %v1653
    %v1655 = vpop.f32.mrb[0].mxu0
    %1656 = vmatprep.mubr.f32.mxu0 0.0
    %1657 = vmatmul.mubr.f32.gmra.mrb[0].mxu0 %v1577
    %v1658 = vpop.f32.mrb[0].mxu0
    %v1659 = vadd.f32 0.0, %v1658
    %v1660 = vpop.f32.mrb[0].mxu0
    %1661 = vmatprep.mubr.f32.mxu0 0.0
    %1662 = vmatmul.mubr.f32.gmra.mrb[0].mxu0 %v1580
    %v1663 = vpop.f32.mrb[0].mxu0
    %v1664 = vadd.f32 0.0, %v1663
    %v1665 = vpop.f32.mrb[0].mxu0
    %1666 = vdwg.mxu0
    %s1667 = scalar_lea.vmem %s3, 256
    %v1668 = vld [vmem:[%s1667] sm:$0xff]
    %v1669 = vld [vmem:[%s1667 + $0x8] sm:$0xff]
    %v1670 = vld [vmem:[%s1667 + $0x10] sm:$0xff]
    %v1671 = vld [vmem:[%s1667 + $0x18] sm:$0xff]
    %s1672 = scalar_lea.vmem %s3, 288
    %v1673 = vld [vmem:[%s1672] sm:$0xff]
    %v1674 = vld [vmem:[%s1672 + $0x8] sm:$0xff]
    %v1675 = vld [vmem:[%s1672 + $0x10] sm:$0xff]
    %v1676 = vld [vmem:[%s1672 + $0x18] sm:$0xff]
    %v1678 = vsel %vm1248, %v1129, 0
    %v1681 = vsel %vm1248, %v1132, 0
    %v1684 = vsel %vm1248, %v1137, 0
    %v1687 = vsel %vm1248, %v1140, 0
    %1689 = vmatprep.subr.mxu0 0.0
    %1690 = vmatpush1.msra.mxu0 %v1673
    %1691 = vmatprep.subr.mxu0 0.0
    %1692 = vmatpush1.msra.mxu0 %v1674
    %1693 = vmatprep.subr.mxu0 0.0
    %1694 = vmatpush1.msra.mxu0 %v1675
    %1695 = vmatprep.subr.mxu0 0.0
    %1696 = vmatpush1.msra.mxu0 %v1676
    %1697 = vmatprep.subr.mxu0 0.0
    %1698 = vmatpush1.msra.mxu0 0.0
    %1699 = vmatprep.subr.mxu0 0.0
    %1700 = vmatpush1.msra.mxu0 0.0
    %1701 = vmatprep.subr.mxu0 0.0
    %1702 = vmatpush1.msra.mxu0 0.0
    %1703 = vmatprep.subr.mxu0 0.0
    %1704 = vmatpush1.msra.mxu0 0.0
    %1705 = vmatprep.subr.mxu0 0.0
    %1706 = vmatpush1.msra.mxu0 0.0
    %1707 = vmatprep.subr.mxu0 0.0
    %1708 = vmatpush1.msra.mxu0 0.0
    %1709 = vmatprep.subr.mxu0 0.0
    %1710 = vmatpush1.msra.mxu0 0.0
    %1711 = vmatprep.subr.mxu0 0.0
    %1712 = vmatpush1.msra.mxu0 0.0
    %1713 = vmatprep.subr.mxu0 0.0
    %1714 = vmatpush1.msra.mxu0 0.0
    %1715 = vmatprep.subr.mxu0 0.0
    %1716 = vmatpush1.msra.mxu0 0.0
    %1717 = vmatprep.subr.mxu0 0.0
    %1718 = vmatpush1.msra.mxu0 0.0
    %1719 = vmatprep.subr.mxu0 0.0
    %1720 = vmatpush1.msra.mxu0 0.0
    %1721 = vmatprep.subr.mxu0 0.0
    %1722 = vmatpush1.msra.mxu0 0.0
    %1723 = vmatprep.subr.mxu0 0.0
    %1724 = vmatpush1.msra.mxu0 0.0
    %1725 = vmatprep.subr.mxu0 0.0
    %1726 = vmatpush1.msra.mxu0 0.0
    %1727 = vmatprep.subr.mxu0 0.0
    %1728 = vmatpush1.msra.mxu0 0.0
    %1729 = vmatprep.subr.mxu0 0.0
    %1730 = vmatpush1.msra.mxu0 0.0
    %1731 = vmatprep.subr.mxu0 0.0
    %1732 = vmatpush1.msra.mxu0 0.0
    %1733 = vmatprep.subr.mxu0 0.0
    %1734 = vmatpush1.msra.mxu0 0.0
    %1735 = vmatprep.subr.mxu0 0.0
    %1736 = vmatpush1.msra.mxu0 0.0
    %1737 = vmatprep.subr.mxu0 0.0
    %1738 = vmatpush1.msra.mxu0 0.0
    %1739 = vmatprep.subr.mxu0 0.0
    %1740 = vmatpush1.msra.mxu0 0.0
    %1741 = vmatprep.subr.mxu0 0.0
    %1742 = vmatpush1.msra.mxu0 0.0
    %1743 = vmatprep.subr.mxu0 0.0
    %1744 = vmatpush1.msra.mxu0 0.0
    %1745 = vmatprep.subr.mxu0 0.0
    %1746 = vmatpush1.msra.mxu0 0.0
    %1747 = vmatprep.subr.mxu0 0.0
    %1748 = vmatpush1.msra.mxu0 0.0
    %1749 = vmatprep.subr.mxu0 0.0
    %1750 = vmatpush1.msra.mxu0 0.0
    %1751 = vmatprep.subr.mxu0 0.0
    %1752 = vmatpush1.msra.mxu0 0.0
    %1753 = vmatprep.mubr.f32.mxu0 0.0
    %1754 = vmatmul.mubr.f32.gmra.mrb[0].mxu0 %v1678
    %v1755 = vpop.f32.mrb[0].mxu0
    %v1756 = vadd.f32 0.0, %v1755
    %v1757 = vpop.f32.mrb[0].mxu0
    %1758 = vmatprep.mubr.f32.mxu0 0.0
    %1759 = vmatmul.mubr.f32.gmra.mrb[0].mxu0 %v1681
    %v1760 = vpop.f32.mrb[0].mxu0
    %v1761 = vadd.f32 0.0, %v1760
    %v1762 = vpop.f32.mrb[0].mxu0
    %1763 = vmatprep.mubr.f32.mxu0 0.0
    %1764 = vmatmul.mubr.f32.gmra.mrb[0].mxu0 %v1684
    %v1765 = vpop.f32.mrb[0].mxu0
    %v1766 = vadd.f32 0.0, %v1765
    %v1767 = vpop.f32.mrb[0].mxu0
    %1768 = vmatprep.mubr.f32.mxu0 0.0
    %1769 = vmatmul.mubr.f32.gmra.mrb[0].mxu0 %v1687
    %v1770 = vpop.f32.mrb[0].mxu0
    %v1771 = vadd.f32 0.0, %v1770
    %v1772 = vpop.f32.mrb[0].mxu0
    %1773 = vdwg.mxu0
    %s1774 = scalar_lea.vmem %s3, 320
    %v1775 = vld [vmem:[%s1774] sm:$0xff]
    %v1776 = vld [vmem:[%s1774 + $0x8] sm:$0xff]
    %v1777 = vld [vmem:[%s1774 + $0x10] sm:$0xff]
    %v1778 = vld [vmem:[%s1774 + $0x18] sm:$0xff]
    %s1779 = scalar_lea.vmem %s3, 352
    %v1780 = vld [vmem:[%s1779] sm:$0xff]
    %v1781 = vld [vmem:[%s1779 + $0x8] sm:$0xff]
    %v1782 = vld [vmem:[%s1779 + $0x10] sm:$0xff]
    %v1783 = vld [vmem:[%s1779 + $0x18] sm:$0xff]
    %v1785 = vsel %vm1248, %v1161, 0
    %v1788 = vsel %vm1248, %v1164, 0
    %v1791 = vsel %vm1248, %v1169, 0
    %v1794 = vsel %vm1248, %v1172, 0
    %1796 = vmatprep.subr.mxu0 0.0
    %1797 = vmatpush1.msra.mxu0 %v1780
    %1798 = vmatprep.subr.mxu0 0.0
    %1799 = vmatpush1.msra.mxu0 %v1781
    %1800 = vmatprep.subr.mxu0 0.0
    %1801 = vmatpush1.msra.mxu0 %v1782
    %1802 = vmatprep.subr.mxu0 0.0
    %1803 = vmatpush1.msra.mxu0 %v1783
    %1804 = vmatprep.subr.mxu0 0.0
    %1805 = vmatpush1.msra.mxu0 0.0
    %1806 = vmatprep.subr.mxu0 0.0
    %1807 = vmatpush1.msra.mxu0 0.0
    %1808 = vmatprep.subr.mxu0 0.0
    %1809 = vmatpush1.msra.mxu0 0.0
    %1810 = vmatprep.subr.mxu0 0.0
    %1811 = vmatpush1.msra.mxu0 0.0
    %1812 = vmatprep.subr.mxu0 0.0
    %1813 = vmatpush1.msra.mxu0 0.0
    %1814 = vmatprep.subr.mxu0 0.0
    %1815 = vmatpush1.msra.mxu0 0.0
    %1816 = vmatprep.subr.mxu0 0.0
    %1817 = vmatpush1.msra.mxu0 0.0
    %1818 = vmatprep.subr.mxu0 0.0
    %1819 = vmatpush1.msra.mxu0 0.0
    %1820 = vmatprep.subr.mxu0 0.0
    %1821 = vmatpush1.msra.mxu0 0.0
    %1822 = vmatprep.subr.mxu0 0.0
    %1823 = vmatpush1.msra.mxu0 0.0
    %1824 = vmatprep.subr.mxu0 0.0
    %1825 = vmatpush1.msra.mxu0 0.0
    %1826 = vmatprep.subr.mxu0 0.0
    %1827 = vmatpush1.msra.mxu0 0.0
    %1828 = vmatprep.subr.mxu0 0.0
    %1829 = vmatpush1.msra.mxu0 0.0
    %1830 = vmatprep.subr.mxu0 0.0
    %1831 = vmatpush1.msra.mxu0 0.0
    %1832 = vmatprep.subr.mxu0 0.0
    %1833 = vmatpush1.msra.mxu0 0.0
    %1834 = vmatprep.subr.mxu0 0.0
    %1835 = vmatpush1.msra.mxu0 0.0
    %1836 = vmatprep.subr.mxu0 0.0
    %1837 = vmatpush1.msra.mxu0 0.0
    %1838 = vmatprep.subr.mxu0 0.0
    %1839 = vmatpush1.msra.mxu0 0.0
    %1840 = vmatprep.subr.mxu0 0.0
    %1841 = vmatpush1.msra.mxu0 0.0
    %1842 = vmatprep.subr.mxu0 0.0
    %1843 = vmatpush1.msra.mxu0 0.0
    %1844 = vmatprep.subr.mxu0 0.0
    %1845 = vmatpush1.msra.mxu0 0.0
    %1846 = vmatprep.subr.mxu0 0.0
    %1847 = vmatpush1.msra.mxu0 0.0
    %1848 = vmatprep.subr.mxu0 0.0
    %1849 = vmatpush1.msra.mxu0 0.0
    %1850 = vmatprep.subr.mxu0 0.0
    %1851 = vmatpush1.msra.mxu0 0.0
    %1852 = vmatprep.subr.mxu0 0.0
    %1853 = vmatpush1.msra.mxu0 0.0
    %1854 = vmatprep.subr.mxu0 0.0
    %1855 = vmatpush1.msra.mxu0 0.0
    %1856 = vmatprep.subr.mxu0 0.0
    %1857 = vmatpush1.msra.mxu0 0.0
    %1858 = vmatprep.subr.mxu0 0.0
    %1859 = vmatpush1.msra.mxu0 0.0
    %1860 = vmatprep.mubr.f32.mxu0 0.0
    %1861 = vmatmul.mubr.f32.gmra.mrb[0].mxu0 %v1785
    %v1862 = vpop.f32.mrb[0].mxu0
    %v1863 = vadd.f32 0.0, %v1862
    %v1864 = vpop.f32.mrb[0].mxu0
    %1865 = vmatprep.mubr.f32.mxu0 0.0
    %1866 = vmatmul.mubr.f32.gmra.mrb[0].mxu0 %v1788
    %v1867 = vpop.f32.mrb[0].mxu0
    %v1868 = vadd.f32 0.0, %v1867
    %v1869 = vpop.f32.mrb[0].mxu0
    %1870 = vmatprep.mubr.f32.mxu0 0.0
    %1871 = vmatmul.mubr.f32.gmra.mrb[0].mxu0 %v1791
    %v1872 = vpop.f32.mrb[0].mxu0
    %v1873 = vadd.f32 0.0, %v1872
    %v1874 = vpop.f32.mrb[0].mxu0
    %1875 = vmatprep.mubr.f32.mxu0 0.0
    %1876 = vmatmul.mubr.f32.gmra.mrb[0].mxu0 %v1794
    %v1877 = vpop.f32.mrb[0].mxu0
    %v1878 = vadd.f32 0.0, %v1877
    %v1879 = vpop.f32.mrb[0].mxu0
    %1880 = vdwg.mxu0
    %s1881 = scalar_lea.vmem %s3, 384
    %v1882 = vld [vmem:[%s1881] sm:$0xff]
    %v1883 = vld [vmem:[%s1881 + $0x8] sm:$0xff]
    %v1884 = vld [vmem:[%s1881 + $0x10] sm:$0xff]
    %v1885 = vld [vmem:[%s1881 + $0x18] sm:$0xff]
    %s1886 = scalar_lea.vmem %s3, 416
    %v1887 = vld [vmem:[%s1886] sm:$0xff]
    %v1888 = vld [vmem:[%s1886 + $0x8] sm:$0xff]
    %v1889 = vld [vmem:[%s1886 + $0x10] sm:$0xff]
    %v1890 = vld [vmem:[%s1886 + $0x18] sm:$0xff]
    %v1892 = vsel %vm1248, %v1193, 0
    %v1895 = vsel %vm1248, %v1196, 0
    %v1898 = vsel %vm1248, %v1201, 0
    %v1901 = vsel %vm1248, %v1204, 0
    %1903 = vmatprep.subr.mxu0 0.0
    %1904 = vmatpush1.msra.mxu0 %v1887
    %1905 = vmatprep.subr.mxu0 0.0
    %1906 = vmatpush1.msra.mxu0 %v1888
    %1907 = vmatprep.subr.mxu0 0.0
    %1908 = vmatpush1.msra.mxu0 %v1889
    %1909 = vmatprep.subr.mxu0 0.0
    %1910 = vmatpush1.msra.mxu0 %v1890
    %1911 = vmatprep.subr.mxu0 0.0
    %1912 = vmatpush1.msra.mxu0 0.0
    %1913 = vmatprep.subr.mxu0 0.0
    %1914 = vmatpush1.msra.mxu0 0.0
    %1915 = vmatprep.subr.mxu0 0.0
    %1916 = vmatpush1.msra.mxu0 0.0
    %1917 = vmatprep.subr.mxu0 0.0
    %1918 = vmatpush1.msra.mxu0 0.0
    %1919 = vmatprep.subr.mxu0 0.0
    %1920 = vmatpush1.msra.mxu0 0.0
    %1921 = vmatprep.subr.mxu0 0.0
    %1922 = vmatpush1.msra.mxu0 0.0
    %1923 = vmatprep.subr.mxu0 0.0
    %1924 = vmatpush1.msra.mxu0 0.0
    %1925 = vmatprep.subr.mxu0 0.0
    %1926 = vmatpush1.msra.mxu0 0.0
    %1927 = vmatprep.subr.mxu0 0.0
    %1928 = vmatpush1.msra.mxu0 0.0
    %1929 = vmatprep.subr.mxu0 0.0
    %1930 = vmatpush1.msra.mxu0 0.0
    %1931 = vmatprep.subr.mxu0 0.0
    %1932 = vmatpush1.msra.mxu0 0.0
    %1933 = vmatprep.subr.mxu0 0.0
    %1934 = vmatpush1.msra.mxu0 0.0
    %1935 = vmatprep.subr.mxu0 0.0
    %1936 = vmatpush1.msra.mxu0 0.0
    %1937 = vmatprep.subr.mxu0 0.0
    %1938 = vmatpush1.msra.mxu0 0.0
    %1939 = vmatprep.subr.mxu0 0.0
    %1940 = vmatpush1.msra.mxu0 0.0
    %1941 = vmatprep.subr.mxu0 0.0
    %1942 = vmatpush1.msra.mxu0 0.0
    %1943 = vmatprep.subr.mxu0 0.0
    %1944 = vmatpush1.msra.mxu0 0.0
    %1945 = vmatprep.subr.mxu0 0.0
    %1946 = vmatpush1.msra.mxu0 0.0
    %1947 = vmatprep.subr.mxu0 0.0
    %1948 = vmatpush1.msra.mxu0 0.0
    %1949 = vmatprep.subr.mxu0 0.0
    %1950 = vmatpush1.msra.mxu0 0.0
    %1951 = vmatprep.subr.mxu0 0.0
    %1952 = vmatpush1.msra.mxu0 0.0
    %1953 = vmatprep.subr.mxu0 0.0
    %1954 = vmatpush1.msra.mxu0 0.0
    %1955 = vmatprep.subr.mxu0 0.0
    %1956 = vmatpush1.msra.mxu0 0.0
    %1957 = vmatprep.subr.mxu0 0.0
    %1958 = vmatpush1.msra.mxu0 0.0
    %1959 = vmatprep.subr.mxu0 0.0
    %1960 = vmatpush1.msra.mxu0 0.0
    %1961 = vmatprep.subr.mxu0 0.0
    %1962 = vmatpush1.msra.mxu0 0.0
    %1963 = vmatprep.subr.mxu0 0.0
    %1964 = vmatpush1.msra.mxu0 0.0
    %1965 = vmatprep.subr.mxu0 0.0
    %1966 = vmatpush1.msra.mxu0 0.0
    %1967 = vmatprep.mubr.f32.mxu0 0.0
    %1968 = vmatmul.mubr.f32.gmra.mrb[0].mxu0 %v1892
    %v1969 = vpop.f32.mrb[0].mxu0
    %v1970 = vadd.f32 0.0, %v1969
    %v1971 = vpop.f32.mrb[0].mxu0
    %1972 = vmatprep.mubr.f32.mxu0 0.0
    %1973 = vmatmul.mubr.f32.gmra.mrb[0].mxu0 %v1895
    %v1974 = vpop.f32.mrb[0].mxu0
    %v1975 = vadd.f32 0.0, %v1974
    %v1976 = vpop.f32.mrb[0].mxu0
    %1977 = vmatprep.mubr.f32.mxu0 0.0
    %1978 = vmatmul.mubr.f32.gmra.mrb[0].mxu0 %v1898
    %v1979 = vpop.f32.mrb[0].mxu0
    %v1980 = vadd.f32 0.0, %v1979
    %v1981 = vpop.f32.mrb[0].mxu0
    %1982 = vmatprep.mubr.f32.mxu0 0.0
    %1983 = vmatmul.mubr.f32.gmra.mrb[0].mxu0 %v1901
    %v1984 = vpop.f32.mrb[0].mxu0
    %v1985 = vadd.f32 0.0, %v1984
    %v1986 = vpop.f32.mrb[0].mxu0
    %1987 = vdwg.mxu0
    %s1988 = scalar_lea.vmem %s3, 448
    %v1989 = vld [vmem:[%s1988] sm:$0xff]
    %v1990 = vld [vmem:[%s1988 + $0x8] sm:$0xff]
    %v1991 = vld [vmem:[%s1988 + $0x10] sm:$0xff]
    %v1992 = vld [vmem:[%s1988 + $0x18] sm:$0xff]
    %s1993 = scalar_lea.vmem %s3, 480
    %v1994 = vld [vmem:[%s1993] sm:$0xff]
    %v1995 = vld [vmem:[%s1993 + $0x8] sm:$0xff]
    %v1996 = vld [vmem:[%s1993 + $0x10] sm:$0xff]
    %v1997 = vld [vmem:[%s1993 + $0x18] sm:$0xff]
    %v1999 = vsel %vm1248, %v1225, 0
    %v2002 = vsel %vm1248, %v1228, 0
    %v2005 = vsel %vm1248, %v1233, 0
    %v2008 = vsel %vm1248, %v1236, 0
    %2010 = vmatprep.subr.mxu0 0.0
    %2011 = vmatpush1.msra.mxu0 %v1994
    %2012 = vmatprep.subr.mxu0 0.0
    %2013 = vmatpush1.msra.mxu0 %v1995
    %2014 = vmatprep.subr.mxu0 0.0
    %2015 = vmatpush1.msra.mxu0 %v1996
    %2016 = vmatprep.subr.mxu0 0.0
    %2017 = vmatpush1.msra.mxu0 %v1997
    %2018 = vmatprep.subr.mxu0 0.0
    %2019 = vmatpush1.msra.mxu0 0.0
    %2020 = vmatprep.subr.mxu0 0.0
    %2021 = vmatpush1.msra.mxu0 0.0
    %2022 = vmatprep.subr.mxu0 0.0
    %2023 = vmatpush1.msra.mxu0 0.0
    %2024 = vmatprep.subr.mxu0 0.0
    %2025 = vmatpush1.msra.mxu0 0.0
    %2026 = vmatprep.subr.mxu0 0.0
    %2027 = vmatpush1.msra.mxu0 0.0
    %2028 = vmatprep.subr.mxu0 0.0
    %2029 = vmatpush1.msra.mxu0 0.0
    %2030 = vmatprep.subr.mxu0 0.0
    %2031 = vmatpush1.msra.mxu0 0.0
    %2032 = vmatprep.subr.mxu0 0.0
    %2033 = vmatpush1.msra.mxu0 0.0
    %2034 = vmatprep.subr.mxu0 0.0
    %2035 = vmatpush1.msra.mxu0 0.0
    %2036 = vmatprep.subr.mxu0 0.0
    %2037 = vmatpush1.msra.mxu0 0.0
    %2038 = vmatprep.subr.mxu0 0.0
    %2039 = vmatpush1.msra.mxu0 0.0
    %2040 = vmatprep.subr.mxu0 0.0
    %2041 = vmatpush1.msra.mxu0 0.0
    %2042 = vmatprep.subr.mxu0 0.0
    %2043 = vmatpush1.msra.mxu0 0.0
    %2044 = vmatprep.subr.mxu0 0.0
    %2045 = vmatpush1.msra.mxu0 0.0
    %2046 = vmatprep.subr.mxu0 0.0
    %2047 = vmatpush1.msra.mxu0 0.0
    %2048 = vmatprep.subr.mxu0 0.0
    %2049 = vmatpush1.msra.mxu0 0.0
    %2050 = vmatprep.subr.mxu0 0.0
    %2051 = vmatpush1.msra.mxu0 0.0
    %2052 = vmatprep.subr.mxu0 0.0
    %2053 = vmatpush1.msra.mxu0 0.0
    %2054 = vmatprep.subr.mxu0 0.0
    %2055 = vmatpush1.msra.mxu0 0.0
    %2056 = vmatprep.subr.mxu0 0.0
    %2057 = vmatpush1.msra.mxu0 0.0
    %2058 = vmatprep.subr.mxu0 0.0
    %2059 = vmatpush1.msra.mxu0 0.0
    %2060 = vmatprep.subr.mxu0 0.0
    %2061 = vmatpush1.msra.mxu0 0.0
    %2062 = vmatprep.subr.mxu0 0.0
    %2063 = vmatpush1.msra.mxu0 0.0
    %2064 = vmatprep.subr.mxu0 0.0
    %2065 = vmatpush1.msra.mxu0 0.0
    %2066 = vmatprep.subr.mxu0 0.0
    %2067 = vmatpush1.msra.mxu0 0.0
    %2068 = vmatprep.subr.mxu0 0.0
    %2069 = vmatpush1.msra.mxu0 0.0
    %2070 = vmatprep.subr.mxu0 0.0
    %2071 = vmatpush1.msra.mxu0 0.0
    %2072 = vmatprep.subr.mxu0 0.0
    %2073 = vmatpush1.msra.mxu0 0.0
    %2074 = vmatprep.mubr.f32.mxu0 0.0
    %2075 = vmatmul.mubr.f32.gmra.mrb[0].mxu0 %v1999
    %v2076 = vpop.f32.mrb[0].mxu0
    %v2077 = vadd.f32 0.0, %v2076
    %v2078 = vpop.f32.mrb[0].mxu0
    %2079 = vmatprep.mubr.f32.mxu0 0.0
    %2080 = vmatmul.mubr.f32.gmra.mrb[0].mxu0 %v2002
    %v2081 = vpop.f32.mrb[0].mxu0
    %v2082 = vadd.f32 0.0, %v2081
    %v2083 = vpop.f32.mrb[0].mxu0
    %2084 = vmatprep.mubr.f32.mxu0 0.0
    %2085 = vmatmul.mubr.f32.gmra.mrb[0].mxu0 %v2005
    %v2086 = vpop.f32.mrb[0].mxu0
    %v2087 = vadd.f32 0.0, %v2086
    %v2088 = vpop.f32.mrb[0].mxu0
    %2089 = vmatprep.mubr.f32.mxu0 0.0
    %2090 = vmatmul.mubr.f32.gmra.mrb[0].mxu0 %v2008
    %v2091 = vpop.f32.mrb[0].mxu0
    %v2092 = vadd.f32 0.0, %v2091
    %v2093 = vpop.f32.mrb[0].mxu0
    %2094 = vdwg.mxu0
    %v2096 = vsel %vm1248, %v985, 0
    %v2099 = vsel %vm1248, %v988, 0
    %v2102 = vsel %vm1248, %v993, 0
    %v2105 = vsel %vm1248, %v996, 0
    %2107 = vmatprep.subr.mxu0 0.0
    %2108 = vmatpush1.msra.mxu0 %v1239
    %2109 = vmatprep.subr.mxu0 0.0
    %2110 = vmatpush1.msra.mxu0 %v1240
    %2111 = vmatprep.subr.mxu0 0.0
    %2112 = vmatpush1.msra.mxu0 %v1241
    %2113 = vmatprep.subr.mxu0 0.0
    %2114 = vmatpush1.msra.mxu0 %v1242
    %2115 = vmatprep.subr.mxu0 0.0
    %2116 = vmatpush1.msra.mxu0 0.0
    %2117 = vmatprep.subr.mxu0 0.0
    %2118 = vmatpush1.msra.mxu0 0.0
    %2119 = vmatprep.subr.mxu0 0.0
    %2120 = vmatpush1.msra.mxu0 0.0
    %2121 = vmatprep.subr.mxu0 0.0
    %2122 = vmatpush1.msra.mxu0 0.0
    %2123 = vmatprep.subr.mxu0 0.0
    %2124 = vmatpush1.msra.mxu0 0.0
    %2125 = vmatprep.subr.mxu0 0.0
    %2126 = vmatpush1.msra.mxu0 0.0
    %2127 = vmatprep.subr.mxu0 0.0
    %2128 = vmatpush1.msra.mxu0 0.0
    %2129 = vmatprep.subr.mxu0 0.0
    %2130 = vmatpush1.msra.mxu0 0.0
    %2131 = vmatprep.subr.mxu0 0.0
    %2132 = vmatpush1.msra.mxu0 0.0
    %2133 = vmatprep.subr.mxu0 0.0
    %2134 = vmatpush1.msra.mxu0 0.0
    %2135 = vmatprep.subr.mxu0 0.0
    %2136 = vmatpush1.msra.mxu0 0.0
    %2137 = vmatprep.subr.mxu0 0.0
    %2138 = vmatpush1.msra.mxu0 0.0
    %2139 = vmatprep.subr.mxu0 0.0
    %2140 = vmatpush1.msra.mxu0 0.0
    %2141 = vmatprep.subr.mxu0 0.0
    %2142 = vmatpush1.msra.mxu0 0.0
    %2143 = vmatprep.subr.mxu0 0.0
    %2144 = vmatpush1.msra.mxu0 0.0
    %2145 = vmatprep.subr.mxu0 0.0
    %2146 = vmatpush1.msra.mxu0 0.0
    %2147 = vmatprep.subr.mxu0 0.0
    %2148 = vmatpush1.msra.mxu0 0.0
    %2149 = vmatprep.subr.mxu0 0.0
    %2150 = vmatpush1.msra.mxu0 0.0
    %2151 = vmatprep.subr.mxu0 0.0
    %2152 = vmatpush1.msra.mxu0 0.0
    %2153 = vmatprep.subr.mxu0 0.0
    %2154 = vmatpush1.msra.mxu0 0.0
    %2155 = vmatprep.subr.mxu0 0.0
    %2156 = vmatpush1.msra.mxu0 0.0
    %2157 = vmatprep.subr.mxu0 0.0
    %2158 = vmatpush1.msra.mxu0 0.0
    %2159 = vmatprep.subr.mxu0 0.0
    %2160 = vmatpush1.msra.mxu0 0.0
    %2161 = vmatprep.subr.mxu0 0.0
    %2162 = vmatpush1.msra.mxu0 0.0
    %2163 = vmatprep.subr.mxu0 0.0
    %2164 = vmatpush1.msra.mxu0 0.0
    %2165 = vmatprep.subr.mxu0 0.0
    %2166 = vmatpush1.msra.mxu0 0.0
    %2167 = vmatprep.subr.mxu0 0.0
    %2168 = vmatpush1.msra.mxu0 0.0
    %2169 = vmatprep.subr.mxu0 0.0
    %2170 = vmatpush1.msra.mxu0 0.0
    %2171 = vmatprep.mubr.f32.mxu0 0.0
    %2172 = vmatmul.mubr.f32.gmra.mrb[0].mxu0 %v2096
    %v2173 = vpop.f32.mrb[0].mxu0
    %v2174 = vadd.f32 %v1328, %v2173
    %v2175 = vpop.f32.mrb[0].mxu0
    %2176 = vmatprep.mubr.f32.mxu0 0.0
    %2177 = vmatmul.mubr.f32.gmra.mrb[0].mxu0 %v2099
    %v2178 = vpop.f32.mrb[0].mxu0
    %v2179 = vadd.f32 %v1333, %v2178
    %v2180 = vpop.f32.mrb[0].mxu0
    %2181 = vmatprep.mubr.f32.mxu0 0.0
    %2182 = vmatmul.mubr.f32.gmra.mrb[0].mxu0 %v2102
    %v2183 = vpop.f32.mrb[0].mxu0
    %v2184 = vadd.f32 %v1338, %v2183
    %v2185 = vpop.f32.mrb[0].mxu0
    %2186 = vmatprep.mubr.f32.mxu0 0.0
    %2187 = vmatmul.mubr.f32.gmra.mrb[0].mxu0 %v2105
    %v2188 = vpop.f32.mrb[0].mxu0
    %v2189 = vadd.f32 %v1343, %v2188
    %v2190 = vpop.f32.mrb[0].mxu0
    %2191 = vdwg.mxu0
    %v2193 = vsel %vm1248, %v1017, 0
    %v2196 = vsel %vm1248, %v1020, 0
    %v2199 = vsel %vm1248, %v1025, 0
    %v2202 = vsel %vm1248, %v1028, 0
    %2204 = vmatprep.subr.mxu0 0.0
    %2205 = vmatpush1.msra.mxu0 %v1347
    %2206 = vmatprep.subr.mxu0 0.0
    %2207 = vmatpush1.msra.mxu0 %v1348
    %2208 = vmatprep.subr.mxu0 0.0
    %2209 = vmatpush1.msra.mxu0 %v1349
    %2210 = vmatprep.subr.mxu0 0.0
    %2211 = vmatpush1.msra.mxu0 %v1350
    %2212 = vmatprep.subr.mxu0 0.0
    %2213 = vmatpush1.msra.mxu0 0.0
    %2214 = vmatprep.subr.mxu0 0.0
    %2215 = vmatpush1.msra.mxu0 0.0
    %2216 = vmatprep.subr.mxu0 0.0
    %2217 = vmatpush1.msra.mxu0 0.0
    %2218 = vmatprep.subr.mxu0 0.0
    %2219 = vmatpush1.msra.mxu0 0.0
    %2220 = vmatprep.subr.mxu0 0.0
    %2221 = vmatpush1.msra.mxu0 0.0
    %2222 = vmatprep.subr.mxu0 0.0
    %2223 = vmatpush1.msra.mxu0 0.0
    %2224 = vmatprep.subr.mxu0 0.0
    %2225 = vmatpush1.msra.mxu0 0.0
    %2226 = vmatprep.subr.mxu0 0.0
    %2227 = vmatpush1.msra.mxu0 0.0
    %2228 = vmatprep.subr.mxu0 0.0
    %2229 = vmatpush1.msra.mxu0 0.0
    %2230 = vmatprep.subr.mxu0 0.0
    %2231 = vmatpush1.msra.mxu0 0.0
    %2232 = vmatprep.subr.mxu0 0.0
    %2233 = vmatpush1.msra.mxu0 0.0
    %2234 = vmatprep.subr.mxu0 0.0
    %2235 = vmatpush1.msra.mxu0 0.0
    %2236 = vmatprep.subr.mxu0 0.0
    %2237 = vmatpush1.msra.mxu0 0.0
    %2238 = vmatprep.subr.mxu0 0.0
    %2239 = vmatpush1.msra.mxu0 0.0
    %2240 = vmatprep.subr.mxu0 0.0
    %2241 = vmatpush1.msra.mxu0 0.0
    %2242 = vmatprep.subr.mxu0 0.0
    %2243 = vmatpush1.msra.mxu0 0.0
    %2244 = vmatprep.subr.mxu0 0.0
    %2245 = vmatpush1.msra.mxu0 0.0
    %2246 = vmatprep.subr.mxu0 0.0
    %2247 = vmatpush1.msra.mxu0 0.0
    %2248 = vmatprep.subr.mxu0 0.0
    %2249 = vmatpush1.msra.mxu0 0.0
    %2250 = vmatprep.subr.mxu0 0.0
    %2251 = vmatpush1.msra.mxu0 0.0
    %2252 = vmatprep.subr.mxu0 0.0
    %2253 = vmatpush1.msra.mxu0 0.0
    %2254 = vmatprep.subr.mxu0 0.0
    %2255 = vmatpush1.msra.mxu0 0.0
    %2256 = vmatprep.subr.mxu0 0.0
    %2257 = vmatpush1.msra.mxu0 0.0
    %2258 = vmatprep.subr.mxu0 0.0
    %2259 = vmatpush1.msra.mxu0 0.0
    %2260 = vmatprep.subr.mxu0 0.0
    %2261 = vmatpush1.msra.mxu0 0.0
    %2262 = vmatprep.subr.mxu0 0.0
    %2263 = vmatpush1.msra.mxu0 0.0
    %2264 = vmatprep.subr.mxu0 0.0
    %2265 = vmatpush1.msra.mxu0 0.0
    %2266 = vmatprep.subr.mxu0 0.0
    %2267 = vmatpush1.msra.mxu0 0.0
    %2268 = vmatprep.mubr.f32.mxu0 0.0
    %2269 = vmatmul.mubr.f32.gmra.mrb[0].mxu0 %v2193
    %v2270 = vpop.f32.mrb[0].mxu0
    %v2271 = vadd.f32 %v1435, %v2270
    %v2272 = vpop.f32.mrb[0].mxu0
    %2273 = vmatprep.mubr.f32.mxu0 0.0
    %2274 = vmatmul.mubr.f32.gmra.mrb[0].mxu0 %v2196
    %v2275 = vpop.f32.mrb[0].mxu0
    %v2276 = vadd.f32 %v1440, %v2275
    %v2277 = vpop.f32.mrb[0].mxu0
    %2278 = vmatprep.mubr.f32.mxu0 0.0
    %2279 = vmatmul.mubr.f32.gmra.mrb[0].mxu0 %v2199
    %v2280 = vpop.f32.mrb[0].mxu0
    %v2281 = vadd.f32 %v1445, %v2280
    %v2282 = vpop.f32.mrb[0].mxu0
    %2283 = vmatprep.mubr.f32.mxu0 0.0
    %2284 = vmatmul.mubr.f32.gmra.mrb[0].mxu0 %v2202
    %v2285 = vpop.f32.mrb[0].mxu0
    %v2286 = vadd.f32 %v1450, %v2285
    %v2287 = vpop.f32.mrb[0].mxu0
    %2288 = vdwg.mxu0
    %v2290 = vsel %vm1248, %v1049, 0
    %v2293 = vsel %vm1248, %v1052, 0
    %v2296 = vsel %vm1248, %v1057, 0
    %v2299 = vsel %vm1248, %v1060, 0
    %2301 = vmatprep.subr.mxu0 0.0
    %2302 = vmatpush1.msra.mxu0 %v1454
    %2303 = vmatprep.subr.mxu0 0.0
    %2304 = vmatpush1.msra.mxu0 %v1455
    %2305 = vmatprep.subr.mxu0 0.0
    %2306 = vmatpush1.msra.mxu0 %v1456
    %2307 = vmatprep.subr.mxu0 0.0
    %2308 = vmatpush1.msra.mxu0 %v1457
    %2309 = vmatprep.subr.mxu0 0.0
    %2310 = vmatpush1.msra.mxu0 0.0
    %2311 = vmatprep.subr.mxu0 0.0
    %2312 = vmatpush1.msra.mxu0 0.0
    %2313 = vmatprep.subr.mxu0 0.0
    %2314 = vmatpush1.msra.mxu0 0.0
    %2315 = vmatprep.subr.mxu0 0.0
    %2316 = vmatpush1.msra.mxu0 0.0
    %2317 = vmatprep.subr.mxu0 0.0
    %2318 = vmatpush1.msra.mxu0 0.0
    %2319 = vmatprep.subr.mxu0 0.0
    %2320 = vmatpush1.msra.mxu0 0.0
    %2321 = vmatprep.subr.mxu0 0.0
    %2322 = vmatpush1.msra.mxu0 0.0
    %2323 = vmatprep.subr.mxu0 0.0
    %2324 = vmatpush1.msra.mxu0 0.0
    %2325 = vmatprep.subr.mxu0 0.0
    %2326 = vmatpush1.msra.mxu0 0.0
    %2327 = vmatprep.subr.mxu0 0.0
    %2328 = vmatpush1.msra.mxu0 0.0
    %2329 = vmatprep.subr.mxu0 0.0
    %2330 = vmatpush1.msra.mxu0 0.0
    %2331 = vmatprep.subr.mxu0 0.0
    %2332 = vmatpush1.msra.mxu0 0.0
    %2333 = vmatprep.subr.mxu0 0.0
    %2334 = vmatpush1.msra.mxu0 0.0
    %2335 = vmatprep.subr.mxu0 0.0
    %2336 = vmatpush1.msra.mxu0 0.0
    %2337 = vmatprep.subr.mxu0 0.0
    %2338 = vmatpush1.msra.mxu0 0.0
    %2339 = vmatprep.subr.mxu0 0.0
    %2340 = vmatpush1.msra.mxu0 0.0
    %2341 = vmatprep.subr.mxu0 0.0
    %2342 = vmatpush1.msra.mxu0 0.0
    %2343 = vmatprep.subr.mxu0 0.0
    %2344 = vmatpush1.msra.mxu0 0.0
    %2345 = vmatprep.subr.mxu0 0.0
    %2346 = vmatpush1.msra.mxu0 0.0
    %2347 = vmatprep.subr.mxu0 0.0
    %2348 = vmatpush1.msra.mxu0 0.0
    %2349 = vmatprep.subr.mxu0 0.0
    %2350 = vmatpush1.msra.mxu0 0.0
    %2351 = vmatprep.subr.mxu0 0.0
    %2352 = vmatpush1.msra.mxu0 0.0
    %2353 = vmatprep.subr.mxu0 0.0
    %2354 = vmatpush1.msra.mxu0 0.0
    %2355 = vmatprep.subr.mxu0 0.0
    %2356 = vmatpush1.msra.mxu0 0.0
    %2357 = vmatprep.subr.mxu0 0.0
    %2358 = vmatpush1.msra.mxu0 0.0
    %2359 = vmatprep.subr.mxu0 0.0
    %2360 = vmatpush1.msra.mxu0 0.0
    %2361 = vmatprep.subr.mxu0 0.0
    %2362 = vmatpush1.msra.mxu0 0.0
    %2363 = vmatprep.subr.mxu0 0.0
    %2364 = vmatpush1.msra.mxu0 0.0
    %2365 = vmatprep.mubr.f32.mxu0 0.0
    %2366 = vmatmul.mubr.f32.gmra.mrb[0].mxu0 %v2290
    %v2367 = vpop.f32.mrb[0].mxu0
    %v2368 = vadd.f32 %v1542, %v2367
    %v2369 = vpop.f32.mrb[0].mxu0
    %2370 = vmatprep.mubr.f32.mxu0 0.0
    %2371 = vmatmul.mubr.f32.gmra.mrb[0].mxu0 %v2293
    %v2372 = vpop.f32.mrb[0].mxu0
    %v2373 = vadd.f32 %v1547, %v2372
    %v2374 = vpop.f32.mrb[0].mxu0
    %2375 = vmatprep.mubr.f32.mxu0 0.0
    %2376 = vmatmul.mubr.f32.gmra.mrb[0].mxu0 %v2296
    %v2377 = vpop.f32.mrb[0].mxu0
    %v2378 = vadd.f32 %v1552, %v2377
    %v2379 = vpop.f32.mrb[0].mxu0
    %2380 = vmatprep.mubr.f32.mxu0 0.0
    %2381 = vmatmul.mubr.f32.gmra.mrb[0].mxu0 %v2299
    %v2382 = vpop.f32.mrb[0].mxu0
    %v2383 = vadd.f32 %v1557, %v2382
    %v2384 = vpop.f32.mrb[0].mxu0
    %2385 = vdwg.mxu0
    %v2387 = vsel %vm1248, %v1081, 0
    %v2390 = vsel %vm1248, %v1084, 0
    %v2393 = vsel %vm1248, %v1089, 0
    %v2396 = vsel %vm1248, %v1092, 0
    %2398 = vmatprep.subr.mxu0 0.0
    %2399 = vmatpush1.msra.mxu0 %v1561
    %2400 = vmatprep.subr.mxu0 0.0
    %2401 = vmatpush1.msra.mxu0 %v1562
    %2402 = vmatprep.subr.mxu0 0.0
    %2403 = vmatpush1.msra.mxu0 %v1563
    %2404 = vmatprep.subr.mxu0 0.0
    %2405 = vmatpush1.msra.mxu0 %v1564
    %2406 = vmatprep.subr.mxu0 0.0
    %2407 = vmatpush1.msra.mxu0 0.0
    %2408 = vmatprep.subr.mxu0 0.0
    %2409 = vmatpush1.msra.mxu0 0.0
    %2410 = vmatprep.subr.mxu0 0.0
    %2411 = vmatpush1.msra.mxu0 0.0
    %2412 = vmatprep.subr.mxu0 0.0
    %2413 = vmatpush1.msra.mxu0 0.0
    %2414 = vmatprep.subr.mxu0 0.0
    %2415 = vmatpush1.msra.mxu0 0.0
    %2416 = vmatprep.subr.mxu0 0.0
    %2417 = vmatpush1.msra.mxu0 0.0
    %2418 = vmatprep.subr.mxu0 0.0
    %2419 = vmatpush1.msra.mxu0 0.0
    %2420 = vmatprep.subr.mxu0 0.0
    %2421 = vmatpush1.msra.mxu0 0.0
    %2422 = vmatprep.subr.mxu0 0.0
    %2423 = vmatpush1.msra.mxu0 0.0
    %2424 = vmatprep.subr.mxu0 0.0
    %2425 = vmatpush1.msra.mxu0 0.0
    %2426 = vmatprep.subr.mxu0 0.0
    %2427 = vmatpush1.msra.mxu0 0.0
    %2428 = vmatprep.subr.mxu0 0.0
    %2429 = vmatpush1.msra.mxu0 0.0
    %2430 = vmatprep.subr.mxu0 0.0
    %2431 = vmatpush1.msra.mxu0 0.0
    %2432 = vmatprep.subr.mxu0 0.0
    %2433 = vmatpush1.msra.mxu0 0.0
    %2434 = vmatprep.subr.mxu0 0.0
    %2435 = vmatpush1.msra.mxu0 0.0
    %2436 = vmatprep.subr.mxu0 0.0
    %2437 = vmatpush1.msra.mxu0 0.0
    %2438 = vmatprep.subr.mxu0 0.0
    %2439 = vmatpush1.msra.mxu0 0.0
    %2440 = vmatprep.subr.mxu0 0.0
    %2441 = vmatpush1.msra.mxu0 0.0
    %2442 = vmatprep.subr.mxu0 0.0
    %2443 = vmatpush1.msra.mxu0 0.0
    %2444 = vmatprep.subr.mxu0 0.0
    %2445 = vmatpush1.msra.mxu0 0.0
    %2446 = vmatprep.subr.mxu0 0.0
    %2447 = vmatpush1.msra.mxu0 0.0
    %2448 = vmatprep.subr.mxu0 0.0
    %2449 = vmatpush1.msra.mxu0 0.0
    %2450 = vmatprep.subr.mxu0 0.0
    %2451 = vmatpush1.msra.mxu0 0.0
    %2452 = vmatprep.subr.mxu0 0.0
    %2453 = vmatpush1.msra.mxu0 0.0
    %2454 = vmatprep.subr.mxu0 0.0
    %2455 = vmatpush1.msra.mxu0 0.0
    %2456 = vmatprep.subr.mxu0 0.0
    %2457 = vmatpush1.msra.mxu0 0.0
    %2458 = vmatprep.subr.mxu0 0.0
    %2459 = vmatpush1.msra.mxu0 0.0
    %2460 = vmatprep.subr.mxu0 0.0
    %2461 = vmatpush1.msra.mxu0 0.0
    %2462 = vmatprep.mubr.f32.mxu0 0.0
    %2463 = vmatmul.mubr.f32.gmra.mrb[0].mxu0 %v2387
    %v2464 = vpop.f32.mrb[0].mxu0
    %v2465 = vadd.f32 %v1649, %v2464
    %v2466 = vpop.f32.mrb[0].mxu0
    %2467 = vmatprep.mubr.f32.mxu0 0.0
    %2468 = vmatmul.mubr.f32.gmra.mrb[0].mxu0 %v2390
    %v2469 = vpop.f32.mrb[0].mxu0
    %v2470 = vadd.f32 %v1654, %v2469
    %v2471 = vpop.f32.mrb[0].mxu0
    %2472 = vmatprep.mubr.f32.mxu0 0.0
    %2473 = vmatmul.mubr.f32.gmra.mrb[0].mxu0 %v2393
    %v2474 = vpop.f32.mrb[0].mxu0
    %v2475 = vadd.f32 %v1659, %v2474
    %v2476 = vpop.f32.mrb[0].mxu0
    %2477 = vmatprep.mubr.f32.mxu0 0.0
    %2478 = vmatmul.mubr.f32.gmra.mrb[0].mxu0 %v2396
    %v2479 = vpop.f32.mrb[0].mxu0
    %v2480 = vadd.f32 %v1664, %v2479
    %v2481 = vpop.f32.mrb[0].mxu0
    %2482 = vdwg.mxu0
    %v2484 = vsel %vm1248, %v1113, 0
    %v2487 = vsel %vm1248, %v1116, 0
    %v2490 = vsel %vm1248, %v1121, 0
    %v2493 = vsel %vm1248, %v1124, 0
    %2495 = vmatprep.subr.mxu0 0.0
    %2496 = vmatpush1.msra.mxu0 %v1668
    %2497 = vmatprep.subr.mxu0 0.0
    %2498 = vmatpush1.msra.mxu0 %v1669
    %2499 = vmatprep.subr.mxu0 0.0
    %2500 = vmatpush1.msra.mxu0 %v1670
    %2501 = vmatprep.subr.mxu0 0.0
    %2502 = vmatpush1.msra.mxu0 %v1671
    %2503 = vmatprep.subr.mxu0 0.0
    %2504 = vmatpush1.msra.mxu0 0.0
    %2505 = vmatprep.subr.mxu0 0.0
    %2506 = vmatpush1.msra.mxu0 0.0
    %2507 = vmatprep.subr.mxu0 0.0
    %2508 = vmatpush1.msra.mxu0 0.0
    %2509 = vmatprep.subr.mxu0 0.0
    %2510 = vmatpush1.msra.mxu0 0.0
    %2511 = vmatprep.subr.mxu0 0.0
    %2512 = vmatpush1.msra.mxu0 0.0
    %2513 = vmatprep.subr.mxu0 0.0
    %2514 = vmatpush1.msra.mxu0 0.0
    %2515 = vmatprep.subr.mxu0 0.0
    %2516 = vmatpush1.msra.mxu0 0.0
    %2517 = vmatprep.subr.mxu0 0.0
    %2518 = vmatpush1.msra.mxu0 0.0
    %2519 = vmatprep.subr.mxu0 0.0
    %2520 = vmatpush1.msra.mxu0 0.0
    %2521 = vmatprep.subr.mxu0 0.0
    %2522 = vmatpush1.msra.mxu0 0.0
    %2523 = vmatprep.subr.mxu0 0.0
    %2524 = vmatpush1.msra.mxu0 0.0
    %2525 = vmatprep.subr.mxu0 0.0
    %2526 = vmatpush1.msra.mxu0 0.0
    %2527 = vmatprep.subr.mxu0 0.0
    %2528 = vmatpush1.msra.mxu0 0.0
    %2529 = vmatprep.subr.mxu0 0.0
    %2530 = vmatpush1.msra.mxu0 0.0
    %2531 = vmatprep.subr.mxu0 0.0
    %2532 = vmatpush1.msra.mxu0 0.0
    %2533 = vmatprep.subr.mxu0 0.0
    %2534 = vmatpush1.msra.mxu0 0.0
    %2535 = vmatprep.subr.mxu0 0.0
    %2536 = vmatpush1.msra.mxu0 0.0
    %2537 = vmatprep.subr.mxu0 0.0
    %2538 = vmatpush1.msra.mxu0 0.0
    %2539 = vmatprep.subr.mxu0 0.0
    %2540 = vmatpush1.msra.mxu0 0.0
    %2541 = vmatprep.subr.mxu0 0.0
    %2542 = vmatpush1.msra.mxu0 0.0
    %2543 = vmatprep.subr.mxu0 0.0
    %2544 = vmatpush1.msra.mxu0 0.0
    %2545 = vmatprep.subr.mxu0 0.0
    %2546 = vmatpush1.msra.mxu0 0.0
    %2547 = vmatprep.subr.mxu0 0.0
    %2548 = vmatpush1.msra.mxu0 0.0
    %2549 = vmatprep.subr.mxu0 0.0
    %2550 = vmatpush1.msra.mxu0 0.0
    %2551 = vmatprep.subr.mxu0 0.0
    %2552 = vmatpush1.msra.mxu0 0.0
    %2553 = vmatprep.subr.mxu0 0.0
    %2554 = vmatpush1.msra.mxu0 0.0
    %2555 = vmatprep.subr.mxu0 0.0
    %2556 = vmatpush1.msra.mxu0 0.0
    %2557 = vmatprep.subr.mxu0 0.0
    %2558 = vmatpush1.msra.mxu0 0.0
    %2559 = vmatprep.mubr.f32.mxu0 0.0
    %2560 = vmatmul.mubr.f32.gmra.mrb[0].mxu0 %v2484
    %v2561 = vpop.f32.mrb[0].mxu0
    %v2562 = vadd.f32 %v1756, %v2561
    %v2563 = vpop.f32.mrb[0].mxu0
    %2564 = vmatprep.mubr.f32.mxu0 0.0
    %2565 = vmatmul.mubr.f32.gmra.mrb[0].mxu0 %v2487
    %v2566 = vpop.f32.mrb[0].mxu0
    %v2567 = vadd.f32 %v1761, %v2566
    %v2568 = vpop.f32.mrb[0].mxu0
    %2569 = vmatprep.mubr.f32.mxu0 0.0
    %2570 = vmatmul.mubr.f32.gmra.mrb[0].mxu0 %v2490
    %v2571 = vpop.f32.mrb[0].mxu0
    %v2572 = vadd.f32 %v1766, %v2571
    %v2573 = vpop.f32.mrb[0].mxu0
    %2574 = vmatprep.mubr.f32.mxu0 0.0
    %2575 = vmatmul.mubr.f32.gmra.mrb[0].mxu0 %v2493
    %v2576 = vpop.f32.mrb[0].mxu0
    %v2577 = vadd.f32 %v1771, %v2576
    %v2578 = vpop.f32.mrb[0].mxu0
    %2579 = vdwg.mxu0
    %v2581 = vsel %vm1248, %v1145, 0
    %v2584 = vsel %vm1248, %v1148, 0
    %v2587 = vsel %vm1248, %v1153, 0
    %v2590 = vsel %vm1248, %v1156, 0
    %2592 = vmatprep.subr.mxu0 0.0
    %2593 = vmatpush1.msra.mxu0 %v1775
    %2594 = vmatprep.subr.mxu0 0.0
    %2595 = vmatpush1.msra.mxu0 %v1776
    %2596 = vmatprep.subr.mxu0 0.0
    %2597 = vmatpush1.msra.mxu0 %v1777
    %2598 = vmatprep.subr.mxu0 0.0
    %2599 = vmatpush1.msra.mxu0 %v1778
    %2600 = vmatprep.subr.mxu0 0.0
    %2601 = vmatpush1.msra.mxu0 0.0
    %2602 = vmatprep.subr.mxu0 0.0
    %2603 = vmatpush1.msra.mxu0 0.0
    %2604 = vmatprep.subr.mxu0 0.0
    %2605 = vmatpush1.msra.mxu0 0.0
    %2606 = vmatprep.subr.mxu0 0.0
    %2607 = vmatpush1.msra.mxu0 0.0
    %2608 = vmatprep.subr.mxu0 0.0
    %2609 = vmatpush1.msra.mxu0 0.0
    %2610 = vmatprep.subr.mxu0 0.0
    %2611 = vmatpush1.msra.mxu0 0.0
    %2612 = vmatprep.subr.mxu0 0.0
    %2613 = vmatpush1.msra.mxu0 0.0
    %2614 = vmatprep.subr.mxu0 0.0
    %2615 = vmatpush1.msra.mxu0 0.0
    %2616 = vmatprep.subr.mxu0 0.0
    %2617 = vmatpush1.msra.mxu0 0.0
    %2618 = vmatprep.subr.mxu0 0.0
    %2619 = vmatpush1.msra.mxu0 0.0
    %2620 = vmatprep.subr.mxu0 0.0
    %2621 = vmatpush1.msra.mxu0 0.0
    %2622 = vmatprep.subr.mxu0 0.0
    %2623 = vmatpush1.msra.mxu0 0.0
    %2624 = vmatprep.subr.mxu0 0.0
    %2625 = vmatpush1.msra.mxu0 0.0
    %2626 = vmatprep.subr.mxu0 0.0
    %2627 = vmatpush1.msra.mxu0 0.0
    %2628 = vmatprep.subr.mxu0 0.0
    %2629 = vmatpush1.msra.mxu0 0.0
    %2630 = vmatprep.subr.mxu0 0.0
    %2631 = vmatpush1.msra.mxu0 0.0
    %2632 = vmatprep.subr.mxu0 0.0
    %2633 = vmatpush1.msra.mxu0 0.0
    %2634 = vmatprep.subr.mxu0 0.0
    %2635 = vmatpush1.msra.mxu0 0.0
    %2636 = vmatprep.subr.mxu0 0.0
    %2637 = vmatpush1.msra.mxu0 0.0
    %2638 = vmatprep.subr.mxu0 0.0
    %2639 = vmatpush1.msra.mxu0 0.0
    %2640 = vmatprep.subr.mxu0 0.0
    %2641 = vmatpush1.msra.mxu0 0.0
    %2642 = vmatprep.subr.mxu0 0.0
    %2643 = vmatpush1.msra.mxu0 0.0
    %2644 = vmatprep.subr.mxu0 0.0
    %2645 = vmatpush1.msra.mxu0 0.0
    %2646 = vmatprep.subr.mxu0 0.0
    %2647 = vmatpush1.msra.mxu0 0.0
    %2648 = vmatprep.subr.mxu0 0.0
    %2649 = vmatpush1.msra.mxu0 0.0
    %2650 = vmatprep.subr.mxu0 0.0
    %2651 = vmatpush1.msra.mxu0 0.0
    %2652 = vmatprep.subr.mxu0 0.0
    %2653 = vmatpush1.msra.mxu0 0.0
    %2654 = vmatprep.subr.mxu0 0.0
    %2655 = vmatpush1.msra.mxu0 0.0
    %2656 = vmatprep.mubr.f32.mxu0 0.0
    %2657 = vmatmul.mubr.f32.gmra.mrb[0].mxu0 %v2581
    %v2658 = vpop.f32.mrb[0].mxu0
    %v2659 = vadd.f32 %v1863, %v2658
    %v2660 = vpop.f32.mrb[0].mxu0
    %2661 = vmatprep.mubr.f32.mxu0 0.0
    %2662 = vmatmul.mubr.f32.gmra.mrb[0].mxu0 %v2584
    %v2663 = vpop.f32.mrb[0].mxu0
    %v2664 = vadd.f32 %v1868, %v2663
    %v2665 = vpop.f32.mrb[0].mxu0
    %2666 = vmatprep.mubr.f32.mxu0 0.0
    %2667 = vmatmul.mubr.f32.gmra.mrb[0].mxu0 %v2587
    %v2668 = vpop.f32.mrb[0].mxu0
    %v2669 = vadd.f32 %v1873, %v2668
    %v2670 = vpop.f32.mrb[0].mxu0
    %2671 = vmatprep.mubr.f32.mxu0 0.0
    %2672 = vmatmul.mubr.f32.gmra.mrb[0].mxu0 %v2590
    %v2673 = vpop.f32.mrb[0].mxu0
    %v2674 = vadd.f32 %v1878, %v2673
    %v2675 = vpop.f32.mrb[0].mxu0
    %2676 = vdwg.mxu0
    %v2678 = vsel %vm1248, %v1177, 0
    %v2681 = vsel %vm1248, %v1180, 0
    %v2684 = vsel %vm1248, %v1185, 0
    %v2687 = vsel %vm1248, %v1188, 0
    %2689 = vmatprep.subr.mxu0 0.0
    %2690 = vmatpush1.msra.mxu0 %v1882
    %2691 = vmatprep.subr.mxu0 0.0
    %2692 = vmatpush1.msra.mxu0 %v1883
    %2693 = vmatprep.subr.mxu0 0.0
    %2694 = vmatpush1.msra.mxu0 %v1884
    %2695 = vmatprep.subr.mxu0 0.0
    %2696 = vmatpush1.msra.mxu0 %v1885
    %2697 = vmatprep.subr.mxu0 0.0
    %2698 = vmatpush1.msra.mxu0 0.0
    %2699 = vmatprep.subr.mxu0 0.0
    %2700 = vmatpush1.msra.mxu0 0.0
    %2701 = vmatprep.subr.mxu0 0.0
    %2702 = vmatpush1.msra.mxu0 0.0
    %2703 = vmatprep.subr.mxu0 0.0
    %2704 = vmatpush1.msra.mxu0 0.0
    %2705 = vmatprep.subr.mxu0 0.0
    %2706 = vmatpush1.msra.mxu0 0.0
    %2707 = vmatprep.subr.mxu0 0.0
    %2708 = vmatpush1.msra.mxu0 0.0
    %2709 = vmatprep.subr.mxu0 0.0
    %2710 = vmatpush1.msra.mxu0 0.0
    %2711 = vmatprep.subr.mxu0 0.0
    %2712 = vmatpush1.msra.mxu0 0.0
    %2713 = vmatprep.subr.mxu0 0.0
    %2714 = vmatpush1.msra.mxu0 0.0
    %2715 = vmatprep.subr.mxu0 0.0
    %2716 = vmatpush1.msra.mxu0 0.0
    %2717 = vmatprep.subr.mxu0 0.0
    %2718 = vmatpush1.msra.mxu0 0.0
    %2719 = vmatprep.subr.mxu0 0.0
    %2720 = vmatpush1.msra.mxu0 0.0
    %2721 = vmatprep.subr.mxu0 0.0
    %2722 = vmatpush1.msra.mxu0 0.0
    %2723 = vmatprep.subr.mxu0 0.0
    %2724 = vmatpush1.msra.mxu0 0.0
    %2725 = vmatprep.subr.mxu0 0.0
    %2726 = vmatpush1.msra.mxu0 0.0
    %2727 = vmatprep.subr.mxu0 0.0
    %2728 = vmatpush1.msra.mxu0 0.0
    %2729 = vmatprep.subr.mxu0 0.0
    %2730 = vmatpush1.msra.mxu0 0.0
    %2731 = vmatprep.subr.mxu0 0.0
    %2732 = vmatpush1.msra.mxu0 0.0
    %2733 = vmatprep.subr.mxu0 0.0
    %2734 = vmatpush1.msra.mxu0 0.0
    %2735 = vmatprep.subr.mxu0 0.0
    %2736 = vmatpush1.msra.mxu0 0.0
    %2737 = vmatprep.subr.mxu0 0.0
    %2738 = vmatpush1.msra.mxu0 0.0
    %2739 = vmatprep.subr.mxu0 0.0
    %2740 = vmatpush1.msra.mxu0 0.0
    %2741 = vmatprep.subr.mxu0 0.0
    %2742 = vmatpush1.msra.mxu0 0.0
    %2743 = vmatprep.subr.mxu0 0.0
    %2744 = vmatpush1.msra.mxu0 0.0
    %2745 = vmatprep.subr.mxu0 0.0
    %2746 = vmatpush1.msra.mxu0 0.0
    %2747 = vmatprep.subr.mxu0 0.0
    %2748 = vmatpush1.msra.mxu0 0.0
    %2749 = vmatprep.subr.mxu0 0.0
    %2750 = vmatpush1.msra.mxu0 0.0
    %2751 = vmatprep.subr.mxu0 0.0
    %2752 = vmatpush1.msra.mxu0 0.0
    %2753 = vmatprep.mubr.f32.mxu0 0.0
    %2754 = vmatmul.mubr.f32.gmra.mrb[0].mxu0 %v2678
    %v2755 = vpop.f32.mrb[0].mxu0
    %v2756 = vadd.f32 %v1970, %v2755
    %v2757 = vpop.f32.mrb[0].mxu0
    %2758 = vmatprep.mubr.f32.mxu0 0.0
    %2759 = vmatmul.mubr.f32.gmra.mrb[0].mxu0 %v2681
    %v2760 = vpop.f32.mrb[0].mxu0
    %v2761 = vadd.f32 %v1975, %v2760
    %v2762 = vpop.f32.mrb[0].mxu0
    %2763 = vmatprep.mubr.f32.mxu0 0.0
    %2764 = vmatmul.mubr.f32.gmra.mrb[0].mxu0 %v2684
    %v2765 = vpop.f32.mrb[0].mxu0
    %v2766 = vadd.f32 %v1980, %v2765
    %v2767 = vpop.f32.mrb[0].mxu0
    %2768 = vmatprep.mubr.f32.mxu0 0.0
    %2769 = vmatmul.mubr.f32.gmra.mrb[0].mxu0 %v2687
    %v2770 = vpop.f32.mrb[0].mxu0
    %v2771 = vadd.f32 %v1985, %v2770
    %v2772 = vpop.f32.mrb[0].mxu0
    %2773 = vdwg.mxu0
    %v2775 = vsel %vm1248, %v1209, 0
    %v2778 = vsel %vm1248, %v1212, 0
    %v2781 = vsel %vm1248, %v1217, 0
    %v2784 = vsel %vm1248, %v1220, 0
    %2786 = vmatprep.subr.mxu0 0.0
    %2787 = vmatpush1.msra.mxu0 %v1989
    %2788 = vmatprep.subr.mxu0 0.0
    %2789 = vmatpush1.msra.mxu0 %v1990
    %2790 = vmatprep.subr.mxu0 0.0
    %2791 = vmatpush1.msra.mxu0 %v1991
    %2792 = vmatprep.subr.mxu0 0.0
    %2793 = vmatpush1.msra.mxu0 %v1992
    %2794 = vmatprep.subr.mxu0 0.0
    %2795 = vmatpush1.msra.mxu0 0.0
    %2796 = vmatprep.subr.mxu0 0.0
    %2797 = vmatpush1.msra.mxu0 0.0
    %2798 = vmatprep.subr.mxu0 0.0
    %2799 = vmatpush1.msra.mxu0 0.0
    %2800 = vmatprep.subr.mxu0 0.0
    %2801 = vmatpush1.msra.mxu0 0.0
    %2802 = vmatprep.subr.mxu0 0.0
    %2803 = vmatpush1.msra.mxu0 0.0
    %2804 = vmatprep.subr.mxu0 0.0
    %2805 = vmatpush1.msra.mxu0 0.0
    %2806 = vmatprep.subr.mxu0 0.0
    %2807 = vmatpush1.msra.mxu0 0.0
    %2808 = vmatprep.subr.mxu0 0.0
    %2809 = vmatpush1.msra.mxu0 0.0
    %2810 = vmatprep.subr.mxu0 0.0
    %2811 = vmatpush1.msra.mxu0 0.0
    %2812 = vmatprep.subr.mxu0 0.0
    %2813 = vmatpush1.msra.mxu0 0.0
    %2814 = vmatprep.subr.mxu0 0.0
    %2815 = vmatpush1.msra.mxu0 0.0
    %2816 = vmatprep.subr.mxu0 0.0
    %2817 = vmatpush1.msra.mxu0 0.0
    %2818 = vmatprep.subr.mxu0 0.0
    %2819 = vmatpush1.msra.mxu0 0.0
    %2820 = vmatprep.subr.mxu0 0.0
    %2821 = vmatpush1.msra.mxu0 0.0
    %2822 = vmatprep.subr.mxu0 0.0
    %2823 = vmatpush1.msra.mxu0 0.0
    %2824 = vmatprep.subr.mxu0 0.0
    %2825 = vmatpush1.msra.mxu0 0.0
    %2826 = vmatprep.subr.mxu0 0.0
    %2827 = vmatpush1.msra.mxu0 0.0
    %2828 = vmatprep.subr.mxu0 0.0
    %2829 = vmatpush1.msra.mxu0 0.0
    %2830 = vmatprep.subr.mxu0 0.0
    %2831 = vmatpush1.msra.mxu0 0.0
    %2832 = vmatprep.subr.mxu0 0.0
    %2833 = vmatpush1.msra.mxu0 0.0
    %2834 = vmatprep.subr.mxu0 0.0
    %2835 = vmatpush1.msra.mxu0 0.0
    %2836 = vmatprep.subr.mxu0 0.0
    %2837 = vmatpush1.msra.mxu0 0.0
    %2838 = vmatprep.subr.mxu0 0.0
    %2839 = vmatpush1.msra.mxu0 0.0
    %2840 = vmatprep.subr.mxu0 0.0
    %2841 = vmatpush1.msra.mxu0 0.0
    %2842 = vmatprep.subr.mxu0 0.0
    %2843 = vmatpush1.msra.mxu0 0.0
    %2844 = vmatprep.subr.mxu0 0.0
    %2845 = vmatpush1.msra.mxu0 0.0
    %2846 = vmatprep.subr.mxu0 0.0
    %2847 = vmatpush1.msra.mxu0 0.0
    %2848 = vmatprep.subr.mxu0 0.0
    %2849 = vmatpush1.msra.mxu0 0.0
    %2850 = vmatprep.mubr.f32.mxu0 0.0
    %2851 = vmatmul.mubr.f32.gmra.mrb[0].mxu0 %v2775
    %v2852 = vpop.f32.mrb[0].mxu0
    %v2853 = vadd.f32 %v2077, %v2852
    %v2854 = vpop.f32.mrb[0].mxu0
    %2855 = vmatprep.mubr.f32.mxu0 0.0
    %2856 = vmatmul.mubr.f32.gmra.mrb[0].mxu0 %v2778
    %v2857 = vpop.f32.mrb[0].mxu0
    %v2858 = vadd.f32 %v2082, %v2857
    %v2859 = vpop.f32.mrb[0].mxu0
    %2860 = vmatprep.mubr.f32.mxu0 0.0
    %2861 = vmatmul.mubr.f32.gmra.mrb[0].mxu0 %v2781
    %v2862 = vpop.f32.mrb[0].mxu0
    %v2863 = vadd.f32 %v2087, %v2862
    %v2864 = vpop.f32.mrb[0].mxu0
    %2865 = vmatprep.mubr.f32.mxu0 0.0
    %2866 = vmatmul.mubr.f32.gmra.mrb[0].mxu0 %v2784
    %v2867 = vpop.f32.mrb[0].mxu0
    %v2868 = vadd.f32 %v2092, %v2867
    %v2869 = vpop.f32.mrb[0].mxu0
    %2870 = vdwg.mxu0
    %v2871 = vadd.f32 %v2174, %v2271
    %v2872 = vadd.f32 %v2179, %v2276
    %v2873 = vadd.f32 %v2184, %v2281
    %v2874 = vadd.f32 %v2189, %v2286
    %v2875 = vadd.f32 %v2368, %v2465
    %v2876 = vadd.f32 %v2373, %v2470
    %v2877 = vadd.f32 %v2378, %v2475
    %v2878 = vadd.f32 %v2383, %v2480
    %v2879 = vadd.f32 %v2562, %v2659
    %v2880 = vadd.f32 %v2567, %v2664
    %v2881 = vadd.f32 %v2572, %v2669
    %v2882 = vadd.f32 %v2577, %v2674
    %v2883 = vadd.f32 %v2756, %v2853
    %v2884 = vadd.f32 %v2761, %v2858
    %v2885 = vadd.f32 %v2766, %v2863
    %v2886 = vadd.f32 %v2771, %v2868
    %v2887 = vadd.f32 %v2871, %v2875
    %v2888 = vadd.f32 %v2872, %v2876
    %v2889 = vadd.f32 %v2873, %v2877
    %v2890 = vadd.f32 %v2874, %v2878
    %v2891 = vadd.f32 %v2879, %v2883
    %v2892 = vadd.f32 %v2880, %v2884
    %v2893 = vadd.f32 %v2881, %v2885
    %v2894 = vadd.f32 %v2882, %v2886
    %v2895 = vadd.f32 %v2887, %v2891
    %v2896 = vadd.f32 %v2888, %v2892
    %v2897 = vadd.f32 %v2889, %v2893
    %v2898 = vadd.f32 %v2890, %v2894
    %v2899 = vmax.f32 %v2895, %v2896
    %v2900 = vmax.f32 %v2897, %v2898
    %v2901 = vmax.f32 %v2899, %v2900
    %v2902 = vld [vmem:[%s6 + $0x1] sm:$0x1]
    %v2903 = vlaneseq
    %v2904 = vshrl.u32 %v2903, 7
    %v2905 = vsub.s32 0, %v2904
    %v2906 = vrot.slane %v2902, %v2905
    %v2907 = vadd.f32 %v2901, %v2906
    %v2908 = vmax.f32 %v2907, 0.0
    %v2909 = vld [vmem:[%s4] sm:$0xff]
    %v2910 = vld [vmem:[%s4 + $0x8] sm:$0xff]
    %v2911 = vld [vmem:[%s4 + $0x10] sm:$0xff]
    %v2912 = vld [vmem:[%s4 + $0x18] sm:$0xff]
    %v2913 = vld [vmem:[%s4 + $0x20] sm:$0xff]
    %v2914 = vld [vmem:[%s4 + $0x28] sm:$0xff]
    %v2915 = vld [vmem:[%s4 + $0x30] sm:$0xff]
    %v2916 = vld [vmem:[%s4 + $0x38] sm:$0xff]
    %s2917 = scalar_lea.vmem %s4, 64
    %v2918 = vld [vmem:[%s2917] sm:$0xff]
    %v2919 = vld [vmem:[%s2917 + $0x8] sm:$0xff]
    %v2920 = vld [vmem:[%s2917 + $0x10] sm:$0xff]
    %v2921 = vld [vmem:[%s2917 + $0x18] sm:$0xff]
    %v2922 = vld [vmem:[%s2917 + $0x20] sm:$0xff]
    %v2923 = vld [vmem:[%s2917 + $0x28] sm:$0xff]
    %v2924 = vld [vmem:[%s2917 + $0x30] sm:$0xff]
    %v2925 = vld [vmem:[%s2917 + $0x38] sm:$0xff]
    %v2927 = vrot.slane %v2908, 2
    %vm2928 = vcmask 523264
    %v2929 = vsel %vm2928, %v2927, 0
    %2931 = vmatprep.subr.mxu0 0.0
    %2932 = vmatpush1.msra.mxu0 %v2918
    %2933 = vmatprep.subr.mxu0 0.0
    %2934 = vmatpush1.msra.mxu0 %v2919
    %2935 = vmatprep.subr.mxu0 0.0
    %2936 = vmatpush1.msra.mxu0 %v2920
    %2937 = vmatprep.subr.mxu0 0.0
    %2938 = vmatpush1.msra.mxu0 %v2921
    %2939 = vmatprep.subr.mxu0 0.0
    %2940 = vmatpush1.msra.mxu0 %v2922
    %2941 = vmatprep.subr.mxu0 0.0
    %2942 = vmatpush1.msra.mxu0 %v2923
    %2943 = vmatprep.subr.mxu0 0.0
    %2944 = vmatpush1.msra.mxu0 %v2924
    %2945 = vmatprep.subr.mxu0 0.0
    %2946 = vmatpush1.msra.mxu0 %v2925
    %2947 = vmatprep.subr.mxu0 0.0
    %2948 = vmatpush1.msra.mxu0 0.0
    %2949 = vmatprep.subr.mxu0 0.0
    %2950 = vmatpush1.msra.mxu0 0.0
    %2951 = vmatprep.subr.mxu0 0.0
    %2952 = vmatpush1.msra.mxu0 0.0
    %2953 = vmatprep.subr.mxu0 0.0
    %2954 = vmatpush1.msra.mxu0 0.0
    %2955 = vmatprep.subr.mxu0 0.0
    %2956 = vmatpush1.msra.mxu0 0.0
    %2957 = vmatprep.subr.mxu0 0.0
    %2958 = vmatpush1.msra.mxu0 0.0
    %2959 = vmatprep.subr.mxu0 0.0
    %2960 = vmatpush1.msra.mxu0 0.0
    %2961 = vmatprep.subr.mxu0 0.0
    %2962 = vmatpush1.msra.mxu0 0.0
    %2963 = vmatprep.subr.mxu0 0.0
    %2964 = vmatpush1.msra.mxu0 0.0
    %2965 = vmatprep.subr.mxu0 0.0
    %2966 = vmatpush1.msra.mxu0 0.0
    %2967 = vmatprep.subr.mxu0 0.0
    %2968 = vmatpush1.msra.mxu0 0.0
    %2969 = vmatprep.subr.mxu0 0.0
    %2970 = vmatpush1.msra.mxu0 0.0
    %2971 = vmatprep.subr.mxu0 0.0
    %2972 = vmatpush1.msra.mxu0 0.0
    %2973 = vmatprep.subr.mxu0 0.0
    %2974 = vmatpush1.msra.mxu0 0.0
    %2975 = vmatprep.subr.mxu0 0.0
    %2976 = vmatpush1.msra.mxu0 0.0
    %2977 = vmatprep.subr.mxu0 0.0
    %2978 = vmatpush1.msra.mxu0 0.0
    %2979 = vmatprep.subr.mxu0 0.0
    %2980 = vmatpush1.msra.mxu0 0.0
    %2981 = vmatprep.subr.mxu0 0.0
    %2982 = vmatpush1.msra.mxu0 0.0
    %2983 = vmatprep.subr.mxu0 0.0
    %2984 = vmatpush1.msra.mxu0 0.0
    %2985 = vmatprep.subr.mxu0 0.0
    %2986 = vmatpush1.msra.mxu0 0.0
    %2987 = vmatprep.subr.mxu0 0.0
    %2988 = vmatpush1.msra.mxu0 0.0
    %2989 = vmatprep.subr.mxu0 0.0
    %2990 = vmatpush1.msra.mxu0 0.0
    %2991 = vmatprep.subr.mxu0 0.0
    %2992 = vmatpush1.msra.mxu0 0.0
    %2993 = vmatprep.subr.mxu0 0.0
    %2994 = vmatpush1.msra.mxu0 0.0
    %2995 = vmatprep.mubr.f32.mxu0 0.0
    %2996 = vmatmul.mubr.f32.gmra.mrb[0].mxu0 %v2929
    %v2997 = vpop.f32.mrb[0].mxu0
    %v2998 = vadd.f32 0.0, %v2997
    %v2999 = vpop.f32.mrb[0].mxu0
    %3000 = vdwg.mxu0
    %s3001 = scalar_lea.vmem %s4, 128
    %v3002 = vld [vmem:[%s3001] sm:$0xff]
    %v3003 = vld [vmem:[%s3001 + $0x8] sm:$0xff]
    %v3004 = vld [vmem:[%s3001 + $0x10] sm:$0xff]
    %v3005 = vld [vmem:[%s3001 + $0x18] sm:$0xff]
    %v3006 = vld [vmem:[%s3001 + $0x20] sm:$0xff]
    %v3007 = vld [vmem:[%s3001 + $0x28] sm:$0xff]
    %v3008 = vld [vmem:[%s3001 + $0x30] sm:$0xff]
    %v3009 = vld [vmem:[%s3001 + $0x38] sm:$0xff]
    %s3010 = scalar_lea.vmem %s4, 192
    %v3011 = vld [vmem:[%s3010] sm:$0xff]
    %v3012 = vld [vmem:[%s3010 + $0x8] sm:$0xff]
    %v3013 = vld [vmem:[%s3010 + $0x10] sm:$0xff]
    %v3014 = vld [vmem:[%s3010 + $0x18] sm:$0xff]
    %v3015 = vld [vmem:[%s3010 + $0x20] sm:$0xff]
    %v3016 = vld [vmem:[%s3010 + $0x28] sm:$0xff]
    %v3017 = vld [vmem:[%s3010 + $0x30] sm:$0xff]
    %v3018 = vld [vmem:[%s3010 + $0x38] sm:$0xff]
    %v3019 = vrot.slane %v2908, 6
    %v3020 = vsel %vm2928, %v3019, 0
    %3022 = vmatprep.subr.mxu0 0.0
    %3023 = vmatpush1.msra.mxu0 %v3011
    %3024 = vmatprep.subr.mxu0 0.0
    %3025 = vmatpush1.msra.mxu0 %v3012
    %3026 = vmatprep.subr.mxu0 0.0
    %3027 = vmatpush1.msra.mxu0 %v3013
    %3028 = vmatprep.subr.mxu0 0.0
    %3029 = vmatpush1.msra.mxu0 %v3014
    %3030 = vmatprep.subr.mxu0 0.0
    %3031 = vmatpush1.msra.mxu0 %v3015
    %3032 = vmatprep.subr.mxu0 0.0
    %3033 = vmatpush1.msra.mxu0 %v3016
    %3034 = vmatprep.subr.mxu0 0.0
    %3035 = vmatpush1.msra.mxu0 %v3017
    %3036 = vmatprep.subr.mxu0 0.0
    %3037 = vmatpush1.msra.mxu0 %v3018
    %3038 = vmatprep.subr.mxu0 0.0
    %3039 = vmatpush1.msra.mxu0 0.0
    %3040 = vmatprep.subr.mxu0 0.0
    %3041 = vmatpush1.msra.mxu0 0.0
    %3042 = vmatprep.subr.mxu0 0.0
    %3043 = vmatpush1.msra.mxu0 0.0
    %3044 = vmatprep.subr.mxu0 0.0
    %3045 = vmatpush1.msra.mxu0 0.0
    %3046 = vmatprep.subr.mxu0 0.0
    %3047 = vmatpush1.msra.mxu0 0.0
    %3048 = vmatprep.subr.mxu0 0.0
    %3049 = vmatpush1.msra.mxu0 0.0
    %3050 = vmatprep.subr.mxu0 0.0
    %3051 = vmatpush1.msra.mxu0 0.0
    %3052 = vmatprep.subr.mxu0 0.0
    %3053 = vmatpush1.msra.mxu0 0.0
    %3054 = vmatprep.subr.mxu0 0.0
    %3055 = vmatpush1.msra.mxu0 0.0
    %3056 = vmatprep.subr.mxu0 0.0
    %3057 = vmatpush1.msra.mxu0 0.0
    %3058 = vmatprep.subr.mxu0 0.0
    %3059 = vmatpush1.msra.mxu0 0.0
    %3060 = vmatprep.subr.mxu0 0.0
    %3061 = vmatpush1.msra.mxu0 0.0
    %3062 = vmatprep.subr.mxu0 0.0
    %3063 = vmatpush1.msra.mxu0 0.0
    %3064 = vmatprep.subr.mxu0 0.0
    %3065 = vmatpush1.msra.mxu0 0.0
    %3066 = vmatprep.subr.mxu0 0.0
    %3067 = vmatpush1.msra.mxu0 0.0
    %3068 = vmatprep.subr.mxu0 0.0
    %3069 = vmatpush1.msra.mxu0 0.0
    %3070 = vmatprep.subr.mxu0 0.0
    %3071 = vmatpush1.msra.mxu0 0.0
    %3072 = vmatprep.subr.mxu0 0.0
    %3073 = vmatpush1.msra.mxu0 0.0
    %3074 = vmatprep.subr.mxu0 0.0
    %3075 = vmatpush1.msra.mxu0 0.0
    %3076 = vmatprep.subr.mxu0 0.0
    %3077 = vmatpush1.msra.mxu0 0.0
    %3078 = vmatprep.subr.mxu0 0.0
    %3079 = vmatpush1.msra.mxu0 0.0
    %3080 = vmatprep.subr.mxu0 0.0
    %3081 = vmatpush1.msra.mxu0 0.0
    %3082 = vmatprep.subr.mxu0 0.0
    %3083 = vmatpush1.msra.mxu0 0.0
    %3084 = vmatprep.subr.mxu0 0.0
    %3085 = vmatpush1.msra.mxu0 0.0
    %3086 = vmatprep.mubr.f32.mxu0 0.0
    %3087 = vmatmul.mubr.f32.gmra.mrb[0].mxu0 %v3020
    %v3088 = vpop.f32.mrb[0].mxu0
    %v3089 = vadd.f32 0.0, %v3088
    %v3090 = vpop.f32.mrb[0].mxu0
    %3091 = vdwg.mxu0
    %v3092 = vsel %vm2928, %v2908, 0
    %3094 = vmatprep.subr.mxu0 0.0
    %3095 = vmatpush1.msra.mxu0 %v2909
    %3096 = vmatprep.subr.mxu0 0.0
    %3097 = vmatpush1.msra.mxu0 %v2910
    %3098 = vmatprep.subr.mxu0 0.0
    %3099 = vmatpush1.msra.mxu0 %v2911
    %3100 = vmatprep.subr.mxu0 0.0
    %3101 = vmatpush1.msra.mxu0 %v2912
    %3102 = vmatprep.subr.mxu0 0.0
    %3103 = vmatpush1.msra.mxu0 %v2913
    %3104 = vmatprep.subr.mxu0 0.0
    %3105 = vmatpush1.msra.mxu0 %v2914
    %3106 = vmatprep.subr.mxu0 0.0
    %3107 = vmatpush1.msra.mxu0 %v2915
    %3108 = vmatprep.subr.mxu0 0.0
    %3109 = vmatpush1.msra.mxu0 %v2916
    %3110 = vmatprep.subr.mxu0 0.0
    %3111 = vmatpush1.msra.mxu0 0.0
    %3112 = vmatprep.subr.mxu0 0.0
    %3113 = vmatpush1.msra.mxu0 0.0
    %3114 = vmatprep.subr.mxu0 0.0
    %3115 = vmatpush1.msra.mxu0 0.0
    %3116 = vmatprep.subr.mxu0 0.0
    %3117 = vmatpush1.msra.mxu0 0.0
    %3118 = vmatprep.subr.mxu0 0.0
    %3119 = vmatpush1.msra.mxu0 0.0
    %3120 = vmatprep.subr.mxu0 0.0
    %3121 = vmatpush1.msra.mxu0 0.0
    %3122 = vmatprep.subr.mxu0 0.0
    %3123 = vmatpush1.msra.mxu0 0.0
    %3124 = vmatprep.subr.mxu0 0.0
    %3125 = vmatpush1.msra.mxu0 0.0
    %3126 = vmatprep.subr.mxu0 0.0
    %3127 = vmatpush1.msra.mxu0 0.0
    %3128 = vmatprep.subr.mxu0 0.0
    %3129 = vmatpush1.msra.mxu0 0.0
    %3130 = vmatprep.subr.mxu0 0.0
    %3131 = vmatpush1.msra.mxu0 0.0
    %3132 = vmatprep.subr.mxu0 0.0
    %3133 = vmatpush1.msra.mxu0 0.0
    %3134 = vmatprep.subr.mxu0 0.0
    %3135 = vmatpush1.msra.mxu0 0.0
    %3136 = vmatprep.subr.mxu0 0.0
    %3137 = vmatpush1.msra.mxu0 0.0
    %3138 = vmatprep.subr.mxu0 0.0
    %3139 = vmatpush1.msra.mxu0 0.0
    %3140 = vmatprep.subr.mxu0 0.0
    %3141 = vmatpush1.msra.mxu0 0.0
    %3142 = vmatprep.subr.mxu0 0.0
    %3143 = vmatpush1.msra.mxu0 0.0
    %3144 = vmatprep.subr.mxu0 0.0
    %3145 = vmatpush1.msra.mxu0 0.0
    %3146 = vmatprep.subr.mxu0 0.0
    %3147 = vmatpush1.msra.mxu0 0.0
    %3148 = vmatprep.subr.mxu0 0.0
    %3149 = vmatpush1.msra.mxu0 0.0
    %3150 = vmatprep.subr.mxu0 0.0
    %3151 = vmatpush1.msra.mxu0 0.0
    %3152 = vmatprep.subr.mxu0 0.0
    %3153 = vmatpush1.msra.mxu0 0.0
    %3154 = vmatprep.subr.mxu0 0.0
    %3155 = vmatpush1.msra.mxu0 0.0
    %3156 = vmatprep.subr.mxu0 0.0
    %3157 = vmatpush1.msra.mxu0 0.0
    %3158 = vmatprep.mubr.f32.mxu0 0.0
    %3159 = vmatmul.mubr.f32.gmra.mrb[0].mxu0 %v3092
    %v3160 = vpop.f32.mrb[0].mxu0
    %v3161 = vadd.f32 %v2998, %v3160
    %v3162 = vpop.f32.mrb[0].mxu0
    %3163 = vdwg.mxu0
    %v3164 = vrot.slane %v2908, 4
    %v3165 = vsel %vm2928, %v3164, 0
    %3167 = vmatprep.subr.mxu0 0.0
    %3168 = vmatpush1.msra.mxu0 %v3002
    %3169 = vmatprep.subr.mxu0 0.0
    %3170 = vmatpush1.msra.mxu0 %v3003
    %3171 = vmatprep.subr.mxu0 0.0
    %3172 = vmatpush1.msra.mxu0 %v3004
    %3173 = vmatprep.subr.mxu0 0.0
    %3174 = vmatpush1.msra.mxu0 %v3005
    %3175 = vmatprep.subr.mxu0 0.0
    %3176 = vmatpush1.msra.mxu0 %v3006
    %3177 = vmatprep.subr.mxu0 0.0
    %3178 = vmatpush1.msra.mxu0 %v3007
    %3179 = vmatprep.subr.mxu0 0.0
    %3180 = vmatpush1.msra.mxu0 %v3008
    %3181 = vmatprep.subr.mxu0 0.0
    %3182 = vmatpush1.msra.mxu0 %v3009
    %3183 = vmatprep.subr.mxu0 0.0
    %3184 = vmatpush1.msra.mxu0 0.0
    %3185 = vmatprep.subr.mxu0 0.0
    %3186 = vmatpush1.msra.mxu0 0.0
    %3187 = vmatprep.subr.mxu0 0.0
    %3188 = vmatpush1.msra.mxu0 0.0
    %3189 = vmatprep.subr.mxu0 0.0
    %3190 = vmatpush1.msra.mxu0 0.0
    %3191 = vmatprep.subr.mxu0 0.0
    %3192 = vmatpush1.msra.mxu0 0.0
    %3193 = vmatprep.subr.mxu0 0.0
    %3194 = vmatpush1.msra.mxu0 0.0
    %3195 = vmatprep.subr.mxu0 0.0
    %3196 = vmatpush1.msra.mxu0 0.0
    %3197 = vmatprep.subr.mxu0 0.0
    %3198 = vmatpush1.msra.mxu0 0.0
    %3199 = vmatprep.subr.mxu0 0.0
    %3200 = vmatpush1.msra.mxu0 0.0
    %3201 = vmatprep.subr.mxu0 0.0
    %3202 = vmatpush1.msra.mxu0 0.0
    %3203 = vmatprep.subr.mxu0 0.0
    %3204 = vmatpush1.msra.mxu0 0.0
    %3205 = vmatprep.subr.mxu0 0.0
    %3206 = vmatpush1.msra.mxu0 0.0
    %3207 = vmatprep.subr.mxu0 0.0
    %3208 = vmatpush1.msra.mxu0 0.0
    %3209 = vmatprep.subr.mxu0 0.0
    %3210 = vmatpush1.msra.mxu0 0.0
    %3211 = vmatprep.subr.mxu0 0.0
    %3212 = vmatpush1.msra.mxu0 0.0
    %3213 = vmatprep.subr.mxu0 0.0
    %3214 = vmatpush1.msra.mxu0 0.0
    %3215 = vmatprep.subr.mxu0 0.0
    %3216 = vmatpush1.msra.mxu0 0.0
    %3217 = vmatprep.subr.mxu0 0.0
    %3218 = vmatpush1.msra.mxu0 0.0
    %3219 = vmatprep.subr.mxu0 0.0
    %3220 = vmatpush1.msra.mxu0 0.0
    %3221 = vmatprep.subr.mxu0 0.0
    %3222 = vmatpush1.msra.mxu0 0.0
    %3223 = vmatprep.subr.mxu0 0.0
    %3224 = vmatpush1.msra.mxu0 0.0
    %3225 = vmatprep.subr.mxu0 0.0
    %3226 = vmatpush1.msra.mxu0 0.0
    %3227 = vmatprep.subr.mxu0 0.0
    %3228 = vmatpush1.msra.mxu0 0.0
    %3229 = vmatprep.subr.mxu0 0.0
    %3230 = vmatpush1.msra.mxu0 0.0
    %3231 = vmatprep.mubr.f32.mxu0 0.0
    %3232 = vmatmul.mubr.f32.gmra.mrb[0].mxu0 %v3165
    %v3233 = vpop.f32.mrb[0].mxu0
    %v3234 = vadd.f32 %v3089, %v3233
    %v3235 = vpop.f32.mrb[0].mxu0
    %3236 = vdwg.mxu0
    %v3237 = vadd.f32 %v3161, %v3234
    %v3238 = vld [vmem:[%s6 + $0x2] sm:$0x1]
    %v3239 = vlaneseq
    %v3240 = vshrl.u32 %v3239, 7
    %v3241 = vsub.s32 0, %v3240
    %v3242 = vrot.slane %v3238, %v3241
    %v3243 = vadd.f32 %v3237, %v3242
    %v3244 = vmax.f32 %v3243, 0.0
    %v3245 = vld [vmem:[%s5] sm:$0xff]
    %v3246 = vld [vmem:[%s5 + $0x8] sm:$0x3]
    %v3247 = vld [vmem:[%s6 + $0x3] sm:$0x1]
    %v3248 = vlaneseq
    %v3249 = vshrl.u32 %v3248, 7
    %v3250 = vsub.s32 0, %v3249
    %v3251 = vrot.slane %v3247, %v3250
    %vm3252 = vcmask 80896
    %v3254 = vsel %vm3252, %v3244, 0
    %v3257 = vsel %vm64, %v3246, 0
    %3259 = vmatprep.subr.mxu0 0.0
    %3260 = vmatpush1.msra.mxu0 %v3245
    %3261 = vmatprep.subr.mxu0 0.0
    %3262 = vmatpush1.msra.mxu0 %v3257
    %3263 = vmatprep.subr.mxu0 0.0
    %3264 = vmatpush1.msra.mxu0 0.0
    %3265 = vmatprep.subr.mxu0 0.0
    %3266 = vmatpush1.msra.mxu0 0.0
    %3267 = vmatprep.subr.mxu0 0.0
    %3268 = vmatpush1.msra.mxu0 0.0
    %3269 = vmatprep.subr.mxu0 0.0
    %3270 = vmatpush1.msra.mxu0 0.0
    %3271 = vmatprep.subr.mxu0 0.0
    %3272 = vmatpush1.msra.mxu0 0.0
    %3273 = vmatprep.subr.mxu0 0.0
    %3274 = vmatpush1.msra.mxu0 0.0
    %3275 = vmatprep.subr.mxu0 0.0
    %3276 = vmatpush1.msra.mxu0 0.0
    %3277 = vmatprep.subr.mxu0 0.0
    %3278 = vmatpush1.msra.mxu0 0.0
    %3279 = vmatprep.subr.mxu0 0.0
    %3280 = vmatpush1.msra.mxu0 0.0
    %3281 = vmatprep.subr.mxu0 0.0
    %3282 = vmatpush1.msra.mxu0 0.0
    %3283 = vmatprep.subr.mxu0 0.0
    %3284 = vmatpush1.msra.mxu0 0.0
    %3285 = vmatprep.subr.mxu0 0.0
    %3286 = vmatpush1.msra.mxu0 0.0
    %3287 = vmatprep.subr.mxu0 0.0
    %3288 = vmatpush1.msra.mxu0 0.0
    %3289 = vmatprep.subr.mxu0 0.0
    %3290 = vmatpush1.msra.mxu0 0.0
    %3291 = vmatprep.subr.mxu0 0.0
    %3292 = vmatpush1.msra.mxu0 0.0
    %3293 = vmatprep.subr.mxu0 0.0
    %3294 = vmatpush1.msra.mxu0 0.0
    %3295 = vmatprep.subr.mxu0 0.0
    %3296 = vmatpush1.msra.mxu0 0.0
    %3297 = vmatprep.subr.mxu0 0.0
    %3298 = vmatpush1.msra.mxu0 0.0
    %3299 = vmatprep.subr.mxu0 0.0
    %3300 = vmatpush1.msra.mxu0 0.0
    %3301 = vmatprep.subr.mxu0 0.0
    %3302 = vmatpush1.msra.mxu0 0.0
    %3303 = vmatprep.subr.mxu0 0.0
    %3304 = vmatpush1.msra.mxu0 0.0
    %3305 = vmatprep.subr.mxu0 0.0
    %3306 = vmatpush1.msra.mxu0 0.0
    %3307 = vmatprep.subr.mxu0 0.0
    %3308 = vmatpush1.msra.mxu0 0.0
    %3309 = vmatprep.subr.mxu0 0.0
    %3310 = vmatpush1.msra.mxu0 0.0
    %3311 = vmatprep.subr.mxu0 0.0
    %3312 = vmatpush1.msra.mxu0 0.0
    %3313 = vmatprep.subr.mxu0 0.0
    %3314 = vmatpush1.msra.mxu0 0.0
    %3315 = vmatprep.subr.mxu0 0.0
    %3316 = vmatpush1.msra.mxu0 0.0
    %3317 = vmatprep.subr.mxu0 0.0
    %3318 = vmatpush1.msra.mxu0 0.0
    %3319 = vmatprep.subr.mxu0 0.0
    %3320 = vmatpush1.msra.mxu0 0.0
    %3321 = vmatprep.subr.mxu0 0.0
    %3322 = vmatpush1.msra.mxu0 0.0
    %3323 = vmatprep.mubr.f32.mxu0 0.0
    %3324 = vmatmul.mubr.f32.gmra.mrb[0].mxu0 %v3254
    %v3325 = vpop.f32.mrb[0].mxu0
    %v3326 = vadd.f32 %v3251, %v3325
    %v3327 = vpop.f32.mrb[0].mxu0
    %3328 = vdwg.mxu0
    %3329 = vst [vmem:[#allocation2] sm:$0x3] %v3326
    // Predicated region
    $region30: #{b_basic_forward.1} parent=1 // pred_check
      _
    $region31: #{b_basic_forward.1} parent=1 // pred_check_branch
      %3331 = sbr.rel (0) target = $region33
    $region32: #{b_basic_forward.1} parent=1 // pred_region
      %s3333 = ssub.s32 32, 32
      %3334 = vsyncadd [#allocation3], %s3333
      %s3336 = sshll.u32 [#allocation2], 4
      %s3337 = int_to_ptr.vmem [resolvable:$true] %s3336
      %3339 = dma.vmem_to_hbm [thread:$0]  %s3337, 32, %s7, [#allocation3]
    $region33: #{b_basic_forward.1} parent=1 // pred_fallthru
      _
    // Predicated region
    $region34: #{b_basic_forward.1} parent=1 // pred_check
      _
    $region35: #{b_basic_forward.1} parent=1 // pred_check_branch
      %3341 = sbr.rel (0) target = $region37
    $region36: #{b_basic_forward.1} parent=1 // pred_region
      %3342 = dma.done [#allocation3], 32
    $region37: #{b_basic_forward.1} parent=1 // pred_fallthru
      _
    %3343 = vsyncpa [#allocation3], 1

</llo_original>
